<compile_context>
chip_gen: v7x
topology: tpu7x:2x2x1
jax: 0.10.0
libtpu: 0.0.40
codegen_flags: <defaults>
</compile_context>

<pallas_src>
import functools

import jax
import jax.numpy as jnp
from jax import lax
from jax.experimental import pallas as pl
from jax.experimental.pallas import tpu as pltpu


def _largest_divisor_leq(n, cap, multiple_of=1):
    best = None
    cap = min(n, cap)
    d = multiple_of
    while d <= cap:
        if n % d == 0:
            best = d
        d += multiple_of
    return best


def _vmem_capacity_bytes():
    try:
        info = pltpu.get_tpu_info()
        cap = getattr(info, "vmem_capacity_bytes", None)
        if cap:
            return int(cap)
    except Exception:
        pass
    return 64 * 1024 * 1024  # conservative (v7x per-core VMEM)


# -----------------------------------------------------------------------------
# Fused kernel: channel mean/max pooling (HBM-bound reduction over C) with the
# 2->1 KxK conv + sigmoid fused into the finalize step of the reduction.
# -----------------------------------------------------------------------------
def _spatial_attention_kernel(x_ref, rc_ref, w_ref, o_ref, sum_acc, max_acc,
                              *, ksize, height, width, inv_c):
    c_step = pl.program_id(1)

    @pl.when(c_step == 0)
    def _init():
        sum_acc[...] = jnp.zeros_like(sum_acc)
        max_acc[...] = jnp.full_like(max_acc, -jnp.inf)

    x = x_ref[...]                                       # (tn, tc, hw) native dtype
    sum_acc[...] += jnp.sum(x.astype(jnp.float32), axis=1)
    max_acc[...] = jnp.maximum(max_acc[...], jnp.max(x, axis=1))   # exact, native dtype

    @pl.when(c_step == pl.num_programs(1) - 1)
    def _finalize():
        hw = height * width
        pad = ksize // 2
        pooled = (sum_acc[...] * inv_c,                  # conv in-channel 0: mean
                  max_acc[...].astype(jnp.float32))      # conv in-channel 1: max

        rc = rc_ref[...]                                 # (2, hw) int32 row/col map
        row = rc[0:1, :]
        col = rc[1:2, :]

        # Border-validity masks per offset; `None` means "always valid".
        row_ok, col_ok = {}, {}
        for d in range(-pad, pad + 1):
            row_ok[d] = None if d == 0 else jnp.logical_and(row >= -d,
                                                            row < height - d)
            col_ok[d] = None if d == 0 else jnp.logical_and(col >= -d,
                                                            col < width - d)

        acc = jnp.zeros_like(pooled[0])                  # (tn, hw) f32
        for kh in range(ksize):
            for kw in range(ksize):
                dy, dx = kh - pad, kw - pad
                shift = (-(dy * width + dx)) % hw        # rolled[p] = src[p + dy*W + dx]
                masks = [m for m in (row_ok[dy], col_ok[dx]) if m is not None]
                mask = None
                if masks:
                    mask = masks[0] if len(masks) == 1 else jnp.logical_and(*masks)
                for cin in range(2):
                    coef = w_ref[cin * ksize * ksize + kh * ksize + kw]
                    tap = pooled[cin]
                    if shift:
                        tap = pltpu.roll(tap, shift=shift, axis=1)   # XLU, lane-dense
                    if mask is not None:
                        tap = jnp.where(mask, tap, 0.0)              # zero padding
                    acc = acc + coef * tap
        o_ref[...] = jax.nn.sigmoid(acc).astype(o_ref.dtype)


# -----------------------------------------------------------------------------
# Wrapper: tiling / VMEM budgeting + pallas_call.
# -----------------------------------------------------------------------------
def spatial_attention(x, conv_weight, *, tn=None, tc=None):
    """x: (N, C, H, W) float; conv_weight: (1, 2, K, K) or (2, K, K), K odd.

    Returns sigmoid(conv2d(cat([mean_c(x), max_c(x)], 1), conv_weight)) with
    shape (N, 1, H, W) and the dtype of x (PyTorch forward of SpatialAttention).
    """
    if conv_weight.ndim == 4:
        conv_weight = conv_weight[0]                     # (2, K, K)
    ksize = int(conv_weight.shape[-1])
    assert ksize % 2 == 1, "kernel size must be odd"
    assert jnp.issubdtype(x.dtype, jnp.floating), "float inputs expected"

    n, c, height, width = x.shape
    hw = height * width
    x_flat = x.reshape(n, c, hw)
    w_flat = conv_weight.reshape(-1).astype(jnp.float32)            # (2*K*K,) -> SMEM

    # Row/col index of every flattened spatial position (drives the conv's
    # zero-padding masks inside the kernel; avoids in-kernel div/mod).
    rr, cc = jnp.meshgrid(jnp.arange(height, dtype=jnp.int32),
                          jnp.arange(width, dtype=jnp.int32), indexing="ij")
    rowcol = jnp.stack([rr.reshape(-1), cc.reshape(-1)], axis=0)    # (2, hw)

    itemsize = jnp.dtype(x.dtype).itemsize
    pack = max(8, 32 // itemsize)          # sublane packing: 8 f32 / 16 bf16 / 32 int8

    # Generation-aware VMEM budgeting (128 MiB on v5e/v6e, 64 MiB on v7x).
    vmem_cap = _vmem_capacity_bytes()
    vmem_limit = min(vmem_cap * 3 // 4, 100 * 1024 * 1024)
    block_budget = max(1 << 20, min(16 << 20, vmem_limit // 4))     # double-buffer headroom

    if tc is None:
        if c % pack != 0:
            tc = c             # only legal block size for an unpadded channel dim
        else:
            cap = max(pack, block_budget // max(1, hw * itemsize))
            tc = _largest_divisor_leq(c, cap, multiple_of=pack) or pack
    if tn is None:
        cap_rows = max(1, block_budget // max(1, tc * hw * itemsize))
        valid = sorted({d for d in range(8, n + 1, 8) if n % d == 0} | {n})
        fitting = [d for d in valid if d <= cap_rows] or [valid[0]]
        # Keep >= 2 steps on the "parallel" batch axis so both v7x TensorCores work.
        two_step = [d for d in fitting if n // d >= 2]
        tn = max(two_step) if two_step else max(fitting)

    assert n % tn == 0 and c % tc == 0
    assert tn % 8 == 0 or tn == n, "batch tile must be a multiple of 8 or the full batch"
    assert tc % pack == 0 or tc == c, "channel tile must respect sublane packing or be full C"
    # TODO(synk): tile H*W (with halo handling for the conv) for extremely large
    # spatial maps where even a (1, pack, H*W) input block exceeds VMEM.

    kernel = functools.partial(_spatial_attention_kernel, ksize=ksize,
                               height=height, width=width, inv_c=1.0 / c)
    out = pl.pallas_call(
        kernel,
        out_shape=jax.ShapeDtypeStruct((n, hw), x.dtype),
        grid_spec=pltpu.PrefetchScalarGridSpec(
            num_scalar_prefetch=0,
            grid=(n // tn, c // tc),
            in_specs=[
                pl.BlockSpec((tn, tc, hw), lambda i, k: (i, k, 0)),
                pl.BlockSpec((2, hw), lambda i, k: (0, 0)),
                pl.BlockSpec(memory_space=pltpu.MemorySpace.SMEM),
            ],
            out_specs=pl.BlockSpec((tn, hw), lambda i, k: (i, 0)),
            scratch_shapes=[pltpu.VMEM((tn, hw), jnp.float32),   # running sum (f32)
                            pltpu.VMEM((tn, hw), x.dtype)]),     # running max (native)
        compiler_params=pltpu.CompilerParams(
            dimension_semantics=("parallel", "arbitrary"),
            vmem_limit_bytes=vmem_limit),
    )(x_flat, rowcol, w_flat)
    return out.reshape(n, 1, height, width)


# -----------------------------------------------------------------------------
# Pure-JAX reference of the PyTorch forward.
# -----------------------------------------------------------------------------
def _reference(x, conv_weight):
    if conv_weight.ndim == 3:
        conv_weight = conv_weight[None]
    pad = conv_weight.shape[-1] // 2
    avg = jnp.mean(x, axis=1, keepdims=True)
    mx = jnp.max(x, axis=1, keepdims=True)
    s = jnp.concatenate([avg, mx], axis=1)
    y = lax.conv_general_dilated(
        s, conv_weight.astype(s.dtype), window_strides=(1, 1),
        padding=((pad, pad), (pad, pad)),
        dimension_numbers=("NCHW", "OIHW", "NCHW"),
        precision=lax.Precision.HIGHEST)
    return jax.nn.sigmoid(y)


if __name__ == "__main__":
    n, c, h, w = 16, 32, 16, 16       # small, but exercises both grid axes
    k = 7

    key = jax.random.PRNGKey(0)
    kx, kwt = jax.random.split(key)
    x = jax.random.normal(kx, (n, c, h, w), dtype=jnp.float32)
    conv_w = jax.random.normal(kwt, (1, 2, k, k), dtype=jnp.float32) * 0.1

    y_ref = _reference(x, conv_w)

    # Explicit small tiles: 2-step "parallel" batch axis, 4-step channel reduction.
    y = spatial_attention(x, conv_w, tn=8, tc=8)
    jax.block_until_ready(y)
    assert y.shape == (n, 1, h, w) and y.dtype == x.dtype, (y.shape, y.dtype)
    err = float(jnp.max(jnp.abs(y - y_ref)))
    assert jnp.allclose(y, y_ref, atol=1e-4, rtol=1e-4), f"mismatch: {err}"

    # Auto-tiled path (generation-aware tile / VMEM selection).
    y2 = spatial_attention(x, conv_w)
    jax.block_until_ready(y2)
    err2 = float(jnp.max(jnp.abs(y2 - y_ref)))
    assert jnp.allclose(y2, y_ref, atol=1e-4, rtol=1e-4), f"mismatch: {err2}"

    print("KERNEL_OK")
</pallas_src>

<mosaic_0001>
module attributes {stable_mosaic.version = 11 : i64} {
  func.func @_spatial_attention_kernel(%arg0: i32, %arg1: i32, %arg2: memref<8x8x256xf32, #tpu.memory_space<vmem>>, %arg3: memref<2x256xi32, #tpu.memory_space<vmem>>, %arg4: memref<98xf32, #tpu.memory_space<smem>>, %arg5: memref<8x256xf32, #tpu.memory_space<vmem>>, %arg6: memref<8x256xf32, #tpu.memory_space<vmem>>, %arg7: memref<8x256xf32, #tpu.memory_space<vmem>>) attributes {dimension_semantics = [#tpu.dimension_semantics<parallel>, #tpu.dimension_semantics<arbitrary>], iteration_bounds = array<i64: 2, 4>, scalar_prefetch = 0 : i64, scratch_operands = 2 : i64, tpu.core_type = #tpu.core_type<tc>, window_params = [{transform_indices = @transform_0, window_bounds = array<i64: 8, 8, 256>}, {pipeline_mode = #tpu.pipeline_mode<synchronous>, transform_indices = @transform_1, window_bounds = array<i64: 2, 256>}, {transform_indices = @transform_2, window_bounds = array<i64: 98>}, {transform_indices = @transform_3, window_bounds = array<i64: 8, 256>}]} {
    %c0_i32 = arith.constant 0 : i32
    %0 = arith.cmpi eq, %arg1, %c0_i32 : i32
    %1 = arith.extui %0 : i1 to i32
    %c0_i32_0 = arith.constant 0 : i32
    %2 = arith.cmpi ne, %1, %c0_i32_0 : i32
    scf.if %2 {
      %cst_13 = arith.constant 0.000000e+00 : f32
      %15 = vector.broadcast %cst_13 : f32 to vector<8x256xf32>
      %c0_14 = arith.constant 0 : index
      %c0_15 = arith.constant 0 : index
      %16 = vector.load %arg6[%c0_14, %c0_15] : memref<8x256xf32, #tpu.memory_space<vmem>>, vector<8x256xf32>
      tpu.vector_store %arg6[%c0_14, %c0_15], %15 {strides = array<i32>} : memref<8x256xf32, #tpu.memory_space<vmem>>, vector<8x256xf32>,
      %cst_16 = arith.constant 0xFF800000 : f32
      %17 = vector.broadcast %cst_16 : f32 to vector<8x256xf32>
      %c0_17 = arith.constant 0 : index
      %c0_18 = arith.constant 0 : index
      %18 = vector.load %arg7[%c0_17, %c0_18] : memref<8x256xf32, #tpu.memory_space<vmem>>, vector<8x256xf32>
      tpu.vector_store %arg7[%c0_17, %c0_18], %17 {strides = array<i32>} : memref<8x256xf32, #tpu.memory_space<vmem>>, vector<8x256xf32>,
    } else {
    }
    %c0 = arith.constant 0 : index
    %c0_1 = arith.constant 0 : index
    %c0_2 = arith.constant 0 : index
    %3 = vector.load %arg2[%c0, %c0_1, %c0_2] : memref<8x8x256xf32, #tpu.memory_space<vmem>>, vector<8x8x256xf32>
    %c0_3 = arith.constant 0 : index
    %c0_4 = arith.constant 0 : index
    %4 = vector.load %arg6[%c0_3, %c0_4] : memref<8x256xf32, #tpu.memory_space<vmem>>, vector<8x256xf32>
    %cst = arith.constant dense<0.000000e+00> : vector<8x256xf32>
    %5 = vector.multi_reduction <add>, %3, %cst [1] : vector<8x8x256xf32> to vector<8x256xf32>
    %6 = arith.addf %4, %5 : vector<8x256xf32>
    %c0_5 = arith.constant 0 : index
    %c0_6 = arith.constant 0 : index
    %7 = vector.load %arg6[%c0_5, %c0_6] : memref<8x256xf32, #tpu.memory_space<vmem>>, vector<8x256xf32>
    tpu.vector_store %arg6[%c0_5, %c0_6], %6 {strides = array<i32>} : memref<8x256xf32, #tpu.memory_space<vmem>>, vector<8x256xf32>,
    %c0_7 = arith.constant 0 : index
    %c0_8 = arith.constant 0 : index
    %8 = vector.load %arg7[%c0_7, %c0_8] : memref<8x256xf32, #tpu.memory_space<vmem>>, vector<8x256xf32>
    %cst_9 = arith.constant dense<0xFF800000> : vector<8x256xf32>
    %9 = vector.multi_reduction <maximumf>, %3, %cst_9 [1] : vector<8x8x256xf32> to vector<8x256xf32>
    %10 = arith.maximumf %8, %9 : vector<8x256xf32>
    %c0_10 = arith.constant 0 : index
    %c0_11 = arith.constant 0 : index
    %11 = vector.load %arg7[%c0_10, %c0_11] : memref<8x256xf32, #tpu.memory_space<vmem>>, vector<8x256xf32>
    tpu.vector_store %arg7[%c0_10, %c0_11], %10 {strides = array<i32>} : memref<8x256xf32, #tpu.memory_space<vmem>>, vector<8x256xf32>,
    %c3_i32 = arith.constant 3 : i32
    %12 = arith.cmpi eq, %arg1, %c3_i32 : i32
    %13 = arith.extui %12 : i1 to i32
    %c0_i32_12 = arith.constant 0 : i32
    %14 = arith.cmpi ne, %13, %c0_i32_12 : i32
    scf.if %14 {
      %c0_13 = arith.constant 0 : index
      %c0_14 = arith.constant 0 : index
      %15 = vector.load %arg6[%c0_13, %c0_14] : memref<8x256xf32, #tpu.memory_space<vmem>>, vector<8x256xf32>
      %cst_15 = arith.constant 3.125000e-02 : f32
      %16 = vector.broadcast %cst_15 : f32 to vector<8x256xf32>
      %17 = arith.mulf %15, %16 : vector<8x256xf32>
      %c0_16 = arith.constant 0 : index
      %c0_17 = arith.constant 0 : index
      %18 = vector.load %arg7[%c0_16, %c0_17] : memref<8x256xf32, #tpu.memory_space<vmem>>, vector<8x256xf32>
      %c0_18 = arith.constant 0 : index
      %c0_19 = arith.constant 0 : index
      %19 = vector.load %arg3[%c0_18, %c0_19] : memref<2x256xi32, #tpu.memory_space<vmem>>, vector<2x256xi32>
      %20 = vector.extract_strided_slice %19 {offsets = [0, 0], sizes = [1, 256], strides = [1, 1]} : vector<2x256xi32> to vector<1x256xi32>
      %21 = vector.extract_strided_slice %19 {offsets = [1, 0], sizes = [1, 256], strides = [1, 1]} : vector<2x256xi32> to vector<1x256xi32>
      %c3_i32_20 = arith.constant 3 : i32
      %22 = vector.broadcast %c3_i32_20 : i32 to vector<1x256xi32>
      %23 = arith.cmpi sge, %20, %22 : vector<1x256xi32>
      %c19_i32 = arith.constant 19 : i32
      %24 = vector.broadcast %c19_i32 : i32 to vector<1x256xi32>
      %25 = arith.cmpi slt, %20, %24 : vector<1x256xi32>
      %26 = arith.andi %23, %25 : vector<1x256xi1>
      %c3_i32_21 = arith.constant 3 : i32
      %27 = vector.broadcast %c3_i32_21 : i32 to vector<1x256xi32>
      %28 = arith.cmpi sge, %21, %27 : vector<1x256xi32>
      %c19_i32_22 = arith.constant 19 : i32
      %29 = vector.broadcast %c19_i32_22 : i32 to vector<1x256xi32>
      %30 = arith.cmpi slt, %21, %29 : vector<1x256xi32>
      %31 = arith.andi %28, %30 : vector<1x256xi1>
      %c2_i32 = arith.constant 2 : i32
      %32 = vector.broadcast %c2_i32 : i32 to vector<1x256xi32>
      %33 = arith.cmpi sge, %20, %32 : vector<1x256xi32>
      %c18_i32 = arith.constant 18 : i32
      %34 = vector.broadcast %c18_i32 : i32 to vector<1x256xi32>
      %35 = arith.cmpi slt, %20, %34 : vector<1x256xi32>
      %36 = arith.andi %33, %35 : vector<1x256xi1>
      %c2_i32_23 = arith.constant 2 : i32
      %37 = vector.broadcast %c2_i32_23 : i32 to vector<1x256xi32>
      %38 = arith.cmpi sge, %21, %37 : vector<1x256xi32>
      %c18_i32_24 = arith.constant 18 : i32
      %39 = vector.broadcast %c18_i32_24 : i32 to vector<1x256xi32>
      %40 = arith.cmpi slt, %21, %39 : vector<1x256xi32>
      %41 = arith.andi %38, %40 : vector<1x256xi1>
      %c1_i32 = arith.constant 1 : i32
      %42 = vector.broadcast %c1_i32 : i32 to vector<1x256xi32>
      %43 = arith.cmpi sge, %20, %42 : vector<1x256xi32>
      %c17_i32 = arith.constant 17 : i32
      %44 = vector.broadcast %c17_i32 : i32 to vector<1x256xi32>
      %45 = arith.cmpi slt, %20, %44 : vector<1x256xi32>
      %46 = arith.andi %43, %45 : vector<1x256xi1>
      %c1_i32_25 = arith.constant 1 : i32
      %47 = vector.broadcast %c1_i32_25 : i32 to vector<1x256xi32>
      %48 = arith.cmpi sge, %21, %47 : vector<1x256xi32>
      %c17_i32_26 = arith.constant 17 : i32
      %49 = vector.broadcast %c17_i32_26 : i32 to vector<1x256xi32>
      %50 = arith.cmpi slt, %21, %49 : vector<1x256xi32>
      %51 = arith.andi %48, %50 : vector<1x256xi1>
      %c-1_i32 = arith.constant -1 : i32
      %52 = vector.broadcast %c-1_i32 : i32 to vector<1x256xi32>
      %53 = arith.cmpi sge, %20, %52 : vector<1x256xi32>
      %c15_i32 = arith.constant 15 : i32
      %54 = vector.broadcast %c15_i32 : i32 to vector<1x256xi32>
      %55 = arith.cmpi slt, %20, %54 : vector<1x256xi32>
      %56 = arith.andi %53, %55 : vector<1x256xi1>
      %c-1_i32_27 = arith.constant -1 : i32
      %57 = vector.broadcast %c-1_i32_27 : i32 to vector<1x256xi32>
      %58 = arith.cmpi sge, %21, %57 : vector<1x256xi32>
      %c15_i32_28 = arith.constant 15 : i32
      %59 = vector.broadcast %c15_i32_28 : i32 to vector<1x256xi32>
      %60 = arith.cmpi slt, %21, %59 : vector<1x256xi32>
      %61 = arith.andi %58, %60 : vector<1x256xi1>
      %c-2_i32 = arith.constant -2 : i32
      %62 = vector.broadcast %c-2_i32 : i32 to vector<1x256xi32>
      %63 = arith.cmpi sge, %20, %62 : vector<1x256xi32>
      %c14_i32 = arith.constant 14 : i32
      %64 = vector.broadcast %c14_i32 : i32 to vector<1x256xi32>
      %65 = arith.cmpi slt, %20, %64 : vector<1x256xi32>
      %66 = arith.andi %63, %65 : vector<1x256xi1>
      %c-2_i32_29 = arith.constant -2 : i32
      %67 = vector.broadcast %c-2_i32_29 : i32 to vector<1x256xi32>
      %68 = arith.cmpi sge, %21, %67 : vector<1x256xi32>
      %c14_i32_30 = arith.constant 14 : i32
      %69 = vector.broadcast %c14_i32_30 : i32 to vector<1x256xi32>
      %70 = arith.cmpi slt, %21, %69 : vector<1x256xi32>
      %71 = arith.andi %68, %70 : vector<1x256xi1>
      %c-3_i32 = arith.constant -3 : i32
      %72 = vector.broadcast %c-3_i32 : i32 to vector<1x256xi32>
      %73 = arith.cmpi sge, %20, %72 : vector<1x256xi32>
      %c13_i32 = arith.constant 13 : i32
      %74 = vector.broadcast %c13_i32 : i32 to vector<1x256xi32>
      %75 = arith.cmpi slt, %20, %74 : vector<1x256xi32>
      %76 = arith.andi %73, %75 : vector<1x256xi1>
      %c-3_i32_31 = arith.constant -3 : i32
      %77 = vector.broadcast %c-3_i32_31 : i32 to vector<1x256xi32>
      %78 = arith.cmpi sge, %21, %77 : vector<1x256xi32>
      %c13_i32_32 = arith.constant 13 : i32
      %79 = vector.broadcast %c13_i32_32 : i32 to vector<1x256xi32>
      %80 = arith.cmpi slt, %21, %79 : vector<1x256xi32>
      %81 = arith.andi %78, %80 : vector<1x256xi1>
      %cst_33 = arith.constant 0.000000e+00 : f32
      %82 = vector.broadcast %cst_33 : f32 to vector<8x256xf32>
      %83 = arith.andi %26, %31 : vector<1x256xi1>
      %c0_34 = arith.constant 0 : index
      %84 = memref.load %arg4[%c0_34] : memref<98xf32, #tpu.memory_space<smem>>
      %c51_i32 = arith.constant 51 : i32
      %85 = tpu.dynamic_rotate %17 by %c51_i32 dim 1 : vector<8x256xf32>, i32 -> vector<8x256xf32>
      %cst_35 = arith.constant 0.000000e+00 : f32
      %86 = vector.shape_cast %83 : vector<1x256xi1> to vector<1x256xi1>
      %87 = vector.broadcast %86 : vector<1x256xi1> to vector<8x256xi1>
      %88 = vector.broadcast %cst_35 : f32 to vector<8x256xf32>
      %89 = arith.select %87, %85, %88 : vector<8x256xi1>, vector<8x256xf32>
      %90 = vector.broadcast %84 : f32 to vector<8x256xf32>
      %91 = arith.mulf %90, %89 : vector<8x256xf32>
      %92 = arith.addf %82, %91 : vector<8x256xf32>
      %c49 = arith.constant 49 : index
      %93 = memref.load %arg4[%c49] : memref<98xf32, #tpu.memory_space<smem>>
      %c51_i32_36 = arith.constant 51 : i32
      %94 = tpu.dynamic_rotate %18 by %c51_i32_36 dim 1 : vector<8x256xf32>, i32 -> vector<8x256xf32>
      %cst_37 = arith.constant 0.000000e+00 : f32
      %95 = vector.shape_cast %83 : vector<1x256xi1> to vector<1x256xi1>
      %96 = vector.broadcast %95 : vector<1x256xi1> to vector<8x256xi1>
      %97 = vector.broadcast %cst_37 : f32 to vector<8x256xf32>
      %98 = arith.select %96, %94, %97 : vector<8x256xi1>, vector<8x256xf32>
      %99 = vector.broadcast %93 : f32 to vector<8x256xf32>
      %100 = arith.mulf %99, %98 : vector<8x256xf32>
      %101 = arith.addf %92, %100 : vector<8x256xf32>
      %102 = arith.andi %26, %41 : vector<1x256xi1>
      %c1 = arith.constant 1 : index
      %103 = memref.load %arg4[%c1] : memref<98xf32, #tpu.memory_space<smem>>
      %c50_i32 = arith.constant 50 : i32
      %104 = tpu.dynamic_rotate %17 by %c50_i32 dim 1 : vector<8x256xf32>, i32 -> vector<8x256xf32>
      %cst_38 = arith.constant 0.000000e+00 : f32
      %105 = vector.shape_cast %102 : vector<1x256xi1> to vector<1x256xi1>
      %106 = vector.broadcast %105 : vector<1x256xi1> to vector<8x256xi1>
      %107 = vector.broadcast %cst_38 : f32 to vector<8x256xf32>
      %108 = arith.select %106, %104, %107 : vector<8x256xi1>, vector<8x256xf32>
      %109 = vector.broadcast %103 : f32 to vector<8x256xf32>
      %110 = arith.mulf %109, %108 : vector<8x256xf32>
      %111 = arith.addf %101, %110 : vector<8x256xf32>
      %c50 = arith.constant 50 : index
      %112 = memref.load %arg4[%c50] : memref<98xf32, #tpu.memory_space<smem>>
      %c50_i32_39 = arith.constant 50 : i32
      %113 = tpu.dynamic_rotate %18 by %c50_i32_39 dim 1 : vector<8x256xf32>, i32 -> vector<8x256xf32>
      %cst_40 = arith.constant 0.000000e+00 : f32
      %114 = vector.shape_cast %102 : vector<1x256xi1> to vector<1x256xi1>
      %115 = vector.broadcast %114 : vector<1x256xi1> to vector<8x256xi1>
      %116 = vector.broadcast %cst_40 : f32 to vector<8x256xf32>
      %117 = arith.select %115, %113, %116 : vector<8x256xi1>, vector<8x256xf32>
      %118 = vector.broadcast %112 : f32 to vector<8x256xf32>
      %119 = arith.mulf %118, %117 : vector<8x256xf32>
      %120 = arith.addf %111, %119 : vector<8x256xf32>
      %121 = arith.andi %26, %51 : vector<1x256xi1>
      %c2 = arith.constant 2 : index
      %122 = memref.load %arg4[%c2] : memref<98xf32, #tpu.memory_space<smem>>
      %c49_i32 = arith.constant 49 : i32
      %123 = tpu.dynamic_rotate %17 by %c49_i32 dim 1 : vector<8x256xf32>, i32 -> vector<8x256xf32>
      %cst_41 = arith.constant 0.000000e+00 : f32
      %124 = vector.shape_cast %121 : vector<1x256xi1> to vector<1x256xi1>
      %125 = vector.broadcast %124 : vector<1x256xi1> to vector<8x256xi1>
      %126 = vector.broadcast %cst_41 : f32 to vector<8x256xf32>
      %127 = arith.select %125, %123, %126 : vector<8x256xi1>, vector<8x256xf32>
      %128 = vector.broadcast %122 : f32 to vector<8x256xf32>
      %129 = arith.mulf %128, %127 : vector<8x256xf32>
      %130 = arith.addf %120, %129 : vector<8x256xf32>
      %c51 = arith.constant 51 : index
      %131 = memref.load %arg4[%c51] : memref<98xf32, #tpu.memory_space<smem>>
      %c49_i32_42 = arith.constant 49 : i32
      %132 = tpu.dynamic_rotate %18 by %c49_i32_42 dim 1 : vector<8x256xf32>, i32 -> vector<8x256xf32>
      %cst_43 = arith.constant 0.000000e+00 : f32
      %133 = vector.shape_cast %121 : vector<1x256xi1> to vector<1x256xi1>
      %134 = vector.broadcast %133 : vector<1x256xi1> to vector<8x256xi1>
      %135 = vector.broadcast %cst_43 : f32 to vector<8x256xf32>
      %136 = arith.select %134, %132, %135 : vector<8x256xi1>, vector<8x256xf32>
      %137 = vector.broadcast %131 : f32 to vector<8x256xf32>
      %138 = arith.mulf %137, %136 : vector<8x256xf32>
      %139 = arith.addf %130, %138 : vector<8x256xf32>
      %c3 = arith.constant 3 : index
      %140 = memref.load %arg4[%c3] : memref<98xf32, #tpu.memory_space<smem>>
      %c48_i32 = arith.constant 48 : i32
      %141 = tpu.dynamic_rotate %17 by %c48_i32 dim 1 : vector<8x256xf32>, i32 -> vector<8x256xf32>
      %cst_44 = arith.constant 0.000000e+00 : f32
      %142 = vector.shape_cast %26 : vector<1x256xi1> to vector<1x256xi1>
      %143 = vector.broadcast %142 : vector<1x256xi1> to vector<8x256xi1>
      %144 = vector.broadcast %cst_44 : f32 to vector<8x256xf32>
      %145 = arith.select %143, %141, %144 : vector<8x256xi1>, vector<8x256xf32>
      %146 = vector.broadcast %140 : f32 to vector<8x256xf32>
      %147 = arith.mulf %146, %145 : vector<8x256xf32>
      %148 = arith.addf %139, %147 : vector<8x256xf32>
      %c52 = arith.constant 52 : index
      %149 = memref.load %arg4[%c52] : memref<98xf32, #tpu.memory_space<smem>>
      %c48_i32_45 = arith.constant 48 : i32
      %150 = tpu.dynamic_rotate %18 by %c48_i32_45 dim 1 : vector<8x256xf32>, i32 -> vector<8x256xf32>
      %cst_46 = arith.constant 0.000000e+00 : f32
      %151 = vector.shape_cast %26 : vector<1x256xi1> to vector<1x256xi1>
      %152 = vector.broadcast %151 : vector<1x256xi1> to vector<8x256xi1>
      %153 = vector.broadcast %cst_46 : f32 to vector<8x256xf32>
      %154 = arith.select %152, %150, %153 : vector<8x256xi1>, vector<8x256xf32>
      %155 = vector.broadcast %149 : f32 to vector<8x256xf32>
      %156 = arith.mulf %155, %154 : vector<8x256xf32>
      %157 = arith.addf %148, %156 : vector<8x256xf32>
      %158 = arith.andi %26, %61 : vector<1x256xi1>
      %c4 = arith.constant 4 : index
      %159 = memref.load %arg4[%c4] : memref<98xf32, #tpu.memory_space<smem>>
      %c47_i32 = arith.constant 47 : i32
      %160 = tpu.dynamic_rotate %17 by %c47_i32 dim 1 : vector<8x256xf32>, i32 -> vector<8x256xf32>
      %cst_47 = arith.constant 0.000000e+00 : f32
      %161 = vector.shape_cast %158 : vector<1x256xi1> to vector<1x256xi1>
      %162 = vector.broadcast %161 : vector<1x256xi1> to vector<8x256xi1>
      %163 = vector.broadcast %cst_47 : f32 to vector<8x256xf32>
      %164 = arith.select %162, %160, %163 : vector<8x256xi1>, vector<8x256xf32>
      %165 = vector.broadcast %159 : f32 to vector<8x256xf32>
      %166 = arith.mulf %165, %164 : vector<8x256xf32>
      %167 = arith.addf %157, %166 : vector<8x256xf32>
      %c53 = arith.constant 53 : index
      %168 = memref.load %arg4[%c53] : memref<98xf32, #tpu.memory_space<smem>>
      %c47_i32_48 = arith.constant 47 : i32
      %169 = tpu.dynamic_rotate %18 by %c47_i32_48 dim 1 : vector<8x256xf32>, i32 -> vector<8x256xf32>
      %cst_49 = arith.constant 0.000000e+00 : f32
      %170 = vector.shape_cast %158 : vector<1x256xi1> to vector<1x256xi1>
      %171 = vector.broadcast %170 : vector<1x256xi1> to vector<8x256xi1>
      %172 = vector.broadcast %cst_49 : f32 to vector<8x256xf32>
      %173 = arith.select %171, %169, %172 : vector<8x256xi1>, vector<8x256xf32>
      %174 = vector.broadcast %168 : f32 to vector<8x256xf32>
      %175 = arith.mulf %174, %173 : vector<8x256xf32>
      %176 = arith.addf %167, %175 : vector<8x256xf32>
      %177 = arith.andi %26, %71 : vector<1x256xi1>
      %c5 = arith.constant 5 : index
      %178 = memref.load %arg4[%c5] : memref<98xf32, #tpu.memory_space<smem>>
      %c46_i32 = arith.constant 46 : i32
      %179 = tpu.dynamic_rotate %17 by %c46_i32 dim 1 : vector<8x256xf32>, i32 -> vector<8x256xf32>
      %cst_50 = arith.constant 0.000000e+00 : f32
      %180 = vector.shape_cast %177 : vector<1x256xi1> to vector<1x256xi1>
      %181 = vector.broadcast %180 : vector<1x256xi1> to vector<8x256xi1>
      %182 = vector.broadcast %cst_50 : f32 to vector<8x256xf32>
      %183 = arith.select %181, %179, %182 : vector<8x256xi1>, vector<8x256xf32>
      %184 = vector.broadcast %178 : f32 to vector<8x256xf32>
      %185 = arith.mulf %184, %183 : vector<8x256xf32>
      %186 = arith.addf %176, %185 : vector<8x256xf32>
      %c54 = arith.constant 54 : index
      %187 = memref.load %arg4[%c54] : memref<98xf32, #tpu.memory_space<smem>>
      %c46_i32_51 = arith.constant 46 : i32
      %188 = tpu.dynamic_rotate %18 by %c46_i32_51 dim 1 : vector<8x256xf32>, i32 -> vector<8x256xf32>
      %cst_52 = arith.constant 0.000000e+00 : f32
      %189 = vector.shape_cast %177 : vector<1x256xi1> to vector<1x256xi1>
      %190 = vector.broadcast %189 : vector<1x256xi1> to vector<8x256xi1>
      %191 = vector.broadcast %cst_52 : f32 to vector<8x256xf32>
      %192 = arith.select %190, %188, %191 : vector<8x256xi1>, vector<8x256xf32>
      %193 = vector.broadcast %187 : f32 to vector<8x256xf32>
      %194 = arith.mulf %193, %192 : vector<8x256xf32>
      %195 = arith.addf %186, %194 : vector<8x256xf32>
      %196 = arith.andi %26, %81 : vector<1x256xi1>
      %c6 = arith.constant 6 : index
      %197 = memref.load %arg4[%c6] : memref<98xf32, #tpu.memory_space<smem>>
      %c45_i32 = arith.constant 45 : i32
      %198 = tpu.dynamic_rotate %17 by %c45_i32 dim 1 : vector<8x256xf32>, i32 -> vector<8x256xf32>
      %cst_53 = arith.constant 0.000000e+00 : f32
      %199 = vector.shape_cast %196 : vector<1x256xi1> to vector<1x256xi1>
      %200 = vector.broadcast %199 : vector<1x256xi1> to vector<8x256xi1>
      %201 = vector.broadcast %cst_53 : f32 to vector<8x256xf32>
      %202 = arith.select %200, %198, %201 : vector<8x256xi1>, vector<8x256xf32>
      %203 = vector.broadcast %197 : f32 to vector<8x256xf32>
      %204 = arith.mulf %203, %202 : vector<8x256xf32>
      %205 = arith.addf %195, %204 : vector<8x256xf32>
      %c55 = arith.constant 55 : index
      %206 = memref.load %arg4[%c55] : memref<98xf32, #tpu.memory_space<smem>>
      %c45_i32_54 = arith.constant 45 : i32
      %207 = tpu.dynamic_rotate %18 by %c45_i32_54 dim 1 : vector<8x256xf32>, i32 -> vector<8x256xf32>
      %cst_55 = arith.constant 0.000000e+00 : f32
      %208 = vector.shape_cast %196 : vector<1x256xi1> to vector<1x256xi1>
      %209 = vector.broadcast %208 : vector<1x256xi1> to vector<8x256xi1>
      %210 = vector.broadcast %cst_55 : f32 to vector<8x256xf32>
      %211 = arith.select %209, %207, %210 : vector<8x256xi1>, vector<8x256xf32>
      %212 = vector.broadcast %206 : f32 to vector<8x256xf32>
      %213 = arith.mulf %212, %211 : vector<8x256xf32>
      %214 = arith.addf %205, %213 : vector<8x256xf32>
      %215 = arith.andi %36, %31 : vector<1x256xi1>
      %c7 = arith.constant 7 : index
      %216 = memref.load %arg4[%c7] : memref<98xf32, #tpu.memory_space<smem>>
      %c35_i32 = arith.constant 35 : i32
      %217 = tpu.dynamic_rotate %17 by %c35_i32 dim 1 : vector<8x256xf32>, i32 -> vector<8x256xf32>
      %cst_56 = arith.constant 0.000000e+00 : f32
      %218 = vector.shape_cast %215 : vector<1x256xi1> to vector<1x256xi1>
      %219 = vector.broadcast %218 : vector<1x256xi1> to vector<8x256xi1>
      %220 = vector.broadcast %cst_56 : f32 to vector<8x256xf32>
      %221 = arith.select %219, %217, %220 : vector<8x256xi1>, vector<8x256xf32>
      %222 = vector.broadcast %216 : f32 to vector<8x256xf32>
      %223 = arith.mulf %222, %221 : vector<8x256xf32>
      %224 = arith.addf %214, %223 : vector<8x256xf32>
      %c56 = arith.constant 56 : index
      %225 = memref.load %arg4[%c56] : memref<98xf32, #tpu.memory_space<smem>>
      %c35_i32_57 = arith.constant 35 : i32
      %226 = tpu.dynamic_rotate %18 by %c35_i32_57 dim 1 : vector<8x256xf32>, i32 -> vector<8x256xf32>
      %cst_58 = arith.constant 0.000000e+00 : f32
      %227 = vector.shape_cast %215 : vector<1x256xi1> to vector<1x256xi1>
      %228 = vector.broadcast %227 : vector<1x256xi1> to vector<8x256xi1>
      %229 = vector.broadcast %cst_58 : f32 to vector<8x256xf32>
      %230 = arith.select %228, %226, %229 : vector<8x256xi1>, vector<8x256xf32>
      %231 = vector.broadcast %225 : f32 to vector<8x256xf32>
      %232 = arith.mulf %231, %230 : vector<8x256xf32>
      %233 = arith.addf %224, %232 : vector<8x256xf32>
      %234 = arith.andi %36, %41 : vector<1x256xi1>
      %c8 = arith.constant 8 : index
      %235 = memref.load %arg4[%c8] : memref<98xf32, #tpu.memory_space<smem>>
      %c34_i32 = arith.constant 34 : i32
      %236 = tpu.dynamic_rotate %17 by %c34_i32 dim 1 : vector<8x256xf32>, i32 -> vector<8x256xf32>
      %cst_59 = arith.constant 0.000000e+00 : f32
      %237 = vector.shape_cast %234 : vector<1x256xi1> to vector<1x256xi1>
      %238 = vector.broadcast %237 : vector<1x256xi1> to vector<8x256xi1>
      %239 = vector.broadcast %cst_59 : f32 to vector<8x256xf32>
      %240 = arith.select %238, %236, %239 : vector<8x256xi1>, vector<8x256xf32>
      %241 = vector.broadcast %235 : f32 to vector<8x256xf32>
      %242 = arith.mulf %241, %240 : vector<8x256xf32>
      %243 = arith.addf %233, %242 : vector<8x256xf32>
      %c57 = arith.constant 57 : index
      %244 = memref.load %arg4[%c57] : memref<98xf32, #tpu.memory_space<smem>>
      %c34_i32_60 = arith.constant 34 : i32
      %245 = tpu.dynamic_rotate %18 by %c34_i32_60 dim 1 : vector<8x256xf32>, i32 -> vector<8x256xf32>
      %cst_61 = arith.constant 0.000000e+00 : f32
      %246 = vector.shape_cast %234 : vector<1x256xi1> to vector<1x256xi1>
      %247 = vector.broadcast %246 : vector<1x256xi1> to vector<8x256xi1>
      %248 = vector.broadcast %cst_61 : f32 to vector<8x256xf32>
      %249 = arith.select %247, %245, %248 : vector<8x256xi1>, vector<8x256xf32>
      %250 = vector.broadcast %244 : f32 to vector<8x256xf32>
      %251 = arith.mulf %250, %249 : vector<8x256xf32>
      %252 = arith.addf %243, %251 : vector<8x256xf32>
      %253 = arith.andi %36, %51 : vector<1x256xi1>
      %c9 = arith.constant 9 : index
      %254 = memref.load %arg4[%c9] : memref<98xf32, #tpu.memory_space<smem>>
      %c33_i32 = arith.constant 33 : i32
      %255 = tpu.dynamic_rotate %17 by %c33_i32 dim 1 : vector<8x256xf32>, i32 -> vector<8x256xf32>
      %cst_62 = arith.constant 0.000000e+00 : f32
      %256 = vector.shape_cast %253 : vector<1x256xi1> to vector<1x256xi1>
      %257 = vector.broadcast %256 : vector<1x256xi1> to vector<8x256xi1>
      %258 = vector.broadcast %cst_62 : f32 to vector<8x256xf32>
      %259 = arith.select %257, %255, %258 : vector<8x256xi1>, vector<8x256xf32>
      %260 = vector.broadcast %254 : f32 to vector<8x256xf32>
      %261 = arith.mulf %260, %259 : vector<8x256xf32>
      %262 = arith.addf %252, %261 : vector<8x256xf32>
      %c58 = arith.constant 58 : index
      %263 = memref.load %arg4[%c58] : memref<98xf32, #tpu.memory_space<smem>>
      %c33_i32_63 = arith.constant 33 : i32
      %264 = tpu.dynamic_rotate %18 by %c33_i32_63 dim 1 : vector<8x256xf32>, i32 -> vector<8x256xf32>
      %cst_64 = arith.constant 0.000000e+00 : f32
      %265 = vector.shape_cast %253 : vector<1x256xi1> to vector<1x256xi1>
      %266 = vector.broadcast %265 : vector<1x256xi1> to vector<8x256xi1>
      %267 = vector.broadcast %cst_64 : f32 to vector<8x256xf32>
      %268 = arith.select %266, %264, %267 : vector<8x256xi1>, vector<8x256xf32>
      %269 = vector.broadcast %263 : f32 to vector<8x256xf32>
      %270 = arith.mulf %269, %268 : vector<8x256xf32>
      %271 = arith.addf %262, %270 : vector<8x256xf32>
      %c10 = arith.constant 10 : index
      %272 = memref.load %arg4[%c10] : memref<98xf32, #tpu.memory_space<smem>>
      %c32_i32 = arith.constant 32 : i32
      %273 = tpu.dynamic_rotate %17 by %c32_i32 dim 1 : vector<8x256xf32>, i32 -> vector<8x256xf32>
      %cst_65 = arith.constant 0.000000e+00 : f32
      %274 = vector.shape_cast %36 : vector<1x256xi1> to vector<1x256xi1>
      %275 = vector.broadcast %274 : vector<1x256xi1> to vector<8x256xi1>
      %276 = vector.broadcast %cst_65 : f32 to vector<8x256xf32>
      %277 = arith.select %275, %273, %276 : vector<8x256xi1>, vector<8x256xf32>
      %278 = vector.broadcast %272 : f32 to vector<8x256xf32>
      %279 = arith.mulf %278, %277 : vector<8x256xf32>
      %280 = arith.addf %271, %279 : vector<8x256xf32>
      %c59 = arith.constant 59 : index
      %281 = memref.load %arg4[%c59] : memref<98xf32, #tpu.memory_space<smem>>
      %c32_i32_66 = arith.constant 32 : i32
      %282 = tpu.dynamic_rotate %18 by %c32_i32_66 dim 1 : vector<8x256xf32>, i32 -> vector<8x256xf32>
      %cst_67 = arith.constant 0.000000e+00 : f32
      %283 = vector.shape_cast %36 : vector<1x256xi1> to vector<1x256xi1>
      %284 = vector.broadcast %283 : vector<1x256xi1> to vector<8x256xi1>
      %285 = vector.broadcast %cst_67 : f32 to vector<8x256xf32>
      %286 = arith.select %284, %282, %285 : vector<8x256xi1>, vector<8x256xf32>
      %287 = vector.broadcast %281 : f32 to vector<8x256xf32>
      %288 = arith.mulf %287, %286 : vector<8x256xf32>
      %289 = arith.addf %280, %288 : vector<8x256xf32>
      %290 = arith.andi %36, %61 : vector<1x256xi1>
      %c11 = arith.constant 11 : index
      %291 = memref.load %arg4[%c11] : memref<98xf32, #tpu.memory_space<smem>>
      %c31_i32 = arith.constant 31 : i32
      %292 = tpu.dynamic_rotate %17 by %c31_i32 dim 1 : vector<8x256xf32>, i32 -> vector<8x256xf32>
      %cst_68 = arith.constant 0.000000e+00 : f32
      %293 = vector.shape_cast %290 : vector<1x256xi1> to vector<1x256xi1>
      %294 = vector.broadcast %293 : vector<1x256xi1> to vector<8x256xi1>
      %295 = vector.broadcast %cst_68 : f32 to vector<8x256xf32>
      %296 = arith.select %294, %292, %295 : vector<8x256xi1>, vector<8x256xf32>
      %297 = vector.broadcast %291 : f32 to vector<8x256xf32>
      %298 = arith.mulf %297, %296 : vector<8x256xf32>
      %299 = arith.addf %289, %298 : vector<8x256xf32>
      %c60 = arith.constant 60 : index
      %300 = memref.load %arg4[%c60] : memref<98xf32, #tpu.memory_space<smem>>
      %c31_i32_69 = arith.constant 31 : i32
      %301 = tpu.dynamic_rotate %18 by %c31_i32_69 dim 1 : vector<8x256xf32>, i32 -> vector<8x256xf32>
      %cst_70 = arith.constant 0.000000e+00 : f32
      %302 = vector.shape_cast %290 : vector<1x256xi1> to vector<1x256xi1>
      %303 = vector.broadcast %302 : vector<1x256xi1> to vector<8x256xi1>
      %304 = vector.broadcast %cst_70 : f32 to vector<8x256xf32>
      %305 = arith.select %303, %301, %304 : vector<8x256xi1>, vector<8x256xf32>
      %306 = vector.broadcast %300 : f32 to vector<8x256xf32>
      %307 = arith.mulf %306, %305 : vector<8x256xf32>
      %308 = arith.addf %299, %307 : vector<8x256xf32>
      %309 = arith.andi %36, %71 : vector<1x256xi1>
      %c12 = arith.constant 12 : index
      %310 = memref.load %arg4[%c12] : memref<98xf32, #tpu.memory_space<smem>>
      %c30_i32 = arith.constant 30 : i32
      %311 = tpu.dynamic_rotate %17 by %c30_i32 dim 1 : vector<8x256xf32>, i32 -> vector<8x256xf32>
      %cst_71 = arith.constant 0.000000e+00 : f32
      %312 = vector.shape_cast %309 : vector<1x256xi1> to vector<1x256xi1>
      %313 = vector.broadcast %312 : vector<1x256xi1> to vector<8x256xi1>
      %314 = vector.broadcast %cst_71 : f32 to vector<8x256xf32>
      %315 = arith.select %313, %311, %314 : vector<8x256xi1>, vector<8x256xf32>
      %316 = vector.broadcast %310 : f32 to vector<8x256xf32>
      %317 = arith.mulf %316, %315 : vector<8x256xf32>
      %318 = arith.addf %308, %317 : vector<8x256xf32>
      %c61 = arith.constant 61 : index
      %319 = memref.load %arg4[%c61] : memref<98xf32, #tpu.memory_space<smem>>
      %c30_i32_72 = arith.constant 30 : i32
      %320 = tpu.dynamic_rotate %18 by %c30_i32_72 dim 1 : vector<8x256xf32>, i32 -> vector<8x256xf32>
      %cst_73 = arith.constant 0.000000e+00 : f32
      %321 = vector.shape_cast %309 : vector<1x256xi1> to vector<1x256xi1>
      %322 = vector.broadcast %321 : vector<1x256xi1> to vector<8x256xi1>
      %323 = vector.broadcast %cst_73 : f32 to vector<8x256xf32>
      %324 = arith.select %322, %320, %323 : vector<8x256xi1>, vector<8x256xf32>
      %325 = vector.broadcast %319 : f32 to vector<8x256xf32>
      %326 = arith.mulf %325, %324 : vector<8x256xf32>
      %327 = arith.addf %318, %326 : vector<8x256xf32>
      %328 = arith.andi %36, %81 : vector<1x256xi1>
      %c13 = arith.constant 13 : index
      %329 = memref.load %arg4[%c13] : memref<98xf32, #tpu.memory_space<smem>>
      %c29_i32 = arith.constant 29 : i32
      %330 = tpu.dynamic_rotate %17 by %c29_i32 dim 1 : vector<8x256xf32>, i32 -> vector<8x256xf32>
      %cst_74 = arith.constant 0.000000e+00 : f32
      %331 = vector.shape_cast %328 : vector<1x256xi1> to vector<1x256xi1>
      %332 = vector.broadcast %331 : vector<1x256xi1> to vector<8x256xi1>
      %333 = vector.broadcast %cst_74 : f32 to vector<8x256xf32>
      %334 = arith.select %332, %330, %333 : vector<8x256xi1>, vector<8x256xf32>
      %335 = vector.broadcast %329 : f32 to vector<8x256xf32>
      %336 = arith.mulf %335, %334 : vector<8x256xf32>
      %337 = arith.addf %327, %336 : vector<8x256xf32>
      %c62 = arith.constant 62 : index
      %338 = memref.load %arg4[%c62] : memref<98xf32, #tpu.memory_space<smem>>
      %c29_i32_75 = arith.constant 29 : i32
      %339 = tpu.dynamic_rotate %18 by %c29_i32_75 dim 1 : vector<8x256xf32>, i32 -> vector<8x256xf32>
      %cst_76 = arith.constant 0.000000e+00 : f32
      %340 = vector.shape_cast %328 : vector<1x256xi1> to vector<1x256xi1>
      %341 = vector.broadcast %340 : vector<1x256xi1> to vector<8x256xi1>
      %342 = vector.broadcast %cst_76 : f32 to vector<8x256xf32>
      %343 = arith.select %341, %339, %342 : vector<8x256xi1>, vector<8x256xf32>
      %344 = vector.broadcast %338 : f32 to vector<8x256xf32>
      %345 = arith.mulf %344, %343 : vector<8x256xf32>
      %346 = arith.addf %337, %345 : vector<8x256xf32>
      %347 = arith.andi %46, %31 : vector<1x256xi1>
      %c14 = arith.constant 14 : index
      %348 = memref.load %arg4[%c14] : memref<98xf32, #tpu.memory_space<smem>>
      %c19_i32_77 = arith.constant 19 : i32
      %349 = tpu.dynamic_rotate %17 by %c19_i32_77 dim 1 : vector<8x256xf32>, i32 -> vector<8x256xf32>
      %cst_78 = arith.constant 0.000000e+00 : f32
      %350 = vector.shape_cast %347 : vector<1x256xi1> to vector<1x256xi1>
      %351 = vector.broadcast %350 : vector<1x256xi1> to vector<8x256xi1>
      %352 = vector.broadcast %cst_78 : f32 to vector<8x256xf32>
      %353 = arith.select %351, %349, %352 : vector<8x256xi1>, vector<8x256xf32>
      %354 = vector.broadcast %348 : f32 to vector<8x256xf32>
      %355 = arith.mulf %354, %353 : vector<8x256xf32>
      %356 = arith.addf %346, %355 : vector<8x256xf32>
      %c63 = arith.constant 63 : index
      %357 = memref.load %arg4[%c63] : memref<98xf32, #tpu.memory_space<smem>>
      %c19_i32_79 = arith.constant 19 : i32
      %358 = tpu.dynamic_rotate %18 by %c19_i32_79 dim 1 : vector<8x256xf32>, i32 -> vector<8x256xf32>
      %cst_80 = arith.constant 0.000000e+00 : f32
      %359 = vector.shape_cast %347 : vector<1x256xi1> to vector<1x256xi1>
      %360 = vector.broadcast %359 : vector<1x256xi1> to vector<8x256xi1>
      %361 = vector.broadcast %cst_80 : f32 to vector<8x256xf32>
      %362 = arith.select %360, %358, %361 : vector<8x256xi1>, vector<8x256xf32>
      %363 = vector.broadcast %357 : f32 to vector<8x256xf32>
      %364 = arith.mulf %363, %362 : vector<8x256xf32>
      %365 = arith.addf %356, %364 : vector<8x256xf32>
      %366 = arith.andi %46, %41 : vector<1x256xi1>
      %c15 = arith.constant 15 : index
      %367 = memref.load %arg4[%c15] : memref<98xf32, #tpu.memory_space<smem>>
      %c18_i32_81 = arith.constant 18 : i32
      %368 = tpu.dynamic_rotate %17 by %c18_i32_81 dim 1 : vector<8x256xf32>, i32 -> vector<8x256xf32>
      %cst_82 = arith.constant 0.000000e+00 : f32
      %369 = vector.shape_cast %366 : vector<1x256xi1> to vector<1x256xi1>
      %370 = vector.broadcast %369 : vector<1x256xi1> to vector<8x256xi1>
      %371 = vector.broadcast %cst_82 : f32 to vector<8x256xf32>
      %372 = arith.select %370, %368, %371 : vector<8x256xi1>, vector<8x256xf32>
      %373 = vector.broadcast %367 : f32 to vector<8x256xf32>
      %374 = arith.mulf %373, %372 : vector<8x256xf32>
      %375 = arith.addf %365, %374 : vector<8x256xf32>
      %c64 = arith.constant 64 : index
      %376 = memref.load %arg4[%c64] : memref<98xf32, #tpu.memory_space<smem>>
      %c18_i32_83 = arith.constant 18 : i32
      %377 = tpu.dynamic_rotate %18 by %c18_i32_83 dim 1 : vector<8x256xf32>, i32 -> vector<8x256xf32>
      %cst_84 = arith.constant 0.000000e+00 : f32
      %378 = vector.shape_cast %366 : vector<1x256xi1> to vector<1x256xi1>
      %379 = vector.broadcast %378 : vector<1x256xi1> to vector<8x256xi1>
      %380 = vector.broadcast %cst_84 : f32 to vector<8x256xf32>
      %381 = arith.select %379, %377, %380 : vector<8x256xi1>, vector<8x256xf32>
      %382 = vector.broadcast %376 : f32 to vector<8x256xf32>
      %383 = arith.mulf %382, %381 : vector<8x256xf32>
      %384 = arith.addf %375, %383 : vector<8x256xf32>
      %385 = arith.andi %46, %51 : vector<1x256xi1>
      %c16 = arith.constant 16 : index
      %386 = memref.load %arg4[%c16] : memref<98xf32, #tpu.memory_space<smem>>
      %c17_i32_85 = arith.constant 17 : i32
      %387 = tpu.dynamic_rotate %17 by %c17_i32_85 dim 1 : vector<8x256xf32>, i32 -> vector<8x256xf32>
      %cst_86 = arith.constant 0.000000e+00 : f32
      %388 = vector.shape_cast %385 : vector<1x256xi1> to vector<1x256xi1>
      %389 = vector.broadcast %388 : vector<1x256xi1> to vector<8x256xi1>
      %390 = vector.broadcast %cst_86 : f32 to vector<8x256xf32>
      %391 = arith.select %389, %387, %390 : vector<8x256xi1>, vector<8x256xf32>
      %392 = vector.broadcast %386 : f32 to vector<8x256xf32>
      %393 = arith.mulf %392, %391 : vector<8x256xf32>
      %394 = arith.addf %384, %393 : vector<8x256xf32>
      %c65 = arith.constant 65 : index
      %395 = memref.load %arg4[%c65] : memref<98xf32, #tpu.memory_space<smem>>
      %c17_i32_87 = arith.constant 17 : i32
      %396 = tpu.dynamic_rotate %18 by %c17_i32_87 dim 1 : vector<8x256xf32>, i32 -> vector<8x256xf32>
      %cst_88 = arith.constant 0.000000e+00 : f32
      %397 = vector.shape_cast %385 : vector<1x256xi1> to vector<1x256xi1>
      %398 = vector.broadcast %397 : vector<1x256xi1> to vector<8x256xi1>
      %399 = vector.broadcast %cst_88 : f32 to vector<8x256xf32>
      %400 = arith.select %398, %396, %399 : vector<8x256xi1>, vector<8x256xf32>
      %401 = vector.broadcast %395 : f32 to vector<8x256xf32>
      %402 = arith.mulf %401, %400 : vector<8x256xf32>
      %403 = arith.addf %394, %402 : vector<8x256xf32>
      %c17 = arith.constant 17 : index
      %404 = memref.load %arg4[%c17] : memref<98xf32, #tpu.memory_space<smem>>
      %c16_i32 = arith.constant 16 : i32
      %405 = tpu.dynamic_rotate %17 by %c16_i32 dim 1 : vector<8x256xf32>, i32 -> vector<8x256xf32>
      %cst_89 = arith.constant 0.000000e+00 : f32
      %406 = vector.shape_cast %46 : vector<1x256xi1> to vector<1x256xi1>
      %407 = vector.broadcast %406 : vector<1x256xi1> to vector<8x256xi1>
      %408 = vector.broadcast %cst_89 : f32 to vector<8x256xf32>
      %409 = arith.select %407, %405, %408 : vector<8x256xi1>, vector<8x256xf32>
      %410 = vector.broadcast %404 : f32 to vector<8x256xf32>
      %411 = arith.mulf %410, %409 : vector<8x256xf32>
      %412 = arith.addf %403, %411 : vector<8x256xf32>
      %c66 = arith.constant 66 : index
      %413 = memref.load %arg4[%c66] : memref<98xf32, #tpu.memory_space<smem>>
      %c16_i32_90 = arith.constant 16 : i32
      %414 = tpu.dynamic_rotate %18 by %c16_i32_90 dim 1 : vector<8x256xf32>, i32 -> vector<8x256xf32>
      %cst_91 = arith.constant 0.000000e+00 : f32
      %415 = vector.shape_cast %46 : vector<1x256xi1> to vector<1x256xi1>
      %416 = vector.broadcast %415 : vector<1x256xi1> to vector<8x256xi1>
      %417 = vector.broadcast %cst_91 : f32 to vector<8x256xf32>
      %418 = arith.select %416, %414, %417 : vector<8x256xi1>, vector<8x256xf32>
      %419 = vector.broadcast %413 : f32 to vector<8x256xf32>
      %420 = arith.mulf %419, %418 : vector<8x256xf32>
      %421 = arith.addf %412, %420 : vector<8x256xf32>
      %422 = arith.andi %46, %61 : vector<1x256xi1>
      %c18 = arith.constant 18 : index
      %423 = memref.load %arg4[%c18] : memref<98xf32, #tpu.memory_space<smem>>
      %c15_i32_92 = arith.constant 15 : i32
      %424 = tpu.dynamic_rotate %17 by %c15_i32_92 dim 1 : vector<8x256xf32>, i32 -> vector<8x256xf32>
      %cst_93 = arith.constant 0.000000e+00 : f32
      %425 = vector.shape_cast %422 : vector<1x256xi1> to vector<1x256xi1>
      %426 = vector.broadcast %425 : vector<1x256xi1> to vector<8x256xi1>
      %427 = vector.broadcast %cst_93 : f32 to vector<8x256xf32>
      %428 = arith.select %426, %424, %427 : vector<8x256xi1>, vector<8x256xf32>
      %429 = vector.broadcast %423 : f32 to vector<8x256xf32>
      %430 = arith.mulf %429, %428 : vector<8x256xf32>
      %431 = arith.addf %421, %430 : vector<8x256xf32>
      %c67 = arith.constant 67 : index
      %432 = memref.load %arg4[%c67] : memref<98xf32, #tpu.memory_space<smem>>
      %c15_i32_94 = arith.constant 15 : i32
      %433 = tpu.dynamic_rotate %18 by %c15_i32_94 dim 1 : vector<8x256xf32>, i32 -> vector<8x256xf32>
      %cst_95 = arith.constant 0.000000e+00 : f32
      %434 = vector.shape_cast %422 : vector<1x256xi1> to vector<1x256xi1>
      %435 = vector.broadcast %434 : vector<1x256xi1> to vector<8x256xi1>
      %436 = vector.broadcast %cst_95 : f32 to vector<8x256xf32>
      %437 = arith.select %435, %433, %436 : vector<8x256xi1>, vector<8x256xf32>
      %438 = vector.broadcast %432 : f32 to vector<8x256xf32>
      %439 = arith.mulf %438, %437 : vector<8x256xf32>
      %440 = arith.addf %431, %439 : vector<8x256xf32>
      %441 = arith.andi %46, %71 : vector<1x256xi1>
      %c19 = arith.constant 19 : index
      %442 = memref.load %arg4[%c19] : memref<98xf32, #tpu.memory_space<smem>>
      %c14_i32_96 = arith.constant 14 : i32
      %443 = tpu.dynamic_rotate %17 by %c14_i32_96 dim 1 : vector<8x256xf32>, i32 -> vector<8x256xf32>
      %cst_97 = arith.constant 0.000000e+00 : f32
      %444 = vector.shape_cast %441 : vector<1x256xi1> to vector<1x256xi1>
      %445 = vector.broadcast %444 : vector<1x256xi1> to vector<8x256xi1>
      %446 = vector.broadcast %cst_97 : f32 to vector<8x256xf32>
      %447 = arith.select %445, %443, %446 : vector<8x256xi1>, vector<8x256xf32>
      %448 = vector.broadcast %442 : f32 to vector<8x256xf32>
      %449 = arith.mulf %448, %447 : vector<8x256xf32>
      %450 = arith.addf %440, %449 : vector<8x256xf32>
      %c68 = arith.constant 68 : index
      %451 = memref.load %arg4[%c68] : memref<98xf32, #tpu.memory_space<smem>>
      %c14_i32_98 = arith.constant 14 : i32
      %452 = tpu.dynamic_rotate %18 by %c14_i32_98 dim 1 : vector<8x256xf32>, i32 -> vector<8x256xf32>
      %cst_99 = arith.constant 0.000000e+00 : f32
      %453 = vector.shape_cast %441 : vector<1x256xi1> to vector<1x256xi1>
      %454 = vector.broadcast %453 : vector<1x256xi1> to vector<8x256xi1>
      %455 = vector.broadcast %cst_99 : f32 to vector<8x256xf32>
      %456 = arith.select %454, %452, %455 : vector<8x256xi1>, vector<8x256xf32>
      %457 = vector.broadcast %451 : f32 to vector<8x256xf32>
      %458 = arith.mulf %457, %456 : vector<8x256xf32>
      %459 = arith.addf %450, %458 : vector<8x256xf32>
      %460 = arith.andi %46, %81 : vector<1x256xi1>
      %c20 = arith.constant 20 : index
      %461 = memref.load %arg4[%c20] : memref<98xf32, #tpu.memory_space<smem>>
      %c13_i32_100 = arith.constant 13 : i32
      %462 = tpu.dynamic_rotate %17 by %c13_i32_100 dim 1 : vector<8x256xf32>, i32 -> vector<8x256xf32>
      %cst_101 = arith.constant 0.000000e+00 : f32
      %463 = vector.shape_cast %460 : vector<1x256xi1> to vector<1x256xi1>
      %464 = vector.broadcast %463 : vector<1x256xi1> to vector<8x256xi1>
      %465 = vector.broadcast %cst_101 : f32 to vector<8x256xf32>
      %466 = arith.select %464, %462, %465 : vector<8x256xi1>, vector<8x256xf32>
      %467 = vector.broadcast %461 : f32 to vector<8x256xf32>
      %468 = arith.mulf %467, %466 : vector<8x256xf32>
      %469 = arith.addf %459, %468 : vector<8x256xf32>
      %c69 = arith.constant 69 : index
      %470 = memref.load %arg4[%c69] : memref<98xf32, #tpu.memory_space<smem>>
      %c13_i32_102 = arith.constant 13 : i32
      %471 = tpu.dynamic_rotate %18 by %c13_i32_102 dim 1 : vector<8x256xf32>, i32 -> vector<8x256xf32>
      %cst_103 = arith.constant 0.000000e+00 : f32
      %472 = vector.shape_cast %460 : vector<1x256xi1> to vector<1x256xi1>
      %473 = vector.broadcast %472 : vector<1x256xi1> to vector<8x256xi1>
      %474 = vector.broadcast %cst_103 : f32 to vector<8x256xf32>
      %475 = arith.select %473, %471, %474 : vector<8x256xi1>, vector<8x256xf32>
      %476 = vector.broadcast %470 : f32 to vector<8x256xf32>
      %477 = arith.mulf %476, %475 : vector<8x256xf32>
      %478 = arith.addf %469, %477 : vector<8x256xf32>
      %c21 = arith.constant 21 : index
      %479 = memref.load %arg4[%c21] : memref<98xf32, #tpu.memory_space<smem>>
      %c3_i32_104 = arith.constant 3 : i32
      %480 = tpu.dynamic_rotate %17 by %c3_i32_104 dim 1 : vector<8x256xf32>, i32 -> vector<8x256xf32>
      %cst_105 = arith.constant 0.000000e+00 : f32
      %481 = vector.shape_cast %31 : vector<1x256xi1> to vector<1x256xi1>
      %482 = vector.broadcast %481 : vector<1x256xi1> to vector<8x256xi1>
      %483 = vector.broadcast %cst_105 : f32 to vector<8x256xf32>
      %484 = arith.select %482, %480, %483 : vector<8x256xi1>, vector<8x256xf32>
      %485 = vector.broadcast %479 : f32 to vector<8x256xf32>
      %486 = arith.mulf %485, %484 : vector<8x256xf32>
      %487 = arith.addf %478, %486 : vector<8x256xf32>
      %c70 = arith.constant 70 : index
      %488 = memref.load %arg4[%c70] : memref<98xf32, #tpu.memory_space<smem>>
      %c3_i32_106 = arith.constant 3 : i32
      %489 = tpu.dynamic_rotate %18 by %c3_i32_106 dim 1 : vector<8x256xf32>, i32 -> vector<8x256xf32>
      %cst_107 = arith.constant 0.000000e+00 : f32
      %490 = vector.shape_cast %31 : vector<1x256xi1> to vector<1x256xi1>
      %491 = vector.broadcast %490 : vector<1x256xi1> to vector<8x256xi1>
      %492 = vector.broadcast %cst_107 : f32 to vector<8x256xf32>
      %493 = arith.select %491, %489, %492 : vector<8x256xi1>, vector<8x256xf32>
      %494 = vector.broadcast %488 : f32 to vector<8x256xf32>
      %495 = arith.mulf %494, %493 : vector<8x256xf32>
      %496 = arith.addf %487, %495 : vector<8x256xf32>
      %c22 = arith.constant 22 : index
      %497 = memref.load %arg4[%c22] : memref<98xf32, #tpu.memory_space<smem>>
      %c2_i32_108 = arith.constant 2 : i32
      %498 = tpu.dynamic_rotate %17 by %c2_i32_108 dim 1 : vector<8x256xf32>, i32 -> vector<8x256xf32>
      %cst_109 = arith.constant 0.000000e+00 : f32
      %499 = vector.shape_cast %41 : vector<1x256xi1> to vector<1x256xi1>
      %500 = vector.broadcast %499 : vector<1x256xi1> to vector<8x256xi1>
      %501 = vector.broadcast %cst_109 : f32 to vector<8x256xf32>
      %502 = arith.select %500, %498, %501 : vector<8x256xi1>, vector<8x256xf32>
      %503 = vector.broadcast %497 : f32 to vector<8x256xf32>
      %504 = arith.mulf %503, %502 : vector<8x256xf32>
      %505 = arith.addf %496, %504 : vector<8x256xf32>
      %c71 = arith.constant 71 : index
      %506 = memref.load %arg4[%c71] : memref<98xf32, #tpu.memory_space<smem>>
      %c2_i32_110 = arith.constant 2 : i32
      %507 = tpu.dynamic_rotate %18 by %c2_i32_110 dim 1 : vector<8x256xf32>, i32 -> vector<8x256xf32>
      %cst_111 = arith.constant 0.000000e+00 : f32
      %508 = vector.shape_cast %41 : vector<1x256xi1> to vector<1x256xi1>
      %509 = vector.broadcast %508 : vector<1x256xi1> to vector<8x256xi1>
      %510 = vector.broadcast %cst_111 : f32 to vector<8x256xf32>
      %511 = arith.select %509, %507, %510 : vector<8x256xi1>, vector<8x256xf32>
      %512 = vector.broadcast %506 : f32 to vector<8x256xf32>
      %513 = arith.mulf %512, %511 : vector<8x256xf32>
      %514 = arith.addf %505, %513 : vector<8x256xf32>
      %c23 = arith.constant 23 : index
      %515 = memref.load %arg4[%c23] : memref<98xf32, #tpu.memory_space<smem>>
      %c1_i32_112 = arith.constant 1 : i32
      %516 = tpu.dynamic_rotate %17 by %c1_i32_112 dim 1 : vector<8x256xf32>, i32 -> vector<8x256xf32>
      %cst_113 = arith.constant 0.000000e+00 : f32
      %517 = vector.shape_cast %51 : vector<1x256xi1> to vector<1x256xi1>
      %518 = vector.broadcast %517 : vector<1x256xi1> to vector<8x256xi1>
      %519 = vector.broadcast %cst_113 : f32 to vector<8x256xf32>
      %520 = arith.select %518, %516, %519 : vector<8x256xi1>, vector<8x256xf32>
      %521 = vector.broadcast %515 : f32 to vector<8x256xf32>
      %522 = arith.mulf %521, %520 : vector<8x256xf32>
      %523 = arith.addf %514, %522 : vector<8x256xf32>
      %c72 = arith.constant 72 : index
      %524 = memref.load %arg4[%c72] : memref<98xf32, #tpu.memory_space<smem>>
      %c1_i32_114 = arith.constant 1 : i32
      %525 = tpu.dynamic_rotate %18 by %c1_i32_114 dim 1 : vector<8x256xf32>, i32 -> vector<8x256xf32>
      %cst_115 = arith.constant 0.000000e+00 : f32
      %526 = vector.shape_cast %51 : vector<1x256xi1> to vector<1x256xi1>
      %527 = vector.broadcast %526 : vector<1x256xi1> to vector<8x256xi1>
      %528 = vector.broadcast %cst_115 : f32 to vector<8x256xf32>
      %529 = arith.select %527, %525, %528 : vector<8x256xi1>, vector<8x256xf32>
      %530 = vector.broadcast %524 : f32 to vector<8x256xf32>
      %531 = arith.mulf %530, %529 : vector<8x256xf32>
      %532 = arith.addf %523, %531 : vector<8x256xf32>
      %c24 = arith.constant 24 : index
      %533 = memref.load %arg4[%c24] : memref<98xf32, #tpu.memory_space<smem>>
      %534 = vector.broadcast %533 : f32 to vector<8x256xf32>
      %535 = arith.mulf %534, %17 : vector<8x256xf32>
      %536 = arith.addf %532, %535 : vector<8x256xf32>
      %c73 = arith.constant 73 : index
      %537 = memref.load %arg4[%c73] : memref<98xf32, #tpu.memory_space<smem>>
      %538 = vector.broadcast %537 : f32 to vector<8x256xf32>
      %539 = arith.mulf %538, %18 : vector<8x256xf32>
      %540 = arith.addf %536, %539 : vector<8x256xf32>
      %c25 = arith.constant 25 : index
      %541 = memref.load %arg4[%c25] : memref<98xf32, #tpu.memory_space<smem>>
      %c255_i32 = arith.constant 255 : i32
      %542 = tpu.dynamic_rotate %17 by %c255_i32 dim 1 : vector<8x256xf32>, i32 -> vector<8x256xf32>
      %cst_116 = arith.constant 0.000000e+00 : f32
      %543 = vector.shape_cast %61 : vector<1x256xi1> to vector<1x256xi1>
      %544 = vector.broadcast %543 : vector<1x256xi1> to vector<8x256xi1>
      %545 = vector.broadcast %cst_116 : f32 to vector<8x256xf32>
      %546 = arith.select %544, %542, %545 : vector<8x256xi1>, vector<8x256xf32>
      %547 = vector.broadcast %541 : f32 to vector<8x256xf32>
      %548 = arith.mulf %547, %546 : vector<8x256xf32>
      %549 = arith.addf %540, %548 : vector<8x256xf32>
      %c74 = arith.constant 74 : index
      %550 = memref.load %arg4[%c74] : memref<98xf32, #tpu.memory_space<smem>>
      %c255_i32_117 = arith.constant 255 : i32
      %551 = tpu.dynamic_rotate %18 by %c255_i32_117 dim 1 : vector<8x256xf32>, i32 -> vector<8x256xf32>
      %cst_118 = arith.constant 0.000000e+00 : f32
      %552 = vector.shape_cast %61 : vector<1x256xi1> to vector<1x256xi1>
      %553 = vector.broadcast %552 : vector<1x256xi1> to vector<8x256xi1>
      %554 = vector.broadcast %cst_118 : f32 to vector<8x256xf32>
      %555 = arith.select %553, %551, %554 : vector<8x256xi1>, vector<8x256xf32>
      %556 = vector.broadcast %550 : f32 to vector<8x256xf32>
      %557 = arith.mulf %556, %555 : vector<8x256xf32>
      %558 = arith.addf %549, %557 : vector<8x256xf32>
      %c26 = arith.constant 26 : index
      %559 = memref.load %arg4[%c26] : memref<98xf32, #tpu.memory_space<smem>>
      %c254_i32 = arith.constant 254 : i32
      %560 = tpu.dynamic_rotate %17 by %c254_i32 dim 1 : vector<8x256xf32>, i32 -> vector<8x256xf32>
      %cst_119 = arith.constant 0.000000e+00 : f32
      %561 = vector.shape_cast %71 : vector<1x256xi1> to vector<1x256xi1>
      %562 = vector.broadcast %561 : vector<1x256xi1> to vector<8x256xi1>
      %563 = vector.broadcast %cst_119 : f32 to vector<8x256xf32>
      %564 = arith.select %562, %560, %563 : vector<8x256xi1>, vector<8x256xf32>
      %565 = vector.broadcast %559 : f32 to vector<8x256xf32>
      %566 = arith.mulf %565, %564 : vector<8x256xf32>
      %567 = arith.addf %558, %566 : vector<8x256xf32>
      %c75 = arith.constant 75 : index
      %568 = memref.load %arg4[%c75] : memref<98xf32, #tpu.memory_space<smem>>
      %c254_i32_120 = arith.constant 254 : i32
      %569 = tpu.dynamic_rotate %18 by %c254_i32_120 dim 1 : vector<8x256xf32>, i32 -> vector<8x256xf32>
      %cst_121 = arith.constant 0.000000e+00 : f32
      %570 = vector.shape_cast %71 : vector<1x256xi1> to vector<1x256xi1>
      %571 = vector.broadcast %570 : vector<1x256xi1> to vector<8x256xi1>
      %572 = vector.broadcast %cst_121 : f32 to vector<8x256xf32>
      %573 = arith.select %571, %569, %572 : vector<8x256xi1>, vector<8x256xf32>
      %574 = vector.broadcast %568 : f32 to vector<8x256xf32>
      %575 = arith.mulf %574, %573 : vector<8x256xf32>
      %576 = arith.addf %567, %575 : vector<8x256xf32>
      %c27 = arith.constant 27 : index
      %577 = memref.load %arg4[%c27] : memref<98xf32, #tpu.memory_space<smem>>
      %c253_i32 = arith.constant 253 : i32
      %578 = tpu.dynamic_rotate %17 by %c253_i32 dim 1 : vector<8x256xf32>, i32 -> vector<8x256xf32>
      %cst_122 = arith.constant 0.000000e+00 : f32
      %579 = vector.shape_cast %81 : vector<1x256xi1> to vector<1x256xi1>
      %580 = vector.broadcast %579 : vector<1x256xi1> to vector<8x256xi1>
      %581 = vector.broadcast %cst_122 : f32 to vector<8x256xf32>
      %582 = arith.select %580, %578, %581 : vector<8x256xi1>, vector<8x256xf32>
      %583 = vector.broadcast %577 : f32 to vector<8x256xf32>
      %584 = arith.mulf %583, %582 : vector<8x256xf32>
      %585 = arith.addf %576, %584 : vector<8x256xf32>
      %c76 = arith.constant 76 : index
      %586 = memref.load %arg4[%c76] : memref<98xf32, #tpu.memory_space<smem>>
      %c253_i32_123 = arith.constant 253 : i32
      %587 = tpu.dynamic_rotate %18 by %c253_i32_123 dim 1 : vector<8x256xf32>, i32 -> vector<8x256xf32>
      %cst_124 = arith.constant 0.000000e+00 : f32
      %588 = vector.shape_cast %81 : vector<1x256xi1> to vector<1x256xi1>
      %589 = vector.broadcast %588 : vector<1x256xi1> to vector<8x256xi1>
      %590 = vector.broadcast %cst_124 : f32 to vector<8x256xf32>
      %591 = arith.select %589, %587, %590 : vector<8x256xi1>, vector<8x256xf32>
      %592 = vector.broadcast %586 : f32 to vector<8x256xf32>
      %593 = arith.mulf %592, %591 : vector<8x256xf32>
      %594 = arith.addf %585, %593 : vector<8x256xf32>
      %595 = arith.andi %56, %31 : vector<1x256xi1>
      %c28 = arith.constant 28 : index
      %596 = memref.load %arg4[%c28] : memref<98xf32, #tpu.memory_space<smem>>
      %c243_i32 = arith.constant 243 : i32
      %597 = tpu.dynamic_rotate %17 by %c243_i32 dim 1 : vector<8x256xf32>, i32 -> vector<8x256xf32>
      %cst_125 = arith.constant 0.000000e+00 : f32
      %598 = vector.shape_cast %595 : vector<1x256xi1> to vector<1x256xi1>
      %599 = vector.broadcast %598 : vector<1x256xi1> to vector<8x256xi1>
      %600 = vector.broadcast %cst_125 : f32 to vector<8x256xf32>
      %601 = arith.select %599, %597, %600 : vector<8x256xi1>, vector<8x256xf32>
      %602 = vector.broadcast %596 : f32 to vector<8x256xf32>
      %603 = arith.mulf %602, %601 : vector<8x256xf32>
      %604 = arith.addf %594, %603 : vector<8x256xf32>
      %c77 = arith.constant 77 : index
      %605 = memref.load %arg4[%c77] : memref<98xf32, #tpu.memory_space<smem>>
      %c243_i32_126 = arith.constant 243 : i32
      %606 = tpu.dynamic_rotate %18 by %c243_i32_126 dim 1 : vector<8x256xf32>, i32 -> vector<8x256xf32>
      %cst_127 = arith.constant 0.000000e+00 : f32
      %607 = vector.shape_cast %595 : vector<1x256xi1> to vector<1x256xi1>
      %608 = vector.broadcast %607 : vector<1x256xi1> to vector<8x256xi1>
      %609 = vector.broadcast %cst_127 : f32 to vector<8x256xf32>
      %610 = arith.select %608, %606, %609 : vector<8x256xi1>, vector<8x256xf32>
      %611 = vector.broadcast %605 : f32 to vector<8x256xf32>
      %612 = arith.mulf %611, %610 : vector<8x256xf32>
      %613 = arith.addf %604, %612 : vector<8x256xf32>
      %614 = arith.andi %56, %41 : vector<1x256xi1>
      %c29 = arith.constant 29 : index
      %615 = memref.load %arg4[%c29] : memref<98xf32, #tpu.memory_space<smem>>
      %c242_i32 = arith.constant 242 : i32
      %616 = tpu.dynamic_rotate %17 by %c242_i32 dim 1 : vector<8x256xf32>, i32 -> vector<8x256xf32>
      %cst_128 = arith.constant 0.000000e+00 : f32
      %617 = vector.shape_cast %614 : vector<1x256xi1> to vector<1x256xi1>
      %618 = vector.broadcast %617 : vector<1x256xi1> to vector<8x256xi1>
      %619 = vector.broadcast %cst_128 : f32 to vector<8x256xf32>
      %620 = arith.select %618, %616, %619 : vector<8x256xi1>, vector<8x256xf32>
      %621 = vector.broadcast %615 : f32 to vector<8x256xf32>
      %622 = arith.mulf %621, %620 : vector<8x256xf32>
      %623 = arith.addf %613, %622 : vector<8x256xf32>
      %c78 = arith.constant 78 : index
      %624 = memref.load %arg4[%c78] : memref<98xf32, #tpu.memory_space<smem>>
      %c242_i32_129 = arith.constant 242 : i32
      %625 = tpu.dynamic_rotate %18 by %c242_i32_129 dim 1 : vector<8x256xf32>, i32 -> vector<8x256xf32>
      %cst_130 = arith.constant 0.000000e+00 : f32
      %626 = vector.shape_cast %614 : vector<1x256xi1> to vector<1x256xi1>
      %627 = vector.broadcast %626 : vector<1x256xi1> to vector<8x256xi1>
      %628 = vector.broadcast %cst_130 : f32 to vector<8x256xf32>
      %629 = arith.select %627, %625, %628 : vector<8x256xi1>, vector<8x256xf32>
      %630 = vector.broadcast %624 : f32 to vector<8x256xf32>
      %631 = arith.mulf %630, %629 : vector<8x256xf32>
      %632 = arith.addf %623, %631 : vector<8x256xf32>
      %633 = arith.andi %56, %51 : vector<1x256xi1>
      %c30 = arith.constant 30 : index
      %634 = memref.load %arg4[%c30] : memref<98xf32, #tpu.memory_space<smem>>
      %c241_i32 = arith.constant 241 : i32
      %635 = tpu.dynamic_rotate %17 by %c241_i32 dim 1 : vector<8x256xf32>, i32 -> vector<8x256xf32>
      %cst_131 = arith.constant 0.000000e+00 : f32
      %636 = vector.shape_cast %633 : vector<1x256xi1> to vector<1x256xi1>
      %637 = vector.broadcast %636 : vector<1x256xi1> to vector<8x256xi1>
      %638 = vector.broadcast %cst_131 : f32 to vector<8x256xf32>
      %639 = arith.select %637, %635, %638 : vector<8x256xi1>, vector<8x256xf32>
      %640 = vector.broadcast %634 : f32 to vector<8x256xf32>
      %641 = arith.mulf %640, %639 : vector<8x256xf32>
      %642 = arith.addf %632, %641 : vector<8x256xf32>
      %c79 = arith.constant 79 : index
      %643 = memref.load %arg4[%c79] : memref<98xf32, #tpu.memory_space<smem>>
      %c241_i32_132 = arith.constant 241 : i32
      %644 = tpu.dynamic_rotate %18 by %c241_i32_132 dim 1 : vector<8x256xf32>, i32 -> vector<8x256xf32>
      %cst_133 = arith.constant 0.000000e+00 : f32
      %645 = vector.shape_cast %633 : vector<1x256xi1> to vector<1x256xi1>
      %646 = vector.broadcast %645 : vector<1x256xi1> to vector<8x256xi1>
      %647 = vector.broadcast %cst_133 : f32 to vector<8x256xf32>
      %648 = arith.select %646, %644, %647 : vector<8x256xi1>, vector<8x256xf32>
      %649 = vector.broadcast %643 : f32 to vector<8x256xf32>
      %650 = arith.mulf %649, %648 : vector<8x256xf32>
      %651 = arith.addf %642, %650 : vector<8x256xf32>
      %c31 = arith.constant 31 : index
      %652 = memref.load %arg4[%c31] : memref<98xf32, #tpu.memory_space<smem>>
      %c240_i32 = arith.constant 240 : i32
      %653 = tpu.dynamic_rotate %17 by %c240_i32 dim 1 : vector<8x256xf32>, i32 -> vector<8x256xf32>
      %cst_134 = arith.constant 0.000000e+00 : f32
      %654 = vector.shape_cast %56 : vector<1x256xi1> to vector<1x256xi1>
      %655 = vector.broadcast %654 : vector<1x256xi1> to vector<8x256xi1>
      %656 = vector.broadcast %cst_134 : f32 to vector<8x256xf32>
      %657 = arith.select %655, %653, %656 : vector<8x256xi1>, vector<8x256xf32>
      %658 = vector.broadcast %652 : f32 to vector<8x256xf32>
      %659 = arith.mulf %658, %657 : vector<8x256xf32>
      %660 = arith.addf %651, %659 : vector<8x256xf32>
      %c80 = arith.constant 80 : index
      %661 = memref.load %arg4[%c80] : memref<98xf32, #tpu.memory_space<smem>>
      %c240_i32_135 = arith.constant 240 : i32
      %662 = tpu.dynamic_rotate %18 by %c240_i32_135 dim 1 : vector<8x256xf32>, i32 -> vector<8x256xf32>
      %cst_136 = arith.constant 0.000000e+00 : f32
      %663 = vector.shape_cast %56 : vector<1x256xi1> to vector<1x256xi1>
      %664 = vector.broadcast %663 : vector<1x256xi1> to vector<8x256xi1>
      %665 = vector.broadcast %cst_136 : f32 to vector<8x256xf32>
      %666 = arith.select %664, %662, %665 : vector<8x256xi1>, vector<8x256xf32>
      %667 = vector.broadcast %661 : f32 to vector<8x256xf32>
      %668 = arith.mulf %667, %666 : vector<8x256xf32>
      %669 = arith.addf %660, %668 : vector<8x256xf32>
      %670 = arith.andi %56, %61 : vector<1x256xi1>
      %c32 = arith.constant 32 : index
      %671 = memref.load %arg4[%c32] : memref<98xf32, #tpu.memory_space<smem>>
      %c239_i32 = arith.constant 239 : i32
      %672 = tpu.dynamic_rotate %17 by %c239_i32 dim 1 : vector<8x256xf32>, i32 -> vector<8x256xf32>
      %cst_137 = arith.constant 0.000000e+00 : f32
      %673 = vector.shape_cast %670 : vector<1x256xi1> to vector<1x256xi1>
      %674 = vector.broadcast %673 : vector<1x256xi1> to vector<8x256xi1>
      %675 = vector.broadcast %cst_137 : f32 to vector<8x256xf32>
      %676 = arith.select %674, %672, %675 : vector<8x256xi1>, vector<8x256xf32>
      %677 = vector.broadcast %671 : f32 to vector<8x256xf32>
      %678 = arith.mulf %677, %676 : vector<8x256xf32>
      %679 = arith.addf %669, %678 : vector<8x256xf32>
      %c81 = arith.constant 81 : index
      %680 = memref.load %arg4[%c81] : memref<98xf32, #tpu.memory_space<smem>>
      %c239_i32_138 = arith.constant 239 : i32
      %681 = tpu.dynamic_rotate %18 by %c239_i32_138 dim 1 : vector<8x256xf32>, i32 -> vector<8x256xf32>
      %cst_139 = arith.constant 0.000000e+00 : f32
      %682 = vector.shape_cast %670 : vector<1x256xi1> to vector<1x256xi1>
      %683 = vector.broadcast %682 : vector<1x256xi1> to vector<8x256xi1>
      %684 = vector.broadcast %cst_139 : f32 to vector<8x256xf32>
      %685 = arith.select %683, %681, %684 : vector<8x256xi1>, vector<8x256xf32>
      %686 = vector.broadcast %680 : f32 to vector<8x256xf32>
      %687 = arith.mulf %686, %685 : vector<8x256xf32>
      %688 = arith.addf %679, %687 : vector<8x256xf32>
      %689 = arith.andi %56, %71 : vector<1x256xi1>
      %c33 = arith.constant 33 : index
      %690 = memref.load %arg4[%c33] : memref<98xf32, #tpu.memory_space<smem>>
      %c238_i32 = arith.constant 238 : i32
      %691 = tpu.dynamic_rotate %17 by %c238_i32 dim 1 : vector<8x256xf32>, i32 -> vector<8x256xf32>
      %cst_140 = arith.constant 0.000000e+00 : f32
      %692 = vector.shape_cast %689 : vector<1x256xi1> to vector<1x256xi1>
      %693 = vector.broadcast %692 : vector<1x256xi1> to vector<8x256xi1>
      %694 = vector.broadcast %cst_140 : f32 to vector<8x256xf32>
      %695 = arith.select %693, %691, %694 : vector<8x256xi1>, vector<8x256xf32>
      %696 = vector.broadcast %690 : f32 to vector<8x256xf32>
      %697 = arith.mulf %696, %695 : vector<8x256xf32>
      %698 = arith.addf %688, %697 : vector<8x256xf32>
      %c82 = arith.constant 82 : index
      %699 = memref.load %arg4[%c82] : memref<98xf32, #tpu.memory_space<smem>>
      %c238_i32_141 = arith.constant 238 : i32
      %700 = tpu.dynamic_rotate %18 by %c238_i32_141 dim 1 : vector<8x256xf32>, i32 -> vector<8x256xf32>
      %cst_142 = arith.constant 0.000000e+00 : f32
      %701 = vector.shape_cast %689 : vector<1x256xi1> to vector<1x256xi1>
      %702 = vector.broadcast %701 : vector<1x256xi1> to vector<8x256xi1>
      %703 = vector.broadcast %cst_142 : f32 to vector<8x256xf32>
      %704 = arith.select %702, %700, %703 : vector<8x256xi1>, vector<8x256xf32>
      %705 = vector.broadcast %699 : f32 to vector<8x256xf32>
      %706 = arith.mulf %705, %704 : vector<8x256xf32>
      %707 = arith.addf %698, %706 : vector<8x256xf32>
      %708 = arith.andi %56, %81 : vector<1x256xi1>
      %c34 = arith.constant 34 : index
      %709 = memref.load %arg4[%c34] : memref<98xf32, #tpu.memory_space<smem>>
      %c237_i32 = arith.constant 237 : i32
      %710 = tpu.dynamic_rotate %17 by %c237_i32 dim 1 : vector<8x256xf32>, i32 -> vector<8x256xf32>
      %cst_143 = arith.constant 0.000000e+00 : f32
      %711 = vector.shape_cast %708 : vector<1x256xi1> to vector<1x256xi1>
      %712 = vector.broadcast %711 : vector<1x256xi1> to vector<8x256xi1>
      %713 = vector.broadcast %cst_143 : f32 to vector<8x256xf32>
      %714 = arith.select %712, %710, %713 : vector<8x256xi1>, vector<8x256xf32>
      %715 = vector.broadcast %709 : f32 to vector<8x256xf32>
      %716 = arith.mulf %715, %714 : vector<8x256xf32>
      %717 = arith.addf %707, %716 : vector<8x256xf32>
      %c83 = arith.constant 83 : index
      %718 = memref.load %arg4[%c83] : memref<98xf32, #tpu.memory_space<smem>>
      %c237_i32_144 = arith.constant 237 : i32
      %719 = tpu.dynamic_rotate %18 by %c237_i32_144 dim 1 : vector<8x256xf32>, i32 -> vector<8x256xf32>
      %cst_145 = arith.constant 0.000000e+00 : f32
      %720 = vector.shape_cast %708 : vector<1x256xi1> to vector<1x256xi1>
      %721 = vector.broadcast %720 : vector<1x256xi1> to vector<8x256xi1>
      %722 = vector.broadcast %cst_145 : f32 to vector<8x256xf32>
      %723 = arith.select %721, %719, %722 : vector<8x256xi1>, vector<8x256xf32>
      %724 = vector.broadcast %718 : f32 to vector<8x256xf32>
      %725 = arith.mulf %724, %723 : vector<8x256xf32>
      %726 = arith.addf %717, %725 : vector<8x256xf32>
      %727 = arith.andi %66, %31 : vector<1x256xi1>
      %c35 = arith.constant 35 : index
      %728 = memref.load %arg4[%c35] : memref<98xf32, #tpu.memory_space<smem>>
      %c227_i32 = arith.constant 227 : i32
      %729 = tpu.dynamic_rotate %17 by %c227_i32 dim 1 : vector<8x256xf32>, i32 -> vector<8x256xf32>
      %cst_146 = arith.constant 0.000000e+00 : f32
      %730 = vector.shape_cast %727 : vector<1x256xi1> to vector<1x256xi1>
      %731 = vector.broadcast %730 : vector<1x256xi1> to vector<8x256xi1>
      %732 = vector.broadcast %cst_146 : f32 to vector<8x256xf32>
      %733 = arith.select %731, %729, %732 : vector<8x256xi1>, vector<8x256xf32>
      %734 = vector.broadcast %728 : f32 to vector<8x256xf32>
      %735 = arith.mulf %734, %733 : vector<8x256xf32>
      %736 = arith.addf %726, %735 : vector<8x256xf32>
      %c84 = arith.constant 84 : index
      %737 = memref.load %arg4[%c84] : memref<98xf32, #tpu.memory_space<smem>>
      %c227_i32_147 = arith.constant 227 : i32
      %738 = tpu.dynamic_rotate %18 by %c227_i32_147 dim 1 : vector<8x256xf32>, i32 -> vector<8x256xf32>
      %cst_148 = arith.constant 0.000000e+00 : f32
      %739 = vector.shape_cast %727 : vector<1x256xi1> to vector<1x256xi1>
      %740 = vector.broadcast %739 : vector<1x256xi1> to vector<8x256xi1>
      %741 = vector.broadcast %cst_148 : f32 to vector<8x256xf32>
      %742 = arith.select %740, %738, %741 : vector<8x256xi1>, vector<8x256xf32>
      %743 = vector.broadcast %737 : f32 to vector<8x256xf32>
      %744 = arith.mulf %743, %742 : vector<8x256xf32>
      %745 = arith.addf %736, %744 : vector<8x256xf32>
      %746 = arith.andi %66, %41 : vector<1x256xi1>
      %c36 = arith.constant 36 : index
      %747 = memref.load %arg4[%c36] : memref<98xf32, #tpu.memory_space<smem>>
      %c226_i32 = arith.constant 226 : i32
      %748 = tpu.dynamic_rotate %17 by %c226_i32 dim 1 : vector<8x256xf32>, i32 -> vector<8x256xf32>
      %cst_149 = arith.constant 0.000000e+00 : f32
      %749 = vector.shape_cast %746 : vector<1x256xi1> to vector<1x256xi1>
      %750 = vector.broadcast %749 : vector<1x256xi1> to vector<8x256xi1>
      %751 = vector.broadcast %cst_149 : f32 to vector<8x256xf32>
      %752 = arith.select %750, %748, %751 : vector<8x256xi1>, vector<8x256xf32>
      %753 = vector.broadcast %747 : f32 to vector<8x256xf32>
      %754 = arith.mulf %753, %752 : vector<8x256xf32>
      %755 = arith.addf %745, %754 : vector<8x256xf32>
      %c85 = arith.constant 85 : index
      %756 = memref.load %arg4[%c85] : memref<98xf32, #tpu.memory_space<smem>>
      %c226_i32_150 = arith.constant 226 : i32
      %757 = tpu.dynamic_rotate %18 by %c226_i32_150 dim 1 : vector<8x256xf32>, i32 -> vector<8x256xf32>
      %cst_151 = arith.constant 0.000000e+00 : f32
      %758 = vector.shape_cast %746 : vector<1x256xi1> to vector<1x256xi1>
      %759 = vector.broadcast %758 : vector<1x256xi1> to vector<8x256xi1>
      %760 = vector.broadcast %cst_151 : f32 to vector<8x256xf32>
      %761 = arith.select %759, %757, %760 : vector<8x256xi1>, vector<8x256xf32>
      %762 = vector.broadcast %756 : f32 to vector<8x256xf32>
      %763 = arith.mulf %762, %761 : vector<8x256xf32>
      %764 = arith.addf %755, %763 : vector<8x256xf32>
      %765 = arith.andi %66, %51 : vector<1x256xi1>
      %c37 = arith.constant 37 : index
      %766 = memref.load %arg4[%c37] : memref<98xf32, #tpu.memory_space<smem>>
      %c225_i32 = arith.constant 225 : i32
      %767 = tpu.dynamic_rotate %17 by %c225_i32 dim 1 : vector<8x256xf32>, i32 -> vector<8x256xf32>
      %cst_152 = arith.constant 0.000000e+00 : f32
      %768 = vector.shape_cast %765 : vector<1x256xi1> to vector<1x256xi1>
      %769 = vector.broadcast %768 : vector<1x256xi1> to vector<8x256xi1>
      %770 = vector.broadcast %cst_152 : f32 to vector<8x256xf32>
      %771 = arith.select %769, %767, %770 : vector<8x256xi1>, vector<8x256xf32>
      %772 = vector.broadcast %766 : f32 to vector<8x256xf32>
      %773 = arith.mulf %772, %771 : vector<8x256xf32>
      %774 = arith.addf %764, %773 : vector<8x256xf32>
      %c86 = arith.constant 86 : index
      %775 = memref.load %arg4[%c86] : memref<98xf32, #tpu.memory_space<smem>>
      %c225_i32_153 = arith.constant 225 : i32
      %776 = tpu.dynamic_rotate %18 by %c225_i32_153 dim 1 : vector<8x256xf32>, i32 -> vector<8x256xf32>
      %cst_154 = arith.constant 0.000000e+00 : f32
      %777 = vector.shape_cast %765 : vector<1x256xi1> to vector<1x256xi1>
      %778 = vector.broadcast %777 : vector<1x256xi1> to vector<8x256xi1>
      %779 = vector.broadcast %cst_154 : f32 to vector<8x256xf32>
      %780 = arith.select %778, %776, %779 : vector<8x256xi1>, vector<8x256xf32>
      %781 = vector.broadcast %775 : f32 to vector<8x256xf32>
      %782 = arith.mulf %781, %780 : vector<8x256xf32>
      %783 = arith.addf %774, %782 : vector<8x256xf32>
      %c38 = arith.constant 38 : index
      %784 = memref.load %arg4[%c38] : memref<98xf32, #tpu.memory_space<smem>>
      %c224_i32 = arith.constant 224 : i32
      %785 = tpu.dynamic_rotate %17 by %c224_i32 dim 1 : vector<8x256xf32>, i32 -> vector<8x256xf32>
      %cst_155 = arith.constant 0.000000e+00 : f32
      %786 = vector.shape_cast %66 : vector<1x256xi1> to vector<1x256xi1>
      %787 = vector.broadcast %786 : vector<1x256xi1> to vector<8x256xi1>
      %788 = vector.broadcast %cst_155 : f32 to vector<8x256xf32>
      %789 = arith.select %787, %785, %788 : vector<8x256xi1>, vector<8x256xf32>
      %790 = vector.broadcast %784 : f32 to vector<8x256xf32>
      %791 = arith.mulf %790, %789 : vector<8x256xf32>
      %792 = arith.addf %783, %791 : vector<8x256xf32>
      %c87 = arith.constant 87 : index
      %793 = memref.load %arg4[%c87] : memref<98xf32, #tpu.memory_space<smem>>
      %c224_i32_156 = arith.constant 224 : i32
      %794 = tpu.dynamic_rotate %18 by %c224_i32_156 dim 1 : vector<8x256xf32>, i32 -> vector<8x256xf32>
      %cst_157 = arith.constant 0.000000e+00 : f32
      %795 = vector.shape_cast %66 : vector<1x256xi1> to vector<1x256xi1>
      %796 = vector.broadcast %795 : vector<1x256xi1> to vector<8x256xi1>
      %797 = vector.broadcast %cst_157 : f32 to vector<8x256xf32>
      %798 = arith.select %796, %794, %797 : vector<8x256xi1>, vector<8x256xf32>
      %799 = vector.broadcast %793 : f32 to vector<8x256xf32>
      %800 = arith.mulf %799, %798 : vector<8x256xf32>
      %801 = arith.addf %792, %800 : vector<8x256xf32>
      %802 = arith.andi %66, %61 : vector<1x256xi1>
      %c39 = arith.constant 39 : index
      %803 = memref.load %arg4[%c39] : memref<98xf32, #tpu.memory_space<smem>>
      %c223_i32 = arith.constant 223 : i32
      %804 = tpu.dynamic_rotate %17 by %c223_i32 dim 1 : vector<8x256xf32>, i32 -> vector<8x256xf32>
      %cst_158 = arith.constant 0.000000e+00 : f32
      %805 = vector.shape_cast %802 : vector<1x256xi1> to vector<1x256xi1>
      %806 = vector.broadcast %805 : vector<1x256xi1> to vector<8x256xi1>
      %807 = vector.broadcast %cst_158 : f32 to vector<8x256xf32>
      %808 = arith.select %806, %804, %807 : vector<8x256xi1>, vector<8x256xf32>
      %809 = vector.broadcast %803 : f32 to vector<8x256xf32>
      %810 = arith.mulf %809, %808 : vector<8x256xf32>
      %811 = arith.addf %801, %810 : vector<8x256xf32>
      %c88 = arith.constant 88 : index
      %812 = memref.load %arg4[%c88] : memref<98xf32, #tpu.memory_space<smem>>
      %c223_i32_159 = arith.constant 223 : i32
      %813 = tpu.dynamic_rotate %18 by %c223_i32_159 dim 1 : vector<8x256xf32>, i32 -> vector<8x256xf32>
      %cst_160 = arith.constant 0.000000e+00 : f32
      %814 = vector.shape_cast %802 : vector<1x256xi1> to vector<1x256xi1>
      %815 = vector.broadcast %814 : vector<1x256xi1> to vector<8x256xi1>
      %816 = vector.broadcast %cst_160 : f32 to vector<8x256xf32>
      %817 = arith.select %815, %813, %816 : vector<8x256xi1>, vector<8x256xf32>
      %818 = vector.broadcast %812 : f32 to vector<8x256xf32>
      %819 = arith.mulf %818, %817 : vector<8x256xf32>
      %820 = arith.addf %811, %819 : vector<8x256xf32>
      %821 = arith.andi %66, %71 : vector<1x256xi1>
      %c40 = arith.constant 40 : index
      %822 = memref.load %arg4[%c40] : memref<98xf32, #tpu.memory_space<smem>>
      %c222_i32 = arith.constant 222 : i32
      %823 = tpu.dynamic_rotate %17 by %c222_i32 dim 1 : vector<8x256xf32>, i32 -> vector<8x256xf32>
      %cst_161 = arith.constant 0.000000e+00 : f32
      %824 = vector.shape_cast %821 : vector<1x256xi1> to vector<1x256xi1>
      %825 = vector.broadcast %824 : vector<1x256xi1> to vector<8x256xi1>
      %826 = vector.broadcast %cst_161 : f32 to vector<8x256xf32>
      %827 = arith.select %825, %823, %826 : vector<8x256xi1>, vector<8x256xf32>
      %828 = vector.broadcast %822 : f32 to vector<8x256xf32>
      %829 = arith.mulf %828, %827 : vector<8x256xf32>
      %830 = arith.addf %820, %829 : vector<8x256xf32>
      %c89 = arith.constant 89 : index
      %831 = memref.load %arg4[%c89] : memref<98xf32, #tpu.memory_space<smem>>
      %c222_i32_162 = arith.constant 222 : i32
      %832 = tpu.dynamic_rotate %18 by %c222_i32_162 dim 1 : vector<8x256xf32>, i32 -> vector<8x256xf32>
      %cst_163 = arith.constant 0.000000e+00 : f32
      %833 = vector.shape_cast %821 : vector<1x256xi1> to vector<1x256xi1>
      %834 = vector.broadcast %833 : vector<1x256xi1> to vector<8x256xi1>
      %835 = vector.broadcast %cst_163 : f32 to vector<8x256xf32>
      %836 = arith.select %834, %832, %835 : vector<8x256xi1>, vector<8x256xf32>
      %837 = vector.broadcast %831 : f32 to vector<8x256xf32>
      %838 = arith.mulf %837, %836 : vector<8x256xf32>
      %839 = arith.addf %830, %838 : vector<8x256xf32>
      %840 = arith.andi %66, %81 : vector<1x256xi1>
      %c41 = arith.constant 41 : index
      %841 = memref.load %arg4[%c41] : memref<98xf32, #tpu.memory_space<smem>>
      %c221_i32 = arith.constant 221 : i32
      %842 = tpu.dynamic_rotate %17 by %c221_i32 dim 1 : vector<8x256xf32>, i32 -> vector<8x256xf32>
      %cst_164 = arith.constant 0.000000e+00 : f32
      %843 = vector.shape_cast %840 : vector<1x256xi1> to vector<1x256xi1>
      %844 = vector.broadcast %843 : vector<1x256xi1> to vector<8x256xi1>
      %845 = vector.broadcast %cst_164 : f32 to vector<8x256xf32>
      %846 = arith.select %844, %842, %845 : vector<8x256xi1>, vector<8x256xf32>
      %847 = vector.broadcast %841 : f32 to vector<8x256xf32>
      %848 = arith.mulf %847, %846 : vector<8x256xf32>
      %849 = arith.addf %839, %848 : vector<8x256xf32>
      %c90 = arith.constant 90 : index
      %850 = memref.load %arg4[%c90] : memref<98xf32, #tpu.memory_space<smem>>
      %c221_i32_165 = arith.constant 221 : i32
      %851 = tpu.dynamic_rotate %18 by %c221_i32_165 dim 1 : vector<8x256xf32>, i32 -> vector<8x256xf32>
      %cst_166 = arith.constant 0.000000e+00 : f32
      %852 = vector.shape_cast %840 : vector<1x256xi1> to vector<1x256xi1>
      %853 = vector.broadcast %852 : vector<1x256xi1> to vector<8x256xi1>
      %854 = vector.broadcast %cst_166 : f32 to vector<8x256xf32>
      %855 = arith.select %853, %851, %854 : vector<8x256xi1>, vector<8x256xf32>
      %856 = vector.broadcast %850 : f32 to vector<8x256xf32>
      %857 = arith.mulf %856, %855 : vector<8x256xf32>
      %858 = arith.addf %849, %857 : vector<8x256xf32>
      %859 = arith.andi %76, %31 : vector<1x256xi1>
      %c42 = arith.constant 42 : index
      %860 = memref.load %arg4[%c42] : memref<98xf32, #tpu.memory_space<smem>>
      %c211_i32 = arith.constant 211 : i32
      %861 = tpu.dynamic_rotate %17 by %c211_i32 dim 1 : vector<8x256xf32>, i32 -> vector<8x256xf32>
      %cst_167 = arith.constant 0.000000e+00 : f32
      %862 = vector.shape_cast %859 : vector<1x256xi1> to vector<1x256xi1>
      %863 = vector.broadcast %862 : vector<1x256xi1> to vector<8x256xi1>
      %864 = vector.broadcast %cst_167 : f32 to vector<8x256xf32>
      %865 = arith.select %863, %861, %864 : vector<8x256xi1>, vector<8x256xf32>
      %866 = vector.broadcast %860 : f32 to vector<8x256xf32>
      %867 = arith.mulf %866, %865 : vector<8x256xf32>
      %868 = arith.addf %858, %867 : vector<8x256xf32>
      %c91 = arith.constant 91 : index
      %869 = memref.load %arg4[%c91] : memref<98xf32, #tpu.memory_space<smem>>
      %c211_i32_168 = arith.constant 211 : i32
      %870 = tpu.dynamic_rotate %18 by %c211_i32_168 dim 1 : vector<8x256xf32>, i32 -> vector<8x256xf32>
      %cst_169 = arith.constant 0.000000e+00 : f32
      %871 = vector.shape_cast %859 : vector<1x256xi1> to vector<1x256xi1>
      %872 = vector.broadcast %871 : vector<1x256xi1> to vector<8x256xi1>
      %873 = vector.broadcast %cst_169 : f32 to vector<8x256xf32>
      %874 = arith.select %872, %870, %873 : vector<8x256xi1>, vector<8x256xf32>
      %875 = vector.broadcast %869 : f32 to vector<8x256xf32>
      %876 = arith.mulf %875, %874 : vector<8x256xf32>
      %877 = arith.addf %868, %876 : vector<8x256xf32>
      %878 = arith.andi %76, %41 : vector<1x256xi1>
      %c43 = arith.constant 43 : index
      %879 = memref.load %arg4[%c43] : memref<98xf32, #tpu.memory_space<smem>>
      %c210_i32 = arith.constant 210 : i32
      %880 = tpu.dynamic_rotate %17 by %c210_i32 dim 1 : vector<8x256xf32>, i32 -> vector<8x256xf32>
      %cst_170 = arith.constant 0.000000e+00 : f32
      %881 = vector.shape_cast %878 : vector<1x256xi1> to vector<1x256xi1>
      %882 = vector.broadcast %881 : vector<1x256xi1> to vector<8x256xi1>
      %883 = vector.broadcast %cst_170 : f32 to vector<8x256xf32>
      %884 = arith.select %882, %880, %883 : vector<8x256xi1>, vector<8x256xf32>
      %885 = vector.broadcast %879 : f32 to vector<8x256xf32>
      %886 = arith.mulf %885, %884 : vector<8x256xf32>
      %887 = arith.addf %877, %886 : vector<8x256xf32>
      %c92 = arith.constant 92 : index
      %888 = memref.load %arg4[%c92] : memref<98xf32, #tpu.memory_space<smem>>
      %c210_i32_171 = arith.constant 210 : i32
      %889 = tpu.dynamic_rotate %18 by %c210_i32_171 dim 1 : vector<8x256xf32>, i32 -> vector<8x256xf32>
      %cst_172 = arith.constant 0.000000e+00 : f32
      %890 = vector.shape_cast %878 : vector<1x256xi1> to vector<1x256xi1>
      %891 = vector.broadcast %890 : vector<1x256xi1> to vector<8x256xi1>
      %892 = vector.broadcast %cst_172 : f32 to vector<8x256xf32>
      %893 = arith.select %891, %889, %892 : vector<8x256xi1>, vector<8x256xf32>
      %894 = vector.broadcast %888 : f32 to vector<8x256xf32>
      %895 = arith.mulf %894, %893 : vector<8x256xf32>
      %896 = arith.addf %887, %895 : vector<8x256xf32>
      %897 = arith.andi %76, %51 : vector<1x256xi1>
      %c44 = arith.constant 44 : index
      %898 = memref.load %arg4[%c44] : memref<98xf32, #tpu.memory_space<smem>>
      %c209_i32 = arith.constant 209 : i32
      %899 = tpu.dynamic_rotate %17 by %c209_i32 dim 1 : vector<8x256xf32>, i32 -> vector<8x256xf32>
      %cst_173 = arith.constant 0.000000e+00 : f32
      %900 = vector.shape_cast %897 : vector<1x256xi1> to vector<1x256xi1>
      %901 = vector.broadcast %900 : vector<1x256xi1> to vector<8x256xi1>
      %902 = vector.broadcast %cst_173 : f32 to vector<8x256xf32>
      %903 = arith.select %901, %899, %902 : vector<8x256xi1>, vector<8x256xf32>
      %904 = vector.broadcast %898 : f32 to vector<8x256xf32>
      %905 = arith.mulf %904, %903 : vector<8x256xf32>
      %906 = arith.addf %896, %905 : vector<8x256xf32>
      %c93 = arith.constant 93 : index
      %907 = memref.load %arg4[%c93] : memref<98xf32, #tpu.memory_space<smem>>
      %c209_i32_174 = arith.constant 209 : i32
      %908 = tpu.dynamic_rotate %18 by %c209_i32_174 dim 1 : vector<8x256xf32>, i32 -> vector<8x256xf32>
      %cst_175 = arith.constant 0.000000e+00 : f32
      %909 = vector.shape_cast %897 : vector<1x256xi1> to vector<1x256xi1>
      %910 = vector.broadcast %909 : vector<1x256xi1> to vector<8x256xi1>
      %911 = vector.broadcast %cst_175 : f32 to vector<8x256xf32>
      %912 = arith.select %910, %908, %911 : vector<8x256xi1>, vector<8x256xf32>
      %913 = vector.broadcast %907 : f32 to vector<8x256xf32>
      %914 = arith.mulf %913, %912 : vector<8x256xf32>
      %915 = arith.addf %906, %914 : vector<8x256xf32>
      %c45 = arith.constant 45 : index
      %916 = memref.load %arg4[%c45] : memref<98xf32, #tpu.memory_space<smem>>
      %c208_i32 = arith.constant 208 : i32
      %917 = tpu.dynamic_rotate %17 by %c208_i32 dim 1 : vector<8x256xf32>, i32 -> vector<8x256xf32>
      %cst_176 = arith.constant 0.000000e+00 : f32
      %918 = vector.shape_cast %76 : vector<1x256xi1> to vector<1x256xi1>
      %919 = vector.broadcast %918 : vector<1x256xi1> to vector<8x256xi1>
      %920 = vector.broadcast %cst_176 : f32 to vector<8x256xf32>
      %921 = arith.select %919, %917, %920 : vector<8x256xi1>, vector<8x256xf32>
      %922 = vector.broadcast %916 : f32 to vector<8x256xf32>
      %923 = arith.mulf %922, %921 : vector<8x256xf32>
      %924 = arith.addf %915, %923 : vector<8x256xf32>
      %c94 = arith.constant 94 : index
      %925 = memref.load %arg4[%c94] : memref<98xf32, #tpu.memory_space<smem>>
      %c208_i32_177 = arith.constant 208 : i32
      %926 = tpu.dynamic_rotate %18 by %c208_i32_177 dim 1 : vector<8x256xf32>, i32 -> vector<8x256xf32>
      %cst_178 = arith.constant 0.000000e+00 : f32
      %927 = vector.shape_cast %76 : vector<1x256xi1> to vector<1x256xi1>
      %928 = vector.broadcast %927 : vector<1x256xi1> to vector<8x256xi1>
      %929 = vector.broadcast %cst_178 : f32 to vector<8x256xf32>
      %930 = arith.select %928, %926, %929 : vector<8x256xi1>, vector<8x256xf32>
      %931 = vector.broadcast %925 : f32 to vector<8x256xf32>
      %932 = arith.mulf %931, %930 : vector<8x256xf32>
      %933 = arith.addf %924, %932 : vector<8x256xf32>
      %934 = arith.andi %76, %61 : vector<1x256xi1>
      %c46 = arith.constant 46 : index
      %935 = memref.load %arg4[%c46] : memref<98xf32, #tpu.memory_space<smem>>
      %c207_i32 = arith.constant 207 : i32
      %936 = tpu.dynamic_rotate %17 by %c207_i32 dim 1 : vector<8x256xf32>, i32 -> vector<8x256xf32>
      %cst_179 = arith.constant 0.000000e+00 : f32
      %937 = vector.shape_cast %934 : vector<1x256xi1> to vector<1x256xi1>
      %938 = vector.broadcast %937 : vector<1x256xi1> to vector<8x256xi1>
      %939 = vector.broadcast %cst_179 : f32 to vector<8x256xf32>
      %940 = arith.select %938, %936, %939 : vector<8x256xi1>, vector<8x256xf32>
      %941 = vector.broadcast %935 : f32 to vector<8x256xf32>
      %942 = arith.mulf %941, %940 : vector<8x256xf32>
      %943 = arith.addf %933, %942 : vector<8x256xf32>
      %c95 = arith.constant 95 : index
      %944 = memref.load %arg4[%c95] : memref<98xf32, #tpu.memory_space<smem>>
      %c207_i32_180 = arith.constant 207 : i32
      %945 = tpu.dynamic_rotate %18 by %c207_i32_180 dim 1 : vector<8x256xf32>, i32 -> vector<8x256xf32>
      %cst_181 = arith.constant 0.000000e+00 : f32
      %946 = vector.shape_cast %934 : vector<1x256xi1> to vector<1x256xi1>
      %947 = vector.broadcast %946 : vector<1x256xi1> to vector<8x256xi1>
      %948 = vector.broadcast %cst_181 : f32 to vector<8x256xf32>
      %949 = arith.select %947, %945, %948 : vector<8x256xi1>, vector<8x256xf32>
      %950 = vector.broadcast %944 : f32 to vector<8x256xf32>
      %951 = arith.mulf %950, %949 : vector<8x256xf32>
      %952 = arith.addf %943, %951 : vector<8x256xf32>
      %953 = arith.andi %76, %71 : vector<1x256xi1>
      %c47 = arith.constant 47 : index
      %954 = memref.load %arg4[%c47] : memref<98xf32, #tpu.memory_space<smem>>
      %c206_i32 = arith.constant 206 : i32
      %955 = tpu.dynamic_rotate %17 by %c206_i32 dim 1 : vector<8x256xf32>, i32 -> vector<8x256xf32>
      %cst_182 = arith.constant 0.000000e+00 : f32
      %956 = vector.shape_cast %953 : vector<1x256xi1> to vector<1x256xi1>
      %957 = vector.broadcast %956 : vector<1x256xi1> to vector<8x256xi1>
      %958 = vector.broadcast %cst_182 : f32 to vector<8x256xf32>
      %959 = arith.select %957, %955, %958 : vector<8x256xi1>, vector<8x256xf32>
      %960 = vector.broadcast %954 : f32 to vector<8x256xf32>
      %961 = arith.mulf %960, %959 : vector<8x256xf32>
      %962 = arith.addf %952, %961 : vector<8x256xf32>
      %c96 = arith.constant 96 : index
      %963 = memref.load %arg4[%c96] : memref<98xf32, #tpu.memory_space<smem>>
      %c206_i32_183 = arith.constant 206 : i32
      %964 = tpu.dynamic_rotate %18 by %c206_i32_183 dim 1 : vector<8x256xf32>, i32 -> vector<8x256xf32>
      %cst_184 = arith.constant 0.000000e+00 : f32
      %965 = vector.shape_cast %953 : vector<1x256xi1> to vector<1x256xi1>
      %966 = vector.broadcast %965 : vector<1x256xi1> to vector<8x256xi1>
      %967 = vector.broadcast %cst_184 : f32 to vector<8x256xf32>
      %968 = arith.select %966, %964, %967 : vector<8x256xi1>, vector<8x256xf32>
      %969 = vector.broadcast %963 : f32 to vector<8x256xf32>
      %970 = arith.mulf %969, %968 : vector<8x256xf32>
      %971 = arith.addf %962, %970 : vector<8x256xf32>
      %972 = arith.andi %76, %81 : vector<1x256xi1>
      %c48 = arith.constant 48 : index
      %973 = memref.load %arg4[%c48] : memref<98xf32, #tpu.memory_space<smem>>
      %c205_i32 = arith.constant 205 : i32
      %974 = tpu.dynamic_rotate %17 by %c205_i32 dim 1 : vector<8x256xf32>, i32 -> vector<8x256xf32>
      %cst_185 = arith.constant 0.000000e+00 : f32
      %975 = vector.shape_cast %972 : vector<1x256xi1> to vector<1x256xi1>
      %976 = vector.broadcast %975 : vector<1x256xi1> to vector<8x256xi1>
      %977 = vector.broadcast %cst_185 : f32 to vector<8x256xf32>
      %978 = arith.select %976, %974, %977 : vector<8x256xi1>, vector<8x256xf32>
      %979 = vector.broadcast %973 : f32 to vector<8x256xf32>
      %980 = arith.mulf %979, %978 : vector<8x256xf32>
      %981 = arith.addf %971, %980 : vector<8x256xf32>
      %c97 = arith.constant 97 : index
      %982 = memref.load %arg4[%c97] : memref<98xf32, #tpu.memory_space<smem>>
      %c205_i32_186 = arith.constant 205 : i32
      %983 = tpu.dynamic_rotate %18 by %c205_i32_186 dim 1 : vector<8x256xf32>, i32 -> vector<8x256xf32>
      %cst_187 = arith.constant 0.000000e+00 : f32
      %984 = vector.shape_cast %972 : vector<1x256xi1> to vector<1x256xi1>
      %985 = vector.broadcast %984 : vector<1x256xi1> to vector<8x256xi1>
      %986 = vector.broadcast %cst_187 : f32 to vector<8x256xf32>
      %987 = arith.select %985, %983, %986 : vector<8x256xi1>, vector<8x256xf32>
      %988 = vector.broadcast %982 : f32 to vector<8x256xf32>
      %989 = arith.mulf %988, %987 : vector<8x256xf32>
      %990 = arith.addf %981, %989 : vector<8x256xf32>
      %991 = arith.negf %990 : vector<8x256xf32>
      %992 = math.exp %991 : vector<8x256xf32>
      %cst_188 = arith.constant 1.000000e+00 : f32
      %993 = vector.broadcast %cst_188 : f32 to vector<8x256xf32>
      %994 = arith.addf %993, %992 : vector<8x256xf32>
      %995 = arith.divf %993, %994 : vector<8x256xf32>
      %c0_189 = arith.constant 0 : index
      %c0_190 = arith.constant 0 : index
      %996 = vector.load %arg5[%c0_189, %c0_190] : memref<8x256xf32, #tpu.memory_space<vmem>>, vector<8x256xf32>
      tpu.vector_store %arg5[%c0_189, %c0_190], %995 {strides = array<i32>} : memref<8x256xf32, #tpu.memory_space<vmem>>, vector<8x256xf32>,
    } else {
    }
    return
  }
  func.func @transform_0(%arg0: i32, %arg1: i32) -> (i32, i32, i32) {
    %c0_i32 = arith.constant 0 : i32
    %c0_i32_0 = arith.constant 0 : i32
    return %arg0, %arg1, %c0_i32 : i32, i32, i32
  }
  func.func @transform_1(%arg0: i32, %arg1: i32) -> (i32, i32) {
    %c0_i32 = arith.constant 0 : i32
    %c0_i32_0 = arith.constant 0 : i32
    %c0_i32_1 = arith.constant 0 : i32
    return %c0_i32, %c0_i32_0 : i32, i32
  }
  func.func @transform_2(%arg0: i32, %arg1: i32) -> i32 {
    %c0_i32 = arith.constant 0 : i32
    %c0_i32_0 = arith.constant 0 : i32
    return %c0_i32 : i32
  }
  func.func @transform_3(%arg0: i32, %arg1: i32) -> (i32, i32) {
    %c0_i32 = arith.constant 0 : i32
    %c0_i32_0 = arith.constant 0 : i32
    return %arg0, %c0_i32 : i32, i32
  }
}

</mosaic_0001>

<llo_original>
// kernel: tpu_custom_call.1
$region0: #{tpu_custom_call.1}
  #allocation0 [shape = 'u32[]', space=smem, size = 0x4, offset = 0x4, fixed_abs, tag = 'smem constant byte address 0x4 - core index']
  #allocation1 [shape = 'u32[144,128]{1,0:T(1,128)}', space=vmem, size = 0x12000, scoped, tag = 'internal scratch']
  #allocation2 [shape = 'f32[8,256]{1,0:T(8,128)}', space=vmem, size = 0x2000, scoped, tag = 'scratch operand']
  #allocation3 [shape = 'f32[8,256]{1,0:T(8,128)}', space=vmem, size = 0x2000, scoped, tag = 'scratch operand']
  %s0 = inlined_call_operand.hbm [shape: f32[16,32,256], index: 0, kind: input, shape index: {}]
  %s1 = inlined_call_operand.hbm [shape: s32[2,256], index: 1, kind: input, shape index: {}]
  %s2 = inlined_call_operand.vmem [shape: f32[98], index: 2, kind: input, shape index: {}]
  %s3 = inlined_call_operand.hbm [shape: f32[16,256], index: 3, kind: output, shape index: {}]
  %s4 = sld [smem:[#allocation0]]
  $region65: #{tpu_custom_call.1} parent=0
    _
  %s6 = ssub.s32 1, %s4
  %s7 = scalar_select 0, %s6, %s4
  $region1: #{tpu_custom_call.1} parent=0
    #allocation4 [shape = 'u8[131072]{0}', space=vmem, size = 0x20000, scoped, tag = 'input window, operand 0']
    #allocation5 [shape = 's32[2]{0}', space=sflag, size = 0x8, scoped, tag = 'scoped memory for tpu_custom_call.1']
    #allocation6 [shape = 's32[2]{0}', space=sflag, size = 0x8, scoped, tag = 'scoped memory for tpu_custom_call.1']
    #allocation7 [shape = 's32[2]{0}', space=sflag, size = 0x8, scoped, tag = 'scoped memory for tpu_custom_call.1']
    #allocation8 [shape = 'u8[2048]{0}', space=vmem, size = 0x800, scoped, tag = 'input window, operand 1, single buffered']
    #allocation9 [shape = 's32[1]{0}', space=sflag, size = 0x4, scoped, tag = 'scoped memory for tpu_custom_call.1']
    #allocation10 [shape = 'u8[512]{0}', space=smem, size = 0x200, scoped, tag = 'input window, operand 2, single buffered']
    #allocation11 [shape = 'u8[16384]{0}', space=vmem, size = 0x4000, scoped, tag = 'output window, operand 0']
    %8 = vsyncpa [#allocation5], 0
    %s9 = scalar_lea.sflag [#allocation5], 1
    %10 = vsyncpa %s9, 0
    %11 = vsyncpa [#allocation9], 0
    %12 = vsyncpa [#allocation7], 0
    %13 = vsyncpa [#allocation6], 0
    %s14 = scalar_lea.sflag [#allocation6], 1
    %15 = vsyncpa %s14, 0
    loop: start=0, step=1, limit=10
    $region2: #{tpu_custom_call.1} parent=1 // loop_pre_header
      _
    $region3: #{tpu_custom_call.1} parent=1 // loop_header
      %s17 = sphi 0, %s21
      %p18 = scmp.ge.s32.totalorder %s17, 10
      %s24 = sphi 0, %s36
      %s25 = sphi 0, %s32
      %s26 = sphi 0, %s24
      %s27 = sphi 0, %s25
      %s28 = sphi 0, %s26
      %s29 = sphi 0, %s27
      %s41 = sphi 0, %s43
      %s44 = sphi 0, %s41
      %s45 = sphi 0, %s44
      %s61 = sphi 0, %s45
      %s65 = sphi 0, %s65
      %s67 = sphi 0, %s65
      %s68 = sphi 0, %s67
      %s82 = sphi 0, %s68
      %s86 = sphi 0, %s86
      %s88 = sphi 0, %s86
      %s89 = sphi 0, %s88
      %s103 = sphi 0, %s89
      %s109 = sphi 0, %s111
      %s112 = sphi 0, %s109
      %s113 = sphi 0, %s112
      %s129 = sphi 0, %s113
    $region4: #{tpu_custom_call.1} parent=1 // loop_header_branch
      %20 = sbr.rel (%p18) target = $region8
    $region5: #{tpu_custom_call.1} parent=1 // loop_body
      %s22 = ssub.s32 %s17, 1
      %s23 = ssub.s32 %s17, 2
      %s30 = sadd.s32 1, %s25
      %p31 = scmp.ge.s32.totalorder %s30, 4
      %s32 = scalar_select %p31, 0, %s30
      %s33 = sadd.s32 1, %s24
      %s34 = scalar_select %p31, %s33, %s24
      %p35 = scmp.ge.s32.totalorder %s34, 2
      %s36 = scalar_select %p35, 0, %s34
      %s37 = ssub.s32 %s24, %s36
      %s38 = ssub.s32 %s25, %s32
      %s39 = sor.u32 %s37, %s38
      %p40 = scmp.eq.s32.totalorder %s39, 0
      %s42 = sadd.s32 %s41, 1
      %s43 = scalar_select %p40, %s41, %s42
      %p46 = pneg %p40
      %p47 = scmp.eq.s32.totalorder %s17, 7
      %p48 = por %p46, %p47
      %p49 = scmp.ne.s32.totalorder %s41, %s44
      %p50 = scmp.eq.s32.totalorder %s17, 0
      %p51 = por %p49, %p50
      %p52 = scmp.ne.s32.totalorder %s41, %s44
      %p53 = scmp.eq.s32.totalorder %s22, 7
      %p54 = por %p52, %p53
      %p55 = scmp.ne.s32.totalorder %s44, %s45
      %p56 = scmp.eq.s32.totalorder %s22, 0
      %p57 = por %p55, %p56
      %p58 = scmp.ne.s32.totalorder %s44, %s45
      %p59 = scmp.eq.s32.totalorder %s23, 7
      %p60 = por %p58, %p59
      %p62 = scmp.ne.s32.totalorder %s45, %s61
      %p63 = scmp.eq.s32.totalorder %s23, 0
      %p64 = por %p62, %p63
      %s66 = sadd.s32 %s65, 1
      %p69 = scmp.eq.s32.totalorder %s17, 7
      %p70 = scmp.ne.s32.totalorder %s65, %s67
      %p71 = scmp.eq.s32.totalorder %s17, 0
      %p72 = por %p70, %p71
      %p73 = scmp.ne.s32.totalorder %s65, %s67
      %p74 = scmp.eq.s32.totalorder %s22, 7
      %p75 = por %p73, %p74
      %p76 = scmp.ne.s32.totalorder %s67, %s68
      %p77 = scmp.eq.s32.totalorder %s22, 0
      %p78 = por %p76, %p77
      %p79 = scmp.ne.s32.totalorder %s67, %s68
      %p80 = scmp.eq.s32.totalorder %s23, 7
      %p81 = por %p79, %p80
      %p83 = scmp.ne.s32.totalorder %s68, %s82
      %p84 = scmp.eq.s32.totalorder %s23, 0
      %p85 = por %p83, %p84
      %s87 = sadd.s32 %s86, 1
      %p90 = scmp.eq.s32.totalorder %s17, 7
      %p91 = scmp.ne.s32.totalorder %s86, %s88
      %p92 = scmp.eq.s32.totalorder %s17, 0
      %p93 = por %p91, %p92
      %p94 = scmp.ne.s32.totalorder %s86, %s88
      %p95 = scmp.eq.s32.totalorder %s22, 7
      %p96 = por %p94, %p95
      %p97 = scmp.ne.s32.totalorder %s88, %s89
      %p98 = scmp.eq.s32.totalorder %s22, 0
      %p99 = por %p97, %p98
      %p100 = scmp.ne.s32.totalorder %s88, %s89
      %p101 = scmp.eq.s32.totalorder %s23, 7
      %p102 = por %p100, %p101
      %p104 = scmp.ne.s32.totalorder %s89, %s103
      %p105 = scmp.eq.s32.totalorder %s23, 0
      %p106 = por %p104, %p105
      %s107 = ssub.s32 %s24, %s36
      %p108 = scmp.eq.s32.totalorder %s107, 0
      %s110 = sadd.s32 %s109, 1
      %s111 = scalar_select %p108, %s109, %s110
      %p114 = pneg %p108
      %p115 = scmp.eq.s32.totalorder %s17, 7
      %p116 = por %p114, %p115
      %p117 = scmp.ne.s32.totalorder %s109, %s112
      %p118 = scmp.eq.s32.totalorder %s17, 0
      %p119 = por %p117, %p118
      %p120 = scmp.ne.s32.totalorder %s109, %s112
      %p121 = scmp.eq.s32.totalorder %s22, 7
      %p122 = por %p120, %p121
      %p123 = scmp.ne.s32.totalorder %s112, %s113
      %p124 = scmp.eq.s32.totalorder %s22, 0
      %p125 = por %p123, %p124
      %p126 = scmp.ne.s32.totalorder %s112, %s113
      %p127 = scmp.eq.s32.totalorder %s23, 7
      %p128 = por %p126, %p127
      %p130 = scmp.ne.s32.totalorder %s113, %s129
      %p131 = scmp.eq.s32.totalorder %s23, 0
      %p132 = por %p130, %p131
      %p133 = scmp.le.s32.totalorder 1, %s17
      %p134 = scmp.lt.s32.totalorder %s17, 9
      %p135 = pnand %p133, %p134
      %p136 = pneg %p135
      // Predicated region
      $region9: #{tpu_custom_call.1} parent=5 // pred_check
        _
      $region10: #{tpu_custom_call.1} parent=5 // pred_check_branch
        %138 = sbr.rel (%p135) target = $region12
      $region11: #{tpu_custom_call.1} parent=5 // pred_region
        %s139 = ssub.s32 %s17, 1
        // Predicated region
        $region13: #{tpu_custom_call.1} parent=11 // pred_check
          %p140 = pneg %p78
        $region14: #{tpu_custom_call.1} parent=11 // pred_check_branch
          %142 = sbr.rel (%p140) target = $region16
        $region15: #{tpu_custom_call.1} parent=11 // pred_region
          %s144 = ssub.s32 64, 64
          %145 = vsyncadd [#allocation9], %s144
          %s147 = sshll.u32 [#allocation8], 4
          %s148 = int_to_ptr.vmem [resolvable:$true] %s147
          %150 = dma.hbm_to_vmem [thread:$0]  %s1, 64, %s148, [#allocation9]
        $region16: #{tpu_custom_call.1} parent=11 // pred_fallthru
          _
        // Predicated region
        $region17: #{tpu_custom_call.1} parent=11 // pred_check
          %p151 = pneg %p99
        $region18: #{tpu_custom_call.1} parent=11 // pred_check_branch
          %153 = sbr.rel (%p151) target = $region20
        $region19: #{tpu_custom_call.1} parent=11 // pred_region
          %s155 = ssub.s32 16, 16
          %156 = vsyncadd [#allocation7], %s155
          %s158 = sshll.u32 %s2, 4
          %s159 = int_to_ptr.vmem [resolvable:$true] %s158
          %161 = dma.vmem_to_smem %s159, 16, [#allocation10], [#allocation7]
        $region20: #{tpu_custom_call.1} parent=11 // pred_fallthru
          _
      $region12: #{tpu_custom_call.1} parent=5 // pred_fallthru
        _
      %p162 = scmp.lt.s32.totalorder %s17, 8
      // Predicated region
      $region21: #{tpu_custom_call.1} parent=5 // pred_check
        %p163 = pneg %p162
      $region22: #{tpu_custom_call.1} parent=5 // pred_check_branch
        %165 = sbr.rel (%p163) target = $region24
      $region23: #{tpu_custom_call.1} parent=5 // pred_region
        // Predicated region
        $region25: #{tpu_custom_call.1} parent=23 // pred_check
          %p166 = pneg %p51
        $region26: #{tpu_custom_call.1} parent=23 // pred_check_branch
          %168 = sbr.rel (%p166) target = $region28
        $region27: #{tpu_custom_call.1} parent=23 // pred_region
          %s169 = sand.u32 %s41, 1
          %s170 = scalar_lea.sflag [#allocation5], %s169
          %s171 = sand.u32 %s41, 1
          %s172 = smul.addr %s171, 128
          %s173 = scalar_lea.vmem [#allocation4], %s172
          %s174 = smul.u32 8, %s24
          %s176 = ssub.s32 2048, 2048
          %177 = vsyncadd %s170, %s176
          %s178 = smul.addr %s25, 2
          %s179 = smul.addr %s174, 8
          %s180 = sadd.s32 %s178, %s179
          %s181 = smul.addr %s180, 128
          %s182 = scalar_lea.hbm %s0, %s181
          %s183 = sshll.u32 %s173, 4
          %s184 = int_to_ptr.vmem [resolvable:$true] %s183
          %189 = dma.hbm_to_vmem [thread:$0]  %s182, 2048, %s184, %s170, 1024, 256, 16
        $region28: #{tpu_custom_call.1} parent=23 // pred_fallthru
          _
      $region24: #{tpu_custom_call.1} parent=5 // pred_fallthru
        _
      %p190 = scmp.le.s32.totalorder 1, %s17
      %p191 = scmp.lt.s32.totalorder %s17, 9
      %p192 = pnand %p190, %p191
      %p193 = pneg %p192
      // Predicated region
      $region29: #{tpu_custom_call.1} parent=5 // pred_check
        _
      $region30: #{tpu_custom_call.1} parent=5 // pred_check_branch
        %195 = sbr.rel (%p192) target = $region32
      $region31: #{tpu_custom_call.1} parent=5 // pred_region
        %s196 = ssub.s32 %s17, 1
        %s197 = sand.u32 %s44, 1
        %s198 = scalar_lea.sflag [#allocation5], %s197
        %s199 = sand.u32 %s44, 1
        %s200 = smul.addr %s199, 128
        %s201 = scalar_lea.vmem [#allocation4], %s200
        // Predicated region
        $region33: #{tpu_custom_call.1} parent=31 // pred_check
          %p202 = pneg %p57
        $region34: #{tpu_custom_call.1} parent=31 // pred_check_branch
          %204 = sbr.rel (%p202) target = $region36
        $region35: #{tpu_custom_call.1} parent=31 // pred_region
          %205 = dma.done %s198, 2048
        $region36: #{tpu_custom_call.1} parent=31 // pred_fallthru
          _
        // Predicated region
        $region37: #{tpu_custom_call.1} parent=31 // pred_check
          %p206 = pneg %p78
        $region38: #{tpu_custom_call.1} parent=31 // pred_check_branch
          %208 = sbr.rel (%p206) target = $region40
        $region39: #{tpu_custom_call.1} parent=31 // pred_region
          %209 = dma.done [#allocation9], 64
        $region40: #{tpu_custom_call.1} parent=31 // pred_fallthru
          _
        // Predicated region
        $region41: #{tpu_custom_call.1} parent=31 // pred_check
          %p210 = pneg %p99
        $region42: #{tpu_custom_call.1} parent=31 // pred_check_branch
          %212 = sbr.rel (%p210) target = $region44
        $region43: #{tpu_custom_call.1} parent=31 // pred_region
          %213 = dma.done [#allocation7], 16
        $region44: #{tpu_custom_call.1} parent=31 // pred_fallthru
          _
        %214 = sfence
        %s215 = sand.u32 %s44, 1
        %s216 = scalar_lea.sflag [#allocation5], %s215
        %s217 = sand.u32 %s44, 1
        %s218 = smul.addr %s217, 128
        %s219 = scalar_lea.vmem [#allocation4], %s218
        %p220 = pneg %p57
        %p221 = pneg %p54
        %p222 = pneg %p78
        %p223 = pneg %p75
        %p224 = pneg %p99
        %p225 = pneg %p96
        %p226 = pneg %p125
        %p227 = pneg %p122
        %s228 = sand.u32 %s112, 1
        %s229 = scalar_lea.sflag [#allocation6], %s228
        %s230 = sand.u32 %s112, 1
        %s231 = smul.addr %s230, 16
        %s232 = scalar_lea.vmem [#allocation11], %s231
        %s233 = smul.u32 8, %s26
        %p234 = scmp.eq.s32.totalorder %s27, 0
        // Predicated region
        $region45: #{tpu_custom_call.1} parent=31 // pred_check
          %p235 = pneg %p234
        $region46: #{tpu_custom_call.1} parent=31 // pred_check_branch
          %237 = sbr.rel (%p235) target = $region48
        $region47: #{tpu_custom_call.1} parent=31 // pred_region
          %238 = vst [vmem:[#allocation2] sm:$0xff] 0.0
          %239 = vst [vmem:[#allocation2 + $0x8] sm:$0xff] 0.0
          %240 = vst [vmem:[#allocation3] sm:$0xff] -inf
          %241 = vst [vmem:[#allocation3 + $0x8] sm:$0xff] -inf
        $region48: #{tpu_custom_call.1} parent=31 // pred_fallthru
          _
        %v242 = vld [vmem:[%s201] sm:$0xff]
        %v243 = vld [vmem:[%s201 + $0x8] sm:$0xff]
        %v244 = vld [vmem:[%s201 + $0x10] sm:$0xff]
        %v245 = vld [vmem:[%s201 + $0x18] sm:$0xff]
        %v246 = vld [vmem:[%s201 + $0x20] sm:$0xff]
        %v247 = vld [vmem:[%s201 + $0x28] sm:$0xff]
        %v248 = vld [vmem:[%s201 + $0x30] sm:$0xff]
        %v249 = vld [vmem:[%s201 + $0x38] sm:$0xff]
        %v250 = vld [vmem:[%s201 + $0x40] sm:$0xff]
        %v251 = vld [vmem:[%s201 + $0x48] sm:$0xff]
        %v252 = vld [vmem:[%s201 + $0x50] sm:$0xff]
        %v253 = vld [vmem:[%s201 + $0x58] sm:$0xff]
        %v254 = vld [vmem:[%s201 + $0x60] sm:$0xff]
        %v255 = vld [vmem:[%s201 + $0x68] sm:$0xff]
        %v256 = vld [vmem:[%s201 + $0x70] sm:$0xff]
        %v257 = vld [vmem:[%s201 + $0x78] sm:$0xff]
        %v258 = vld [vmem:[#allocation2] sm:$0xff]
        %v259 = vld [vmem:[#allocation2 + $0x8] sm:$0xff]
        %v260 = vrot.slane %v242, 4
        %v261 = vadd.f32 %v242, %v260
        %v262 = vrot.slane %v261, 2
        %v263 = vadd.f32 %v261, %v262
        %v264 = vrot.slane %v263, 1
        %v265 = vadd.f32 %v263, %v264
        %v266 = vrot.slane %v243, 4
        %v267 = vadd.f32 %v243, %v266
        %v268 = vrot.slane %v267, 2
        %v269 = vadd.f32 %v267, %v268
        %v270 = vrot.slane %v269, 1
        %v271 = vadd.f32 %v269, %v270
        %v272 = vrot.slane %v244, 4
        %v273 = vadd.f32 %v244, %v272
        %v274 = vrot.slane %v273, 2
        %v275 = vadd.f32 %v273, %v274
        %v276 = vrot.slane %v275, 1
        %v277 = vadd.f32 %v275, %v276
        %v278 = vrot.slane %v245, 4
        %v279 = vadd.f32 %v245, %v278
        %v280 = vrot.slane %v279, 2
        %v281 = vadd.f32 %v279, %v280
        %v282 = vrot.slane %v281, 1
        %v283 = vadd.f32 %v281, %v282
        %v284 = vrot.slane %v246, 4
        %v285 = vadd.f32 %v246, %v284
        %v286 = vrot.slane %v285, 2
        %v287 = vadd.f32 %v285, %v286
        %v288 = vrot.slane %v287, 1
        %v289 = vadd.f32 %v287, %v288
        %v290 = vrot.slane %v247, 4
        %v291 = vadd.f32 %v247, %v290
        %v292 = vrot.slane %v291, 2
        %v293 = vadd.f32 %v291, %v292
        %v294 = vrot.slane %v293, 1
        %v295 = vadd.f32 %v293, %v294
        %v296 = vrot.slane %v248, 4
        %v297 = vadd.f32 %v248, %v296
        %v298 = vrot.slane %v297, 2
        %v299 = vadd.f32 %v297, %v298
        %v300 = vrot.slane %v299, 1
        %v301 = vadd.f32 %v299, %v300
        %v302 = vrot.slane %v249, 4
        %v303 = vadd.f32 %v249, %v302
        %v304 = vrot.slane %v303, 2
        %v305 = vadd.f32 %v303, %v304
        %v306 = vrot.slane %v305, 1
        %v307 = vadd.f32 %v305, %v306
        %v308 = vrot.slane %v250, 4
        %v309 = vadd.f32 %v250, %v308
        %v310 = vrot.slane %v309, 2
        %v311 = vadd.f32 %v309, %v310
        %v312 = vrot.slane %v311, 1
        %v313 = vadd.f32 %v311, %v312
        %v314 = vrot.slane %v251, 4
        %v315 = vadd.f32 %v251, %v314
        %v316 = vrot.slane %v315, 2
        %v317 = vadd.f32 %v315, %v316
        %v318 = vrot.slane %v317, 1
        %v319 = vadd.f32 %v317, %v318
        %v320 = vrot.slane %v252, 4
        %v321 = vadd.f32 %v252, %v320
        %v322 = vrot.slane %v321, 2
        %v323 = vadd.f32 %v321, %v322
        %v324 = vrot.slane %v323, 1
        %v325 = vadd.f32 %v323, %v324
        %v326 = vrot.slane %v253, 4
        %v327 = vadd.f32 %v253, %v326
        %v328 = vrot.slane %v327, 2
        %v329 = vadd.f32 %v327, %v328
        %v330 = vrot.slane %v329, 1
        %v331 = vadd.f32 %v329, %v330
        %v332 = vrot.slane %v254, 4
        %v333 = vadd.f32 %v254, %v332
        %v334 = vrot.slane %v333, 2
        %v335 = vadd.f32 %v333, %v334
        %v336 = vrot.slane %v335, 1
        %v337 = vadd.f32 %v335, %v336
        %v338 = vrot.slane %v255, 4
        %v339 = vadd.f32 %v255, %v338
        %v340 = vrot.slane %v339, 2
        %v341 = vadd.f32 %v339, %v340
        %v342 = vrot.slane %v341, 1
        %v343 = vadd.f32 %v341, %v342
        %v344 = vrot.slane %v256, 4
        %v345 = vadd.f32 %v256, %v344
        %v346 = vrot.slane %v345, 2
        %v347 = vadd.f32 %v345, %v346
        %v348 = vrot.slane %v347, 1
        %v349 = vadd.f32 %v347, %v348
        %v350 = vrot.slane %v257, 4
        %v351 = vadd.f32 %v257, %v350
        %v352 = vrot.slane %v351, 2
        %v353 = vadd.f32 %v351, %v352
        %v354 = vrot.slane %v353, 1
        %v355 = vadd.f32 %v353, %v354
        %vm372 = vcmask 1041409
        %v373 = vsel %vm372, %v277, %v265
        %vm374 = vcmask 1042434
        %v375 = vsel %vm374, %v289, %v373
        %vm376 = vcmask 1043459
        %v377 = vsel %vm376, %v301, %v375
        %vm378 = vcmask 1044484
        %v379 = vsel %vm378, %v313, %v377
        %vm380 = vcmask 1045509
        %v381 = vsel %vm380, %v325, %v379
        %vm382 = vcmask 1046534
        %v383 = vsel %vm382, %v337, %v381
        %vm384 = vcmask 1047559
        %v385 = vsel %vm384, %v349, %v383
        %v386 = vsel %vm372, %v283, %v271
        %v387 = vsel %vm374, %v295, %v386
        %v388 = vsel %vm376, %v307, %v387
        %v389 = vsel %vm378, %v319, %v388
        %v390 = vsel %vm380, %v331, %v389
        %v391 = vsel %vm382, %v343, %v390
        %v392 = vsel %vm384, %v355, %v391
        %v395 = vadd.f32 %v258, %v385
        %v396 = vadd.f32 %v259, %v392
        %397 = vst [vmem:[#allocation2] sm:$0xff] %v395
        %398 = vst [vmem:[#allocation2 + $0x8] sm:$0xff] %v396
        %v399 = vld [vmem:[#allocation3] sm:$0xff]
        %v400 = vld [vmem:[#allocation3 + $0x8] sm:$0xff]
        %v401 = vrot.slane %v242, 4
        %v402 = vmax.f32 %v242, %v401
        %v403 = vrot.slane %v402, 2
        %v404 = vmax.f32 %v402, %v403
        %v405 = vrot.slane %v404, 1
        %v406 = vmax.f32 %v404, %v405
        %v407 = vrot.slane %v243, 4
        %v408 = vmax.f32 %v243, %v407
        %v409 = vrot.slane %v408, 2
        %v410 = vmax.f32 %v408, %v409
        %v411 = vrot.slane %v410, 1
        %v412 = vmax.f32 %v410, %v411
        %v413 = vrot.slane %v244, 4
        %v414 = vmax.f32 %v244, %v413
        %v415 = vrot.slane %v414, 2
        %v416 = vmax.f32 %v414, %v415
        %v417 = vrot.slane %v416, 1
        %v418 = vmax.f32 %v416, %v417
        %v419 = vrot.slane %v245, 4
        %v420 = vmax.f32 %v245, %v419
        %v421 = vrot.slane %v420, 2
        %v422 = vmax.f32 %v420, %v421
        %v423 = vrot.slane %v422, 1
        %v424 = vmax.f32 %v422, %v423
        %v425 = vrot.slane %v246, 4
        %v426 = vmax.f32 %v246, %v425
        %v427 = vrot.slane %v426, 2
        %v428 = vmax.f32 %v426, %v427
        %v429 = vrot.slane %v428, 1
        %v430 = vmax.f32 %v428, %v429
        %v431 = vrot.slane %v247, 4
        %v432 = vmax.f32 %v247, %v431
        %v433 = vrot.slane %v432, 2
        %v434 = vmax.f32 %v432, %v433
        %v435 = vrot.slane %v434, 1
        %v436 = vmax.f32 %v434, %v435
        %v437 = vrot.slane %v248, 4
        %v438 = vmax.f32 %v248, %v437
        %v439 = vrot.slane %v438, 2
        %v440 = vmax.f32 %v438, %v439
        %v441 = vrot.slane %v440, 1
        %v442 = vmax.f32 %v440, %v441
        %v443 = vrot.slane %v249, 4
        %v444 = vmax.f32 %v249, %v443
        %v445 = vrot.slane %v444, 2
        %v446 = vmax.f32 %v444, %v445
        %v447 = vrot.slane %v446, 1
        %v448 = vmax.f32 %v446, %v447
        %v449 = vrot.slane %v250, 4
        %v450 = vmax.f32 %v250, %v449
        %v451 = vrot.slane %v450, 2
        %v452 = vmax.f32 %v450, %v451
        %v453 = vrot.slane %v452, 1
        %v454 = vmax.f32 %v452, %v453
        %v455 = vrot.slane %v251, 4
        %v456 = vmax.f32 %v251, %v455
        %v457 = vrot.slane %v456, 2
        %v458 = vmax.f32 %v456, %v457
        %v459 = vrot.slane %v458, 1
        %v460 = vmax.f32 %v458, %v459
        %v461 = vrot.slane %v252, 4
        %v462 = vmax.f32 %v252, %v461
        %v463 = vrot.slane %v462, 2
        %v464 = vmax.f32 %v462, %v463
        %v465 = vrot.slane %v464, 1
        %v466 = vmax.f32 %v464, %v465
        %v467 = vrot.slane %v253, 4
        %v468 = vmax.f32 %v253, %v467
        %v469 = vrot.slane %v468, 2
        %v470 = vmax.f32 %v468, %v469
        %v471 = vrot.slane %v470, 1
        %v472 = vmax.f32 %v470, %v471
        %v473 = vrot.slane %v254, 4
        %v474 = vmax.f32 %v254, %v473
        %v475 = vrot.slane %v474, 2
        %v476 = vmax.f32 %v474, %v475
        %v477 = vrot.slane %v476, 1
        %v478 = vmax.f32 %v476, %v477
        %v479 = vrot.slane %v255, 4
        %v480 = vmax.f32 %v255, %v479
        %v481 = vrot.slane %v480, 2
        %v482 = vmax.f32 %v480, %v481
        %v483 = vrot.slane %v482, 1
        %v484 = vmax.f32 %v482, %v483
        %v485 = vrot.slane %v256, 4
        %v486 = vmax.f32 %v256, %v485
        %v487 = vrot.slane %v486, 2
        %v488 = vmax.f32 %v486, %v487
        %v489 = vrot.slane %v488, 1
        %v490 = vmax.f32 %v488, %v489
        %v491 = vrot.slane %v257, 4
        %v492 = vmax.f32 %v257, %v491
        %v493 = vrot.slane %v492, 2
        %v494 = vmax.f32 %v492, %v493
        %v495 = vrot.slane %v494, 1
        %v496 = vmax.f32 %v494, %v495
        %v513 = vsel %vm372, %v418, %v406
        %v514 = vsel %vm374, %v430, %v513
        %v515 = vsel %vm376, %v442, %v514
        %v516 = vsel %vm378, %v454, %v515
        %v517 = vsel %vm380, %v466, %v516
        %v518 = vsel %vm382, %v478, %v517
        %v519 = vsel %vm384, %v490, %v518
        %v520 = vsel %vm372, %v424, %v412
        %v521 = vsel %vm374, %v436, %v520
        %v522 = vsel %vm376, %v448, %v521
        %v523 = vsel %vm378, %v460, %v522
        %v524 = vsel %vm380, %v472, %v523
        %v525 = vsel %vm382, %v484, %v524
        %v526 = vsel %vm384, %v496, %v525
        %v529 = vmax.f32 %v399, %v519
        %v530 = vmax.f32 %v400, %v526
        %531 = vst [vmem:[#allocation3] sm:$0xff] %v529
        %532 = vst [vmem:[#allocation3 + $0x8] sm:$0xff] %v530
        %p533 = scmp.eq.s32.totalorder %s27, 3
        // Predicated region
        $region49: #{tpu_custom_call.1} parent=31 // pred_check
          %p534 = pneg %p533
        $region50: #{tpu_custom_call.1} parent=31 // pred_check_branch
          %536 = sbr.rel (%p534) target = $region52
        $region51: #{tpu_custom_call.1} parent=31 // pred_region
          %v537 = vld [vmem:[#allocation2] sm:$0xff]
          %v538 = vld [vmem:[#allocation2 + $0x8] sm:$0xff]
          %v539 = vmul.f32 %v537, 0.03125
          %v540 = vmul.f32 %v538, 0.03125
          %v541 = vld [vmem:[#allocation3] sm:$0xff]
          %v542 = vld [vmem:[#allocation3 + $0x8] sm:$0xff]
          %v543 = vld [vmem:[#allocation8] sm:$0xf]
          %vm544 = vcmp.ge.s32.totalorder %v543, 3
          %vm545 = vcmp.lt.s32.totalorder %v543, 19
          %vm546 = vmand %vm544, %vm545
          %vm547 = vcmp.ge.s32.totalorder %v543, 2
          %vm548 = vcmp.lt.s32.totalorder %v543, 18
          %vm549 = vmand %vm547, %vm548
          %vm550 = vcmp.ge.s32.totalorder %v543, 1
          %vm551 = vcmp.lt.s32.totalorder %v543, 17
          %vm552 = vmand %vm550, %vm551
          %vm553 = vcmp.ge.s32.totalorder %v543, 4294967295
          %vm554 = vcmp.lt.s32.totalorder %v543, 15
          %vm555 = vmand %vm553, %vm554
          %vm556 = vcmp.ge.s32.totalorder %v543, 4294967294
          %vm557 = vcmp.lt.s32.totalorder %v543, 14
          %vm558 = vmand %vm556, %vm557
          %vm559 = vcmp.ge.s32.totalorder %v543, 4294967293
          %vm560 = vcmp.lt.s32.totalorder %v543, 13
          %vm561 = vmand %vm559, %vm560
          %v562 = vsel %vm546, 1, 0
          %v563 = vrot.slane %v562, 7
          %v564 = vrot.slane %v563, 2
          %vm565 = vcmp.ne.s32.totalorder %v564, 0
          %vm566 = vmand %vm546, %vm565
          %s567 = sld [smem:[#allocation10]]
          %568 = vrot.lane.b32.xlu0 %v539, 51
          %v569 = vpop.permute.xlu0 %568
          %570 = vrot.lane.b32.xlu0 %v540, 51
          %v571 = vpop.permute.xlu0 %570
          %v572 = vlaneseq
          %v573 = vand.u32 %v572, 127
          %vm574 = vcmp.lt.s32.totalorder %v573, 51
          %v575 = vsel %vm574, %v569, %v571
          %v576 = vsel %vm574, %v571, %v569
          %v577 = vsel %vm566, 1, 0
          %v578 = vlaneseq
          %v579 = vshrl.u32 %v578, 7
          %v580 = vsub.s32 0, %v579
          %v581 = vrot.slane %v577, %v580
          %v582 = vlaneseq
          %v583 = vshrl.u32 %v582, 7
          %v584 = vsub.s32 2, %v583
          %v585 = vrot.slane %v577, %v584
          %v586 = vlaneseq
          %v587 = vshrl.u32 %v586, 7
          %v588 = vsub.s32 0, %v587
          %v589 = vrot.slane %v581, %v588
          %v590 = vlaneseq
          %v591 = vshrl.u32 %v590, 7
          %v592 = vsub.s32 0, %v591
          %v593 = vrot.slane %v585, %v592
          %vm594 = vcmp.eq.s32.totalorder %v589, 1
          %vm595 = vcmp.eq.s32.totalorder %v593, 1
          %v596 = vsel %vm594, %v576, 0.0
          %v597 = vsel %vm595, %v575, 0.0
          %v598 = vstv %s567
          %v599 = vmul.f32 %v598, %v596
          %v600 = vmul.f32 %v598, %v597
          %v601 = vadd.f32 %v599, 0.0
          %v602 = vadd.f32 %v600, 0.0
          %s603 = sld [smem:[#allocation10 + $0x31]]
          %604 = vrot.lane.b32.xlu0 %v541, 51
          %v605 = vpop.permute.xlu0 %604
          %606 = vrot.lane.b32.xlu0 %v542, 51
          %v607 = vpop.permute.xlu0 %606
          %v608 = vsel %vm574, %v605, %v607
          %v609 = vsel %vm574, %v607, %v605
          %v610 = vsel %vm594, %v609, 0.0
          %v611 = vsel %vm595, %v608, 0.0
          %v612 = vstv %s603
          %v613 = vmul.f32 %v612, %v610
          %v614 = vmul.f32 %v612, %v611
          %v615 = vadd.f32 %v601, %v613
          %v616 = vadd.f32 %v602, %v614
          %v617 = vsel %vm549, 1, 0
          %v618 = vrot.slane %v617, 7
          %v619 = vrot.slane %v618, 2
          %vm620 = vcmp.ne.s32.totalorder %v619, 0
          %vm621 = vmand %vm546, %vm620
          %s622 = sld [smem:[#allocation10 + $0x1]]
          %623 = vrot.lane.b32.xlu0 %v539, 50
          %v624 = vpop.permute.xlu0 %623
          %625 = vrot.lane.b32.xlu0 %v540, 50
          %v626 = vpop.permute.xlu0 %625
          %vm627 = vcmp.lt.s32.totalorder %v573, 50
          %v628 = vsel %vm627, %v624, %v626
          %v629 = vsel %vm627, %v626, %v624
          %v630 = vsel %vm621, 1, 0
          %v631 = vlaneseq
          %v632 = vshrl.u32 %v631, 7
          %v633 = vsub.s32 0, %v632
          %v634 = vrot.slane %v630, %v633
          %v635 = vlaneseq
          %v636 = vshrl.u32 %v635, 7
          %v637 = vsub.s32 2, %v636
          %v638 = vrot.slane %v630, %v637
          %v639 = vlaneseq
          %v640 = vshrl.u32 %v639, 7
          %v641 = vsub.s32 0, %v640
          %v642 = vrot.slane %v634, %v641
          %v643 = vlaneseq
          %v644 = vshrl.u32 %v643, 7
          %v645 = vsub.s32 0, %v644
          %v646 = vrot.slane %v638, %v645
          %vm647 = vcmp.eq.s32.totalorder %v642, 1
          %vm648 = vcmp.eq.s32.totalorder %v646, 1
          %v649 = vsel %vm647, %v629, 0.0
          %v650 = vsel %vm648, %v628, 0.0
          %v651 = vstv %s622
          %v652 = vmul.f32 %v651, %v649
          %v653 = vmul.f32 %v651, %v650
          %v654 = vadd.f32 %v615, %v652
          %v655 = vadd.f32 %v616, %v653
          %s656 = sld [smem:[#allocation10 + $0x32]]
          %657 = vrot.lane.b32.xlu0 %v541, 50
          %v658 = vpop.permute.xlu0 %657
          %659 = vrot.lane.b32.xlu0 %v542, 50
          %v660 = vpop.permute.xlu0 %659
          %v661 = vsel %vm627, %v658, %v660
          %v662 = vsel %vm627, %v660, %v658
          %v663 = vsel %vm647, %v662, 0.0
          %v664 = vsel %vm648, %v661, 0.0
          %v665 = vstv %s656
          %v666 = vmul.f32 %v665, %v663
          %v667 = vmul.f32 %v665, %v664
          %v668 = vadd.f32 %v654, %v666
          %v669 = vadd.f32 %v655, %v667
          %v670 = vsel %vm552, 1, 0
          %v671 = vrot.slane %v670, 7
          %v672 = vrot.slane %v671, 2
          %vm673 = vcmp.ne.s32.totalorder %v672, 0
          %vm674 = vmand %vm546, %vm673
          %s675 = sld [smem:[#allocation10 + $0x2]]
          %676 = vrot.lane.b32.xlu0 %v539, 49
          %v677 = vpop.permute.xlu0 %676
          %678 = vrot.lane.b32.xlu0 %v540, 49
          %v679 = vpop.permute.xlu0 %678
          %vm680 = vcmp.lt.s32.totalorder %v573, 49
          %v681 = vsel %vm680, %v677, %v679
          %v682 = vsel %vm680, %v679, %v677
          %v683 = vsel %vm674, 1, 0
          %v684 = vlaneseq
          %v685 = vshrl.u32 %v684, 7
          %v686 = vsub.s32 0, %v685
          %v687 = vrot.slane %v683, %v686
          %v688 = vlaneseq
          %v689 = vshrl.u32 %v688, 7
          %v690 = vsub.s32 2, %v689
          %v691 = vrot.slane %v683, %v690
          %v692 = vlaneseq
          %v693 = vshrl.u32 %v692, 7
          %v694 = vsub.s32 0, %v693
          %v695 = vrot.slane %v687, %v694
          %v696 = vlaneseq
          %v697 = vshrl.u32 %v696, 7
          %v698 = vsub.s32 0, %v697
          %v699 = vrot.slane %v691, %v698
          %vm700 = vcmp.eq.s32.totalorder %v695, 1
          %vm701 = vcmp.eq.s32.totalorder %v699, 1
          %v702 = vsel %vm700, %v682, 0.0
          %v703 = vsel %vm701, %v681, 0.0
          %v704 = vstv %s675
          %v705 = vmul.f32 %v704, %v702
          %v706 = vmul.f32 %v704, %v703
          %v707 = vadd.f32 %v668, %v705
          %v708 = vadd.f32 %v669, %v706
          %s709 = sld [smem:[#allocation10 + $0x33]]
          %710 = vrot.lane.b32.xlu0 %v541, 49
          %v711 = vpop.permute.xlu0 %710
          %712 = vrot.lane.b32.xlu0 %v542, 49
          %v713 = vpop.permute.xlu0 %712
          %v714 = vsel %vm680, %v711, %v713
          %v715 = vsel %vm680, %v713, %v711
          %v716 = vsel %vm700, %v715, 0.0
          %v717 = vsel %vm701, %v714, 0.0
          %v718 = vstv %s709
          %v719 = vmul.f32 %v718, %v716
          %v720 = vmul.f32 %v718, %v717
          %v721 = vadd.f32 %v707, %v719
          %v722 = vadd.f32 %v708, %v720
          %s723 = sld [smem:[#allocation10 + $0x3]]
          %724 = vrot.lane.b32.xlu0 %v539, 48
          %v725 = vpop.permute.xlu0 %724
          %726 = vrot.lane.b32.xlu0 %v540, 48
          %v727 = vpop.permute.xlu0 %726
          %vm728 = vcmp.lt.s32.totalorder %v573, 48
          %v729 = vsel %vm728, %v725, %v727
          %v730 = vsel %vm728, %v727, %v725
          %v731 = vlaneseq
          %v732 = vshrl.u32 %v731, 7
          %v733 = vsub.s32 0, %v732
          %v734 = vrot.slane %v562, %v733
          %v735 = vlaneseq
          %v736 = vshrl.u32 %v735, 7
          %v737 = vsub.s32 2, %v736
          %v738 = vrot.slane %v562, %v737
          %v739 = vlaneseq
          %v740 = vshrl.u32 %v739, 7
          %v741 = vsub.s32 0, %v740
          %v742 = vrot.slane %v734, %v741
          %v743 = vlaneseq
          %v744 = vshrl.u32 %v743, 7
          %v745 = vsub.s32 0, %v744
          %v746 = vrot.slane %v738, %v745
          %vm747 = vcmp.eq.s32.totalorder %v742, 1
          %vm748 = vcmp.eq.s32.totalorder %v746, 1
          %v749 = vsel %vm747, %v730, 0.0
          %v750 = vsel %vm748, %v729, 0.0
          %v751 = vstv %s723
          %v752 = vmul.f32 %v751, %v749
          %v753 = vmul.f32 %v751, %v750
          %v754 = vadd.f32 %v721, %v752
          %v755 = vadd.f32 %v722, %v753
          %s756 = sld [smem:[#allocation10 + $0x34]]
          %757 = vrot.lane.b32.xlu0 %v541, 48
          %v758 = vpop.permute.xlu0 %757
          %759 = vrot.lane.b32.xlu0 %v542, 48
          %v760 = vpop.permute.xlu0 %759
          %v761 = vsel %vm728, %v758, %v760
          %v762 = vsel %vm728, %v760, %v758
          %v763 = vsel %vm747, %v762, 0.0
          %v764 = vsel %vm748, %v761, 0.0
          %v765 = vstv %s756
          %v766 = vmul.f32 %v765, %v763
          %v767 = vmul.f32 %v765, %v764
          %v768 = vadd.f32 %v754, %v766
          %v769 = vadd.f32 %v755, %v767
          %v770 = vsel %vm555, 1, 0
          %v771 = vrot.slane %v770, 7
          %v772 = vrot.slane %v771, 2
          %vm773 = vcmp.ne.s32.totalorder %v772, 0
          %vm774 = vmand %vm546, %vm773
          %s775 = sld [smem:[#allocation10 + $0x4]]
          %776 = vrot.lane.b32.xlu0 %v539, 47
          %v777 = vpop.permute.xlu0 %776
          %778 = vrot.lane.b32.xlu0 %v540, 47
          %v779 = vpop.permute.xlu0 %778
          %vm780 = vcmp.lt.s32.totalorder %v573, 47
          %v781 = vsel %vm780, %v777, %v779
          %v782 = vsel %vm780, %v779, %v777
          %v783 = vsel %vm774, 1, 0
          %v784 = vlaneseq
          %v785 = vshrl.u32 %v784, 7
          %v786 = vsub.s32 0, %v785
          %v787 = vrot.slane %v783, %v786
          %v788 = vlaneseq
          %v789 = vshrl.u32 %v788, 7
          %v790 = vsub.s32 2, %v789
          %v791 = vrot.slane %v783, %v790
          %v792 = vlaneseq
          %v793 = vshrl.u32 %v792, 7
          %v794 = vsub.s32 0, %v793
          %v795 = vrot.slane %v787, %v794
          %v796 = vlaneseq
          %v797 = vshrl.u32 %v796, 7
          %v798 = vsub.s32 0, %v797
          %v799 = vrot.slane %v791, %v798
          %vm800 = vcmp.eq.s32.totalorder %v795, 1
          %vm801 = vcmp.eq.s32.totalorder %v799, 1
          %v802 = vsel %vm800, %v782, 0.0
          %v803 = vsel %vm801, %v781, 0.0
          %v804 = vstv %s775
          %v805 = vmul.f32 %v804, %v802
          %v806 = vmul.f32 %v804, %v803
          %v807 = vadd.f32 %v768, %v805
          %v808 = vadd.f32 %v769, %v806
          %s809 = sld [smem:[#allocation10 + $0x35]]
          %810 = vrot.lane.b32.xlu0 %v541, 47
          %v811 = vpop.permute.xlu0 %810
          %812 = vrot.lane.b32.xlu0 %v542, 47
          %v813 = vpop.permute.xlu0 %812
          %v814 = vsel %vm780, %v811, %v813
          %v815 = vsel %vm780, %v813, %v811
          %v816 = vsel %vm800, %v815, 0.0
          %v817 = vsel %vm801, %v814, 0.0
          %v818 = vstv %s809
          %v819 = vmul.f32 %v818, %v816
          %v820 = vmul.f32 %v818, %v817
          %v821 = vadd.f32 %v807, %v819
          %v822 = vadd.f32 %v808, %v820
          %v823 = vsel %vm558, 1, 0
          %v824 = vrot.slane %v823, 7
          %v825 = vrot.slane %v824, 2
          %vm826 = vcmp.ne.s32.totalorder %v825, 0
          %vm827 = vmand %vm546, %vm826
          %s828 = sld [smem:[#allocation10 + $0x5]]
          %829 = vrot.lane.b32.xlu0 %v539, 46
          %v830 = vpop.permute.xlu0 %829
          %831 = vrot.lane.b32.xlu0 %v540, 46
          %v832 = vpop.permute.xlu0 %831
          %vm833 = vcmp.lt.s32.totalorder %v573, 46
          %v834 = vsel %vm833, %v830, %v832
          %v835 = vsel %vm833, %v832, %v830
          %v836 = vsel %vm827, 1, 0
          %v837 = vlaneseq
          %v838 = vshrl.u32 %v837, 7
          %v839 = vsub.s32 0, %v838
          %v840 = vrot.slane %v836, %v839
          %v841 = vlaneseq
          %v842 = vshrl.u32 %v841, 7
          %v843 = vsub.s32 2, %v842
          %v844 = vrot.slane %v836, %v843
          %v845 = vlaneseq
          %v846 = vshrl.u32 %v845, 7
          %v847 = vsub.s32 0, %v846
          %v848 = vrot.slane %v840, %v847
          %v849 = vlaneseq
          %v850 = vshrl.u32 %v849, 7
          %v851 = vsub.s32 0, %v850
          %v852 = vrot.slane %v844, %v851
          %vm853 = vcmp.eq.s32.totalorder %v848, 1
          %vm854 = vcmp.eq.s32.totalorder %v852, 1
          %v855 = vsel %vm853, %v835, 0.0
          %v856 = vsel %vm854, %v834, 0.0
          %v857 = vstv %s828
          %v858 = vmul.f32 %v857, %v855
          %v859 = vmul.f32 %v857, %v856
          %v860 = vadd.f32 %v821, %v858
          %v861 = vadd.f32 %v822, %v859
          %s862 = sld [smem:[#allocation10 + $0x36]]
          %863 = vrot.lane.b32.xlu0 %v541, 46
          %v864 = vpop.permute.xlu0 %863
          %865 = vrot.lane.b32.xlu0 %v542, 46
          %v866 = vpop.permute.xlu0 %865
          %v867 = vsel %vm833, %v864, %v866
          %v868 = vsel %vm833, %v866, %v864
          %v869 = vsel %vm853, %v868, 0.0
          %v870 = vsel %vm854, %v867, 0.0
          %v871 = vstv %s862
          %v872 = vmul.f32 %v871, %v869
          %v873 = vmul.f32 %v871, %v870
          %v874 = vadd.f32 %v860, %v872
          %v875 = vadd.f32 %v861, %v873
          %v876 = vsel %vm561, 1, 0
          %v877 = vrot.slane %v876, 7
          %v878 = vrot.slane %v877, 2
          %vm879 = vcmp.ne.s32.totalorder %v878, 0
          %vm880 = vmand %vm546, %vm879
          %s881 = sld [smem:[#allocation10 + $0x6]]
          %882 = vrot.lane.b32.xlu0 %v539, 45
          %v883 = vpop.permute.xlu0 %882
          %884 = vrot.lane.b32.xlu0 %v540, 45
          %v885 = vpop.permute.xlu0 %884
          %vm886 = vcmp.lt.s32.totalorder %v573, 45
          %v887 = vsel %vm886, %v883, %v885
          %v888 = vsel %vm886, %v885, %v883
          %v889 = vsel %vm880, 1, 0
          %v890 = vlaneseq
          %v891 = vshrl.u32 %v890, 7
          %v892 = vsub.s32 0, %v891
          %v893 = vrot.slane %v889, %v892
          %v894 = vlaneseq
          %v895 = vshrl.u32 %v894, 7
          %v896 = vsub.s32 2, %v895
          %v897 = vrot.slane %v889, %v896
          %v898 = vlaneseq
          %v899 = vshrl.u32 %v898, 7
          %v900 = vsub.s32 0, %v899
          %v901 = vrot.slane %v893, %v900
          %v902 = vlaneseq
          %v903 = vshrl.u32 %v902, 7
          %v904 = vsub.s32 0, %v903
          %v905 = vrot.slane %v897, %v904
          %vm906 = vcmp.eq.s32.totalorder %v901, 1
          %vm907 = vcmp.eq.s32.totalorder %v905, 1
          %v908 = vsel %vm906, %v888, 0.0
          %v909 = vsel %vm907, %v887, 0.0
          %v910 = vstv %s881
          %v911 = vmul.f32 %v910, %v908
          %v912 = vmul.f32 %v910, %v909
          %v913 = vadd.f32 %v874, %v911
          %v914 = vadd.f32 %v875, %v912
          %s915 = sld [smem:[#allocation10 + $0x37]]
          %916 = vrot.lane.b32.xlu0 %v541, 45
          %v917 = vpop.permute.xlu0 %916
          %918 = vrot.lane.b32.xlu0 %v542, 45
          %v919 = vpop.permute.xlu0 %918
          %v920 = vsel %vm886, %v917, %v919
          %v921 = vsel %vm886, %v919, %v917
          %v922 = vsel %vm906, %v921, 0.0
          %v923 = vsel %vm907, %v920, 0.0
          %v924 = vstv %s915
          %v925 = vmul.f32 %v924, %v922
          %v926 = vmul.f32 %v924, %v923
          %v927 = vadd.f32 %v913, %v925
          %v928 = vadd.f32 %v914, %v926
          %vm929 = vmand %vm549, %vm565
          %s930 = sld [smem:[#allocation10 + $0x7]]
          %931 = vrot.lane.b32.xlu0 %v539, 35
          %v932 = vpop.permute.xlu0 %931
          %933 = vrot.lane.b32.xlu0 %v540, 35
          %v934 = vpop.permute.xlu0 %933
          %vm935 = vcmp.lt.s32.totalorder %v573, 35
          %v936 = vsel %vm935, %v932, %v934
          %v937 = vsel %vm935, %v934, %v932
          %v938 = vsel %vm929, 1, 0
          %v939 = vlaneseq
          %v940 = vshrl.u32 %v939, 7
          %v941 = vsub.s32 0, %v940
          %v942 = vrot.slane %v938, %v941
          %v943 = vlaneseq
          %v944 = vshrl.u32 %v943, 7
          %v945 = vsub.s32 2, %v944
          %v946 = vrot.slane %v938, %v945
          %v947 = vlaneseq
          %v948 = vshrl.u32 %v947, 7
          %v949 = vsub.s32 0, %v948
          %v950 = vrot.slane %v942, %v949
          %v951 = vlaneseq
          %v952 = vshrl.u32 %v951, 7
          %v953 = vsub.s32 0, %v952
          %v954 = vrot.slane %v946, %v953
          %vm955 = vcmp.eq.s32.totalorder %v950, 1
          %vm956 = vcmp.eq.s32.totalorder %v954, 1
          %v957 = vsel %vm955, %v937, 0.0
          %v958 = vsel %vm956, %v936, 0.0
          %v959 = vstv %s930
          %v960 = vmul.f32 %v959, %v957
          %v961 = vmul.f32 %v959, %v958
          %v962 = vadd.f32 %v927, %v960
          %v963 = vadd.f32 %v928, %v961
          %s964 = sld [smem:[#allocation10 + $0x38]]
          %965 = vrot.lane.b32.xlu0 %v541, 35
          %v966 = vpop.permute.xlu0 %965
          %967 = vrot.lane.b32.xlu0 %v542, 35
          %v968 = vpop.permute.xlu0 %967
          %v969 = vsel %vm935, %v966, %v968
          %v970 = vsel %vm935, %v968, %v966
          %v971 = vsel %vm955, %v970, 0.0
          %v972 = vsel %vm956, %v969, 0.0
          %v973 = vstv %s964
          %v974 = vmul.f32 %v973, %v971
          %v975 = vmul.f32 %v973, %v972
          %v976 = vadd.f32 %v962, %v974
          %v977 = vadd.f32 %v963, %v975
          %vm978 = vmand %vm549, %vm620
          %s979 = sld [smem:[#allocation10 + $0x8]]
          %980 = vrot.lane.b32.xlu0 %v539, 34
          %v981 = vpop.permute.xlu0 %980
          %982 = vrot.lane.b32.xlu0 %v540, 34
          %v983 = vpop.permute.xlu0 %982
          %vm984 = vcmp.lt.s32.totalorder %v573, 34
          %v985 = vsel %vm984, %v981, %v983
          %v986 = vsel %vm984, %v983, %v981
          %v987 = vsel %vm978, 1, 0
          %v988 = vlaneseq
          %v989 = vshrl.u32 %v988, 7
          %v990 = vsub.s32 0, %v989
          %v991 = vrot.slane %v987, %v990
          %v992 = vlaneseq
          %v993 = vshrl.u32 %v992, 7
          %v994 = vsub.s32 2, %v993
          %v995 = vrot.slane %v987, %v994
          %v996 = vlaneseq
          %v997 = vshrl.u32 %v996, 7
          %v998 = vsub.s32 0, %v997
          %v999 = vrot.slane %v991, %v998
          %v1000 = vlaneseq
          %v1001 = vshrl.u32 %v1000, 7
          %v1002 = vsub.s32 0, %v1001
          %v1003 = vrot.slane %v995, %v1002
          %vm1004 = vcmp.eq.s32.totalorder %v999, 1
          %vm1005 = vcmp.eq.s32.totalorder %v1003, 1
          %v1006 = vsel %vm1004, %v986, 0.0
          %v1007 = vsel %vm1005, %v985, 0.0
          %v1008 = vstv %s979
          %v1009 = vmul.f32 %v1008, %v1006
          %v1010 = vmul.f32 %v1008, %v1007
          %v1011 = vadd.f32 %v976, %v1009
          %v1012 = vadd.f32 %v977, %v1010
          %s1013 = sld [smem:[#allocation10 + $0x39]]
          %1014 = vrot.lane.b32.xlu0 %v541, 34
          %v1015 = vpop.permute.xlu0 %1014
          %1016 = vrot.lane.b32.xlu0 %v542, 34
          %v1017 = vpop.permute.xlu0 %1016
          %v1018 = vsel %vm984, %v1015, %v1017
          %v1019 = vsel %vm984, %v1017, %v1015
          %v1020 = vsel %vm1004, %v1019, 0.0
          %v1021 = vsel %vm1005, %v1018, 0.0
          %v1022 = vstv %s1013
          %v1023 = vmul.f32 %v1022, %v1020
          %v1024 = vmul.f32 %v1022, %v1021
          %v1025 = vadd.f32 %v1011, %v1023
          %v1026 = vadd.f32 %v1012, %v1024
          %vm1027 = vmand %vm549, %vm673
          %s1028 = sld [smem:[#allocation10 + $0x9]]
          %1029 = vrot.lane.b32.xlu0 %v539, 33
          %v1030 = vpop.permute.xlu0 %1029
          %1031 = vrot.lane.b32.xlu0 %v540, 33
          %v1032 = vpop.permute.xlu0 %1031
          %vm1033 = vcmp.lt.s32.totalorder %v573, 33
          %v1034 = vsel %vm1033, %v1030, %v1032
          %v1035 = vsel %vm1033, %v1032, %v1030
          %v1036 = vsel %vm1027, 1, 0
          %v1037 = vlaneseq
          %v1038 = vshrl.u32 %v1037, 7
          %v1039 = vsub.s32 0, %v1038
          %v1040 = vrot.slane %v1036, %v1039
          %v1041 = vlaneseq
          %v1042 = vshrl.u32 %v1041, 7
          %v1043 = vsub.s32 2, %v1042
          %v1044 = vrot.slane %v1036, %v1043
          %v1045 = vlaneseq
          %v1046 = vshrl.u32 %v1045, 7
          %v1047 = vsub.s32 0, %v1046
          %v1048 = vrot.slane %v1040, %v1047
          %v1049 = vlaneseq
          %v1050 = vshrl.u32 %v1049, 7
          %v1051 = vsub.s32 0, %v1050
          %v1052 = vrot.slane %v1044, %v1051
          %vm1053 = vcmp.eq.s32.totalorder %v1048, 1
          %vm1054 = vcmp.eq.s32.totalorder %v1052, 1
          %v1055 = vsel %vm1053, %v1035, 0.0
          %v1056 = vsel %vm1054, %v1034, 0.0
          %v1057 = vstv %s1028
          %v1058 = vmul.f32 %v1057, %v1055
          %v1059 = vmul.f32 %v1057, %v1056
          %v1060 = vadd.f32 %v1025, %v1058
          %v1061 = vadd.f32 %v1026, %v1059
          %s1062 = sld [smem:[#allocation10 + $0x3a]]
          %1063 = vrot.lane.b32.xlu0 %v541, 33
          %v1064 = vpop.permute.xlu0 %1063
          %1065 = vrot.lane.b32.xlu0 %v542, 33
          %v1066 = vpop.permute.xlu0 %1065
          %v1067 = vsel %vm1033, %v1064, %v1066
          %v1068 = vsel %vm1033, %v1066, %v1064
          %v1069 = vsel %vm1053, %v1068, 0.0
          %v1070 = vsel %vm1054, %v1067, 0.0
          %v1071 = vstv %s1062
          %v1072 = vmul.f32 %v1071, %v1069
          %v1073 = vmul.f32 %v1071, %v1070
          %v1074 = vadd.f32 %v1060, %v1072
          %v1075 = vadd.f32 %v1061, %v1073
          %s1076 = sld [smem:[#allocation10 + $0xa]]
          %1077 = vrot.lane.b32.xlu0 %v539, 32
          %v1078 = vpop.permute.xlu0 %1077
          %1079 = vrot.lane.b32.xlu0 %v540, 32
          %v1080 = vpop.permute.xlu0 %1079
          %vm1081 = vcmp.lt.s32.totalorder %v573, 32
          %v1082 = vsel %vm1081, %v1078, %v1080
          %v1083 = vsel %vm1081, %v1080, %v1078
          %v1084 = vlaneseq
          %v1085 = vshrl.u32 %v1084, 7
          %v1086 = vsub.s32 0, %v1085
          %v1087 = vrot.slane %v617, %v1086
          %v1088 = vlaneseq
          %v1089 = vshrl.u32 %v1088, 7
          %v1090 = vsub.s32 2, %v1089
          %v1091 = vrot.slane %v617, %v1090
          %v1092 = vlaneseq
          %v1093 = vshrl.u32 %v1092, 7
          %v1094 = vsub.s32 0, %v1093
          %v1095 = vrot.slane %v1087, %v1094
          %v1096 = vlaneseq
          %v1097 = vshrl.u32 %v1096, 7
          %v1098 = vsub.s32 0, %v1097
          %v1099 = vrot.slane %v1091, %v1098
          %vm1100 = vcmp.eq.s32.totalorder %v1095, 1
          %vm1101 = vcmp.eq.s32.totalorder %v1099, 1
          %v1102 = vsel %vm1100, %v1083, 0.0
          %v1103 = vsel %vm1101, %v1082, 0.0
          %v1104 = vstv %s1076
          %v1105 = vmul.f32 %v1104, %v1102
          %v1106 = vmul.f32 %v1104, %v1103
          %v1107 = vadd.f32 %v1074, %v1105
          %v1108 = vadd.f32 %v1075, %v1106
          %s1109 = sld [smem:[#allocation10 + $0x3b]]
          %1110 = vrot.lane.b32.xlu0 %v541, 32
          %v1111 = vpop.permute.xlu0 %1110
          %1112 = vrot.lane.b32.xlu0 %v542, 32
          %v1113 = vpop.permute.xlu0 %1112
          %v1114 = vsel %vm1081, %v1111, %v1113
          %v1115 = vsel %vm1081, %v1113, %v1111
          %v1116 = vsel %vm1100, %v1115, 0.0
          %v1117 = vsel %vm1101, %v1114, 0.0
          %v1118 = vstv %s1109
          %v1119 = vmul.f32 %v1118, %v1116
          %v1120 = vmul.f32 %v1118, %v1117
          %v1121 = vadd.f32 %v1107, %v1119
          %v1122 = vadd.f32 %v1108, %v1120
          %vm1123 = vmand %vm549, %vm773
          %s1124 = sld [smem:[#allocation10 + $0xb]]
          %1125 = vrot.lane.b32.xlu0 %v539, 31
          %v1126 = vpop.permute.xlu0 %1125
          %1127 = vrot.lane.b32.xlu0 %v540, 31
          %v1128 = vpop.permute.xlu0 %1127
          %vm1129 = vcmp.lt.s32.totalorder %v573, 31
          %v1130 = vsel %vm1129, %v1126, %v1128
          %v1131 = vsel %vm1129, %v1128, %v1126
          %v1132 = vsel %vm1123, 1, 0
          %v1133 = vlaneseq
          %v1134 = vshrl.u32 %v1133, 7
          %v1135 = vsub.s32 0, %v1134
          %v1136 = vrot.slane %v1132, %v1135
          %v1137 = vlaneseq
          %v1138 = vshrl.u32 %v1137, 7
          %v1139 = vsub.s32 2, %v1138
          %v1140 = vrot.slane %v1132, %v1139
          %v1141 = vlaneseq
          %v1142 = vshrl.u32 %v1141, 7
          %v1143 = vsub.s32 0, %v1142
          %v1144 = vrot.slane %v1136, %v1143
          %v1145 = vlaneseq
          %v1146 = vshrl.u32 %v1145, 7
          %v1147 = vsub.s32 0, %v1146
          %v1148 = vrot.slane %v1140, %v1147
          %vm1149 = vcmp.eq.s32.totalorder %v1144, 1
          %vm1150 = vcmp.eq.s32.totalorder %v1148, 1
          %v1151 = vsel %vm1149, %v1131, 0.0
          %v1152 = vsel %vm1150, %v1130, 0.0
          %v1153 = vstv %s1124
          %v1154 = vmul.f32 %v1153, %v1151
          %v1155 = vmul.f32 %v1153, %v1152
          %v1156 = vadd.f32 %v1121, %v1154
          %v1157 = vadd.f32 %v1122, %v1155
          %s1158 = sld [smem:[#allocation10 + $0x3c]]
          %1159 = vrot.lane.b32.xlu0 %v541, 31
          %v1160 = vpop.permute.xlu0 %1159
          %1161 = vrot.lane.b32.xlu0 %v542, 31
          %v1162 = vpop.permute.xlu0 %1161
          %v1163 = vsel %vm1129, %v1160, %v1162
          %v1164 = vsel %vm1129, %v1162, %v1160
          %v1165 = vsel %vm1149, %v1164, 0.0
          %v1166 = vsel %vm1150, %v1163, 0.0
          %v1167 = vstv %s1158
          %v1168 = vmul.f32 %v1167, %v1165
          %v1169 = vmul.f32 %v1167, %v1166
          %v1170 = vadd.f32 %v1156, %v1168
          %v1171 = vadd.f32 %v1157, %v1169
          %vm1172 = vmand %vm549, %vm826
          %s1173 = sld [smem:[#allocation10 + $0xc]]
          %1174 = vrot.lane.b32.xlu0 %v539, 30
          %v1175 = vpop.permute.xlu0 %1174
          %1176 = vrot.lane.b32.xlu0 %v540, 30
          %v1177 = vpop.permute.xlu0 %1176
          %vm1178 = vcmp.lt.s32.totalorder %v573, 30
          %v1179 = vsel %vm1178, %v1175, %v1177
          %v1180 = vsel %vm1178, %v1177, %v1175
          %v1181 = vsel %vm1172, 1, 0
          %v1182 = vlaneseq
          %v1183 = vshrl.u32 %v1182, 7
          %v1184 = vsub.s32 0, %v1183
          %v1185 = vrot.slane %v1181, %v1184
          %v1186 = vlaneseq
          %v1187 = vshrl.u32 %v1186, 7
          %v1188 = vsub.s32 2, %v1187
          %v1189 = vrot.slane %v1181, %v1188
          %v1190 = vlaneseq
          %v1191 = vshrl.u32 %v1190, 7
          %v1192 = vsub.s32 0, %v1191
          %v1193 = vrot.slane %v1185, %v1192
          %v1194 = vlaneseq
          %v1195 = vshrl.u32 %v1194, 7
          %v1196 = vsub.s32 0, %v1195
          %v1197 = vrot.slane %v1189, %v1196
          %vm1198 = vcmp.eq.s32.totalorder %v1193, 1
          %vm1199 = vcmp.eq.s32.totalorder %v1197, 1
          %v1200 = vsel %vm1198, %v1180, 0.0
          %v1201 = vsel %vm1199, %v1179, 0.0
          %v1202 = vstv %s1173
          %v1203 = vmul.f32 %v1202, %v1200
          %v1204 = vmul.f32 %v1202, %v1201
          %v1205 = vadd.f32 %v1170, %v1203
          %v1206 = vadd.f32 %v1171, %v1204
          %s1207 = sld [smem:[#allocation10 + $0x3d]]
          %1208 = vrot.lane.b32.xlu0 %v541, 30
          %v1209 = vpop.permute.xlu0 %1208
          %1210 = vrot.lane.b32.xlu0 %v542, 30
          %v1211 = vpop.permute.xlu0 %1210
          %v1212 = vsel %vm1178, %v1209, %v1211
          %v1213 = vsel %vm1178, %v1211, %v1209
          %v1214 = vsel %vm1198, %v1213, 0.0
          %v1215 = vsel %vm1199, %v1212, 0.0
          %v1216 = vstv %s1207
          %v1217 = vmul.f32 %v1216, %v1214
          %v1218 = vmul.f32 %v1216, %v1215
          %v1219 = vadd.f32 %v1205, %v1217
          %v1220 = vadd.f32 %v1206, %v1218
          %vm1221 = vmand %vm549, %vm879
          %s1222 = sld [smem:[#allocation10 + $0xd]]
          %1223 = vrot.lane.b32.xlu0 %v539, 29
          %v1224 = vpop.permute.xlu0 %1223
          %1225 = vrot.lane.b32.xlu0 %v540, 29
          %v1226 = vpop.permute.xlu0 %1225
          %vm1227 = vcmp.lt.s32.totalorder %v573, 29
          %v1228 = vsel %vm1227, %v1224, %v1226
          %v1229 = vsel %vm1227, %v1226, %v1224
          %v1230 = vsel %vm1221, 1, 0
          %v1231 = vlaneseq
          %v1232 = vshrl.u32 %v1231, 7
          %v1233 = vsub.s32 0, %v1232
          %v1234 = vrot.slane %v1230, %v1233
          %v1235 = vlaneseq
          %v1236 = vshrl.u32 %v1235, 7
          %v1237 = vsub.s32 2, %v1236
          %v1238 = vrot.slane %v1230, %v1237
          %v1239 = vlaneseq
          %v1240 = vshrl.u32 %v1239, 7
          %v1241 = vsub.s32 0, %v1240
          %v1242 = vrot.slane %v1234, %v1241
          %v1243 = vlaneseq
          %v1244 = vshrl.u32 %v1243, 7
          %v1245 = vsub.s32 0, %v1244
          %v1246 = vrot.slane %v1238, %v1245
          %vm1247 = vcmp.eq.s32.totalorder %v1242, 1
          %vm1248 = vcmp.eq.s32.totalorder %v1246, 1
          %v1249 = vsel %vm1247, %v1229, 0.0
          %v1250 = vsel %vm1248, %v1228, 0.0
          %v1251 = vstv %s1222
          %v1252 = vmul.f32 %v1251, %v1249
          %v1253 = vmul.f32 %v1251, %v1250
          %v1254 = vadd.f32 %v1219, %v1252
          %v1255 = vadd.f32 %v1220, %v1253
          %s1256 = sld [smem:[#allocation10 + $0x3e]]
          %1257 = vrot.lane.b32.xlu0 %v541, 29
          %v1258 = vpop.permute.xlu0 %1257
          %1259 = vrot.lane.b32.xlu0 %v542, 29
          %v1260 = vpop.permute.xlu0 %1259
          %v1261 = vsel %vm1227, %v1258, %v1260
          %v1262 = vsel %vm1227, %v1260, %v1258
          %v1263 = vsel %vm1247, %v1262, 0.0
          %v1264 = vsel %vm1248, %v1261, 0.0
          %v1265 = vstv %s1256
          %v1266 = vmul.f32 %v1265, %v1263
          %v1267 = vmul.f32 %v1265, %v1264
          %v1268 = vadd.f32 %v1254, %v1266
          %v1269 = vadd.f32 %v1255, %v1267
          %vm1270 = vmand %vm552, %vm565
          %s1271 = sld [smem:[#allocation10 + $0xe]]
          %1272 = vrot.lane.b32.xlu0 %v539, 19
          %v1273 = vpop.permute.xlu0 %1272
          %1274 = vrot.lane.b32.xlu0 %v540, 19
          %v1275 = vpop.permute.xlu0 %1274
          %vm1276 = vcmp.lt.s32.totalorder %v573, 19
          %v1277 = vsel %vm1276, %v1273, %v1275
          %v1278 = vsel %vm1276, %v1275, %v1273
          %v1279 = vsel %vm1270, 1, 0
          %v1280 = vlaneseq
          %v1281 = vshrl.u32 %v1280, 7
          %v1282 = vsub.s32 0, %v1281
          %v1283 = vrot.slane %v1279, %v1282
          %v1284 = vlaneseq
          %v1285 = vshrl.u32 %v1284, 7
          %v1286 = vsub.s32 2, %v1285
          %v1287 = vrot.slane %v1279, %v1286
          %v1288 = vlaneseq
          %v1289 = vshrl.u32 %v1288, 7
          %v1290 = vsub.s32 0, %v1289
          %v1291 = vrot.slane %v1283, %v1290
          %v1292 = vlaneseq
          %v1293 = vshrl.u32 %v1292, 7
          %v1294 = vsub.s32 0, %v1293
          %v1295 = vrot.slane %v1287, %v1294
          %vm1296 = vcmp.eq.s32.totalorder %v1291, 1
          %vm1297 = vcmp.eq.s32.totalorder %v1295, 1
          %v1298 = vsel %vm1296, %v1278, 0.0
          %v1299 = vsel %vm1297, %v1277, 0.0
          %v1300 = vstv %s1271
          %v1301 = vmul.f32 %v1300, %v1298
          %v1302 = vmul.f32 %v1300, %v1299
          %v1303 = vadd.f32 %v1268, %v1301
          %v1304 = vadd.f32 %v1269, %v1302
          %s1305 = sld [smem:[#allocation10 + $0x3f]]
          %1306 = vrot.lane.b32.xlu0 %v541, 19
          %v1307 = vpop.permute.xlu0 %1306
          %1308 = vrot.lane.b32.xlu0 %v542, 19
          %v1309 = vpop.permute.xlu0 %1308
          %v1310 = vsel %vm1276, %v1307, %v1309
          %v1311 = vsel %vm1276, %v1309, %v1307
          %v1312 = vsel %vm1296, %v1311, 0.0
          %v1313 = vsel %vm1297, %v1310, 0.0
          %v1314 = vstv %s1305
          %v1315 = vmul.f32 %v1314, %v1312
          %v1316 = vmul.f32 %v1314, %v1313
          %v1317 = vadd.f32 %v1303, %v1315
          %v1318 = vadd.f32 %v1304, %v1316
          %vm1319 = vmand %vm552, %vm620
          %s1320 = sld [smem:[#allocation10 + $0xf]]
          %1321 = vrot.lane.b32.xlu0 %v539, 18
          %v1322 = vpop.permute.xlu0 %1321
          %1323 = vrot.lane.b32.xlu0 %v540, 18
          %v1324 = vpop.permute.xlu0 %1323
          %vm1325 = vcmp.lt.s32.totalorder %v573, 18
          %v1326 = vsel %vm1325, %v1322, %v1324
          %v1327 = vsel %vm1325, %v1324, %v1322
          %v1328 = vsel %vm1319, 1, 0
          %v1329 = vlaneseq
          %v1330 = vshrl.u32 %v1329, 7
          %v1331 = vsub.s32 0, %v1330
          %v1332 = vrot.slane %v1328, %v1331
          %v1333 = vlaneseq
          %v1334 = vshrl.u32 %v1333, 7
          %v1335 = vsub.s32 2, %v1334
          %v1336 = vrot.slane %v1328, %v1335
          %v1337 = vlaneseq
          %v1338 = vshrl.u32 %v1337, 7
          %v1339 = vsub.s32 0, %v1338
          %v1340 = vrot.slane %v1332, %v1339
          %v1341 = vlaneseq
          %v1342 = vshrl.u32 %v1341, 7
          %v1343 = vsub.s32 0, %v1342
          %v1344 = vrot.slane %v1336, %v1343
          %vm1345 = vcmp.eq.s32.totalorder %v1340, 1
          %vm1346 = vcmp.eq.s32.totalorder %v1344, 1
          %v1347 = vsel %vm1345, %v1327, 0.0
          %v1348 = vsel %vm1346, %v1326, 0.0
          %v1349 = vstv %s1320
          %v1350 = vmul.f32 %v1349, %v1347
          %v1351 = vmul.f32 %v1349, %v1348
          %v1352 = vadd.f32 %v1317, %v1350
          %v1353 = vadd.f32 %v1318, %v1351
          %s1354 = sld [smem:[#allocation10 + $0x40]]
          %1355 = vrot.lane.b32.xlu0 %v541, 18
          %v1356 = vpop.permute.xlu0 %1355
          %1357 = vrot.lane.b32.xlu0 %v542, 18
          %v1358 = vpop.permute.xlu0 %1357
          %v1359 = vsel %vm1325, %v1356, %v1358
          %v1360 = vsel %vm1325, %v1358, %v1356
          %v1361 = vsel %vm1345, %v1360, 0.0
          %v1362 = vsel %vm1346, %v1359, 0.0
          %v1363 = vstv %s1354
          %v1364 = vmul.f32 %v1363, %v1361
          %v1365 = vmul.f32 %v1363, %v1362
          %v1366 = vadd.f32 %v1352, %v1364
          %v1367 = vadd.f32 %v1353, %v1365
          %vm1368 = vmand %vm552, %vm673
          %s1369 = sld [smem:[#allocation10 + $0x10]]
          %1370 = vrot.lane.b32.xlu0 %v539, 17
          %v1371 = vpop.permute.xlu0 %1370
          %1372 = vrot.lane.b32.xlu0 %v540, 17
          %v1373 = vpop.permute.xlu0 %1372
          %vm1374 = vcmp.lt.s32.totalorder %v573, 17
          %v1375 = vsel %vm1374, %v1371, %v1373
          %v1376 = vsel %vm1374, %v1373, %v1371
          %v1377 = vsel %vm1368, 1, 0
          %v1378 = vlaneseq
          %v1379 = vshrl.u32 %v1378, 7
          %v1380 = vsub.s32 0, %v1379
          %v1381 = vrot.slane %v1377, %v1380
          %v1382 = vlaneseq
          %v1383 = vshrl.u32 %v1382, 7
          %v1384 = vsub.s32 2, %v1383
          %v1385 = vrot.slane %v1377, %v1384
          %v1386 = vlaneseq
          %v1387 = vshrl.u32 %v1386, 7
          %v1388 = vsub.s32 0, %v1387
          %v1389 = vrot.slane %v1381, %v1388
          %v1390 = vlaneseq
          %v1391 = vshrl.u32 %v1390, 7
          %v1392 = vsub.s32 0, %v1391
          %v1393 = vrot.slane %v1385, %v1392
          %vm1394 = vcmp.eq.s32.totalorder %v1389, 1
          %vm1395 = vcmp.eq.s32.totalorder %v1393, 1
          %v1396 = vsel %vm1394, %v1376, 0.0
          %v1397 = vsel %vm1395, %v1375, 0.0
          %v1398 = vstv %s1369
          %v1399 = vmul.f32 %v1398, %v1396
          %v1400 = vmul.f32 %v1398, %v1397
          %v1401 = vadd.f32 %v1366, %v1399
          %v1402 = vadd.f32 %v1367, %v1400
          %s1403 = sld [smem:[#allocation10 + $0x41]]
          %1404 = vrot.lane.b32.xlu0 %v541, 17
          %v1405 = vpop.permute.xlu0 %1404
          %1406 = vrot.lane.b32.xlu0 %v542, 17
          %v1407 = vpop.permute.xlu0 %1406
          %v1408 = vsel %vm1374, %v1405, %v1407
          %v1409 = vsel %vm1374, %v1407, %v1405
          %v1410 = vsel %vm1394, %v1409, 0.0
          %v1411 = vsel %vm1395, %v1408, 0.0
          %v1412 = vstv %s1403
          %v1413 = vmul.f32 %v1412, %v1410
          %v1414 = vmul.f32 %v1412, %v1411
          %v1415 = vadd.f32 %v1401, %v1413
          %v1416 = vadd.f32 %v1402, %v1414
          %s1417 = sld [smem:[#allocation10 + $0x11]]
          %1418 = vrot.lane.b32.xlu0 %v539, 16
          %v1419 = vpop.permute.xlu0 %1418
          %1420 = vrot.lane.b32.xlu0 %v540, 16
          %v1421 = vpop.permute.xlu0 %1420
          %vm1422 = vcmp.lt.s32.totalorder %v573, 16
          %v1423 = vsel %vm1422, %v1419, %v1421
          %v1424 = vsel %vm1422, %v1421, %v1419
          %v1425 = vlaneseq
          %v1426 = vshrl.u32 %v1425, 7
          %v1427 = vsub.s32 0, %v1426
          %v1428 = vrot.slane %v670, %v1427
          %v1429 = vlaneseq
          %v1430 = vshrl.u32 %v1429, 7
          %v1431 = vsub.s32 2, %v1430
          %v1432 = vrot.slane %v670, %v1431
          %v1433 = vlaneseq
          %v1434 = vshrl.u32 %v1433, 7
          %v1435 = vsub.s32 0, %v1434
          %v1436 = vrot.slane %v1428, %v1435
          %v1437 = vlaneseq
          %v1438 = vshrl.u32 %v1437, 7
          %v1439 = vsub.s32 0, %v1438
          %v1440 = vrot.slane %v1432, %v1439
          %vm1441 = vcmp.eq.s32.totalorder %v1436, 1
          %vm1442 = vcmp.eq.s32.totalorder %v1440, 1
          %v1443 = vsel %vm1441, %v1424, 0.0
          %v1444 = vsel %vm1442, %v1423, 0.0
          %v1445 = vstv %s1417
          %v1446 = vmul.f32 %v1445, %v1443
          %v1447 = vmul.f32 %v1445, %v1444
          %v1448 = vadd.f32 %v1415, %v1446
          %v1449 = vadd.f32 %v1416, %v1447
          %s1450 = sld [smem:[#allocation10 + $0x42]]
          %1451 = vrot.lane.b32.xlu0 %v541, 16
          %v1452 = vpop.permute.xlu0 %1451
          %1453 = vrot.lane.b32.xlu0 %v542, 16
          %v1454 = vpop.permute.xlu0 %1453
          %v1455 = vsel %vm1422, %v1452, %v1454
          %v1456 = vsel %vm1422, %v1454, %v1452
          %v1457 = vsel %vm1441, %v1456, 0.0
          %v1458 = vsel %vm1442, %v1455, 0.0
          %v1459 = vstv %s1450
          %v1460 = vmul.f32 %v1459, %v1457
          %v1461 = vmul.f32 %v1459, %v1458
          %v1462 = vadd.f32 %v1448, %v1460
          %v1463 = vadd.f32 %v1449, %v1461
          %vm1464 = vmand %vm552, %vm773
          %s1465 = sld [smem:[#allocation10 + $0x12]]
          %1466 = vrot.lane.b32.xlu0 %v539, 15
          %v1467 = vpop.permute.xlu0 %1466
          %1468 = vrot.lane.b32.xlu0 %v540, 15
          %v1469 = vpop.permute.xlu0 %1468
          %vm1470 = vcmp.lt.s32.totalorder %v573, 15
          %v1471 = vsel %vm1470, %v1467, %v1469
          %v1472 = vsel %vm1470, %v1469, %v1467
          %v1473 = vsel %vm1464, 1, 0
          %v1474 = vlaneseq
          %v1475 = vshrl.u32 %v1474, 7
          %v1476 = vsub.s32 0, %v1475
          %v1477 = vrot.slane %v1473, %v1476
          %v1478 = vlaneseq
          %v1479 = vshrl.u32 %v1478, 7
          %v1480 = vsub.s32 2, %v1479
          %v1481 = vrot.slane %v1473, %v1480
          %v1482 = vlaneseq
          %v1483 = vshrl.u32 %v1482, 7
          %v1484 = vsub.s32 0, %v1483
          %v1485 = vrot.slane %v1477, %v1484
          %v1486 = vlaneseq
          %v1487 = vshrl.u32 %v1486, 7
          %v1488 = vsub.s32 0, %v1487
          %v1489 = vrot.slane %v1481, %v1488
          %vm1490 = vcmp.eq.s32.totalorder %v1485, 1
          %vm1491 = vcmp.eq.s32.totalorder %v1489, 1
          %v1492 = vsel %vm1490, %v1472, 0.0
          %v1493 = vsel %vm1491, %v1471, 0.0
          %v1494 = vstv %s1465
          %v1495 = vmul.f32 %v1494, %v1492
          %v1496 = vmul.f32 %v1494, %v1493
          %v1497 = vadd.f32 %v1462, %v1495
          %v1498 = vadd.f32 %v1463, %v1496
          %s1499 = sld [smem:[#allocation10 + $0x43]]
          %1500 = vrot.lane.b32.xlu0 %v541, 15
          %v1501 = vpop.permute.xlu0 %1500
          %1502 = vrot.lane.b32.xlu0 %v542, 15
          %v1503 = vpop.permute.xlu0 %1502
          %v1504 = vsel %vm1470, %v1501, %v1503
          %v1505 = vsel %vm1470, %v1503, %v1501
          %v1506 = vsel %vm1490, %v1505, 0.0
          %v1507 = vsel %vm1491, %v1504, 0.0
          %v1508 = vstv %s1499
          %v1509 = vmul.f32 %v1508, %v1506
          %v1510 = vmul.f32 %v1508, %v1507
          %v1511 = vadd.f32 %v1497, %v1509
          %v1512 = vadd.f32 %v1498, %v1510
          %vm1513 = vmand %vm552, %vm826
          %s1514 = sld [smem:[#allocation10 + $0x13]]
          %1515 = vrot.lane.b32.xlu0 %v539, 14
          %v1516 = vpop.permute.xlu0 %1515
          %1517 = vrot.lane.b32.xlu0 %v540, 14
          %v1518 = vpop.permute.xlu0 %1517
          %vm1519 = vcmp.lt.s32.totalorder %v573, 14
          %v1520 = vsel %vm1519, %v1516, %v1518
          %v1521 = vsel %vm1519, %v1518, %v1516
          %v1522 = vsel %vm1513, 1, 0
          %v1523 = vlaneseq
          %v1524 = vshrl.u32 %v1523, 7
          %v1525 = vsub.s32 0, %v1524
          %v1526 = vrot.slane %v1522, %v1525
          %v1527 = vlaneseq
          %v1528 = vshrl.u32 %v1527, 7
          %v1529 = vsub.s32 2, %v1528
          %v1530 = vrot.slane %v1522, %v1529
          %v1531 = vlaneseq
          %v1532 = vshrl.u32 %v1531, 7
          %v1533 = vsub.s32 0, %v1532
          %v1534 = vrot.slane %v1526, %v1533
          %v1535 = vlaneseq
          %v1536 = vshrl.u32 %v1535, 7
          %v1537 = vsub.s32 0, %v1536
          %v1538 = vrot.slane %v1530, %v1537
          %vm1539 = vcmp.eq.s32.totalorder %v1534, 1
          %vm1540 = vcmp.eq.s32.totalorder %v1538, 1
          %v1541 = vsel %vm1539, %v1521, 0.0
          %v1542 = vsel %vm1540, %v1520, 0.0
          %v1543 = vstv %s1514
          %v1544 = vmul.f32 %v1543, %v1541
          %v1545 = vmul.f32 %v1543, %v1542
          %v1546 = vadd.f32 %v1511, %v1544
          %v1547 = vadd.f32 %v1512, %v1545
          %s1548 = sld [smem:[#allocation10 + $0x44]]
          %1549 = vrot.lane.b32.xlu0 %v541, 14
          %v1550 = vpop.permute.xlu0 %1549
          %1551 = vrot.lane.b32.xlu0 %v542, 14
          %v1552 = vpop.permute.xlu0 %1551
          %v1553 = vsel %vm1519, %v1550, %v1552
          %v1554 = vsel %vm1519, %v1552, %v1550
          %v1555 = vsel %vm1539, %v1554, 0.0
          %v1556 = vsel %vm1540, %v1553, 0.0
          %v1557 = vstv %s1548
          %v1558 = vmul.f32 %v1557, %v1555
          %v1559 = vmul.f32 %v1557, %v1556
          %v1560 = vadd.f32 %v1546, %v1558
          %v1561 = vadd.f32 %v1547, %v1559
          %vm1562 = vmand %vm552, %vm879
          %s1563 = sld [smem:[#allocation10 + $0x14]]
          %1564 = vrot.lane.b32.xlu0 %v539, 13
          %v1565 = vpop.permute.xlu0 %1564
          %1566 = vrot.lane.b32.xlu0 %v540, 13
          %v1567 = vpop.permute.xlu0 %1566
          %vm1568 = vcmp.lt.s32.totalorder %v573, 13
          %v1569 = vsel %vm1568, %v1565, %v1567
          %v1570 = vsel %vm1568, %v1567, %v1565
          %v1571 = vsel %vm1562, 1, 0
          %v1572 = vlaneseq
          %v1573 = vshrl.u32 %v1572, 7
          %v1574 = vsub.s32 0, %v1573
          %v1575 = vrot.slane %v1571, %v1574
          %v1576 = vlaneseq
          %v1577 = vshrl.u32 %v1576, 7
          %v1578 = vsub.s32 2, %v1577
          %v1579 = vrot.slane %v1571, %v1578
          %v1580 = vlaneseq
          %v1581 = vshrl.u32 %v1580, 7
          %v1582 = vsub.s32 0, %v1581
          %v1583 = vrot.slane %v1575, %v1582
          %v1584 = vlaneseq
          %v1585 = vshrl.u32 %v1584, 7
          %v1586 = vsub.s32 0, %v1585
          %v1587 = vrot.slane %v1579, %v1586
          %vm1588 = vcmp.eq.s32.totalorder %v1583, 1
          %vm1589 = vcmp.eq.s32.totalorder %v1587, 1
          %v1590 = vsel %vm1588, %v1570, 0.0
          %v1591 = vsel %vm1589, %v1569, 0.0
          %v1592 = vstv %s1563
          %v1593 = vmul.f32 %v1592, %v1590
          %v1594 = vmul.f32 %v1592, %v1591
          %v1595 = vadd.f32 %v1560, %v1593
          %v1596 = vadd.f32 %v1561, %v1594
          %s1597 = sld [smem:[#allocation10 + $0x45]]
          %1598 = vrot.lane.b32.xlu0 %v541, 13
          %v1599 = vpop.permute.xlu0 %1598
          %1600 = vrot.lane.b32.xlu0 %v542, 13
          %v1601 = vpop.permute.xlu0 %1600
          %v1602 = vsel %vm1568, %v1599, %v1601
          %v1603 = vsel %vm1568, %v1601, %v1599
          %v1604 = vsel %vm1588, %v1603, 0.0
          %v1605 = vsel %vm1589, %v1602, 0.0
          %v1606 = vstv %s1597
          %v1607 = vmul.f32 %v1606, %v1604
          %v1608 = vmul.f32 %v1606, %v1605
          %v1609 = vadd.f32 %v1595, %v1607
          %v1610 = vadd.f32 %v1596, %v1608
          %s1611 = sld [smem:[#allocation10 + $0x15]]
          %1612 = vrot.lane.b32.xlu0 %v539, 3
          %v1613 = vpop.permute.xlu0 %1612
          %1614 = vrot.lane.b32.xlu0 %v540, 3
          %v1615 = vpop.permute.xlu0 %1614
          %vm1616 = vcmp.lt.s32.totalorder %v573, 3
          %v1617 = vsel %vm1616, %v1613, %v1615
          %v1618 = vsel %vm1616, %v1615, %v1613
          %v1619 = vlaneseq
          %v1620 = vshrl.u32 %v1619, 7
          %v1621 = vsub.s32 1, %v1620
          %v1622 = vrot.slane %v562, %v1621
          %v1623 = vlaneseq
          %v1624 = vshrl.u32 %v1623, 7
          %v1625 = vsub.s32 3, %v1624
          %v1626 = vrot.slane %v562, %v1625
          %v1627 = vlaneseq
          %v1628 = vshrl.u32 %v1627, 7
          %v1629 = vsub.s32 1, %v1628
          %v1630 = vrot.slane %v1622, %v1629
          %v1631 = vlaneseq
          %v1632 = vshrl.u32 %v1631, 7
          %v1633 = vsub.s32 1, %v1632
          %v1634 = vrot.slane %v1626, %v1633
          %vm1635 = vcmp.eq.s32.totalorder %v1630, 1
          %vm1636 = vcmp.eq.s32.totalorder %v1634, 1
          %v1637 = vsel %vm1635, %v1618, 0.0
          %v1638 = vsel %vm1636, %v1617, 0.0
          %v1639 = vstv %s1611
          %v1640 = vmul.f32 %v1639, %v1637
          %v1641 = vmul.f32 %v1639, %v1638
          %v1642 = vadd.f32 %v1609, %v1640
          %v1643 = vadd.f32 %v1610, %v1641
          %s1644 = sld [smem:[#allocation10 + $0x46]]
          %1645 = vrot.lane.b32.xlu0 %v541, 3
          %v1646 = vpop.permute.xlu0 %1645
          %1647 = vrot.lane.b32.xlu0 %v542, 3
          %v1648 = vpop.permute.xlu0 %1647
          %v1649 = vsel %vm1616, %v1646, %v1648
          %v1650 = vsel %vm1616, %v1648, %v1646
          %v1651 = vsel %vm1635, %v1650, 0.0
          %v1652 = vsel %vm1636, %v1649, 0.0
          %v1653 = vstv %s1644
          %v1654 = vmul.f32 %v1653, %v1651
          %v1655 = vmul.f32 %v1653, %v1652
          %v1656 = vadd.f32 %v1642, %v1654
          %v1657 = vadd.f32 %v1643, %v1655
          %s1658 = sld [smem:[#allocation10 + $0x16]]
          %1659 = vrot.lane.b32.xlu0 %v539, 2
          %v1660 = vpop.permute.xlu0 %1659
          %1661 = vrot.lane.b32.xlu0 %v540, 2
          %v1662 = vpop.permute.xlu0 %1661
          %vm1663 = vcmp.lt.s32.totalorder %v573, 2
          %v1664 = vsel %vm1663, %v1660, %v1662
          %v1665 = vsel %vm1663, %v1662, %v1660
          %v1666 = vlaneseq
          %v1667 = vshrl.u32 %v1666, 7
          %v1668 = vsub.s32 1, %v1667
          %v1669 = vrot.slane %v617, %v1668
          %v1670 = vlaneseq
          %v1671 = vshrl.u32 %v1670, 7
          %v1672 = vsub.s32 3, %v1671
          %v1673 = vrot.slane %v617, %v1672
          %v1674 = vlaneseq
          %v1675 = vshrl.u32 %v1674, 7
          %v1676 = vsub.s32 1, %v1675
          %v1677 = vrot.slane %v1669, %v1676
          %v1678 = vlaneseq
          %v1679 = vshrl.u32 %v1678, 7
          %v1680 = vsub.s32 1, %v1679
          %v1681 = vrot.slane %v1673, %v1680
          %vm1682 = vcmp.eq.s32.totalorder %v1677, 1
          %vm1683 = vcmp.eq.s32.totalorder %v1681, 1
          %v1684 = vsel %vm1682, %v1665, 0.0
          %v1685 = vsel %vm1683, %v1664, 0.0
          %v1686 = vstv %s1658
          %v1687 = vmul.f32 %v1686, %v1684
          %v1688 = vmul.f32 %v1686, %v1685
          %v1689 = vadd.f32 %v1656, %v1687
          %v1690 = vadd.f32 %v1657, %v1688
          %s1691 = sld [smem:[#allocation10 + $0x47]]
          %1692 = vrot.lane.b32.xlu0 %v541, 2
          %v1693 = vpop.permute.xlu0 %1692
          %1694 = vrot.lane.b32.xlu0 %v542, 2
          %v1695 = vpop.permute.xlu0 %1694
          %v1696 = vsel %vm1663, %v1693, %v1695
          %v1697 = vsel %vm1663, %v1695, %v1693
          %v1698 = vsel %vm1682, %v1697, 0.0
          %v1699 = vsel %vm1683, %v1696, 0.0
          %v1700 = vstv %s1691
          %v1701 = vmul.f32 %v1700, %v1698
          %v1702 = vmul.f32 %v1700, %v1699
          %v1703 = vadd.f32 %v1689, %v1701
          %v1704 = vadd.f32 %v1690, %v1702
          %s1705 = sld [smem:[#allocation10 + $0x17]]
          %1706 = vrot.lane.b32.xlu0 %v539, 1
          %v1707 = vpop.permute.xlu0 %1706
          %1708 = vrot.lane.b32.xlu0 %v540, 1
          %v1709 = vpop.permute.xlu0 %1708
          %vm1710 = vcmp.lt.s32.totalorder %v573, 1
          %v1711 = vsel %vm1710, %v1707, %v1709
          %v1712 = vsel %vm1710, %v1709, %v1707
          %v1713 = vlaneseq
          %v1714 = vshrl.u32 %v1713, 7
          %v1715 = vsub.s32 1, %v1714
          %v1716 = vrot.slane %v670, %v1715
          %v1717 = vlaneseq
          %v1718 = vshrl.u32 %v1717, 7
          %v1719 = vsub.s32 3, %v1718
          %v1720 = vrot.slane %v670, %v1719
          %v1721 = vlaneseq
          %v1722 = vshrl.u32 %v1721, 7
          %v1723 = vsub.s32 1, %v1722
          %v1724 = vrot.slane %v1716, %v1723
          %v1725 = vlaneseq
          %v1726 = vshrl.u32 %v1725, 7
          %v1727 = vsub.s32 1, %v1726
          %v1728 = vrot.slane %v1720, %v1727
          %vm1729 = vcmp.eq.s32.totalorder %v1724, 1
          %vm1730 = vcmp.eq.s32.totalorder %v1728, 1
          %v1731 = vsel %vm1729, %v1712, 0.0
          %v1732 = vsel %vm1730, %v1711, 0.0
          %v1733 = vstv %s1705
          %v1734 = vmul.f32 %v1733, %v1731
          %v1735 = vmul.f32 %v1733, %v1732
          %v1736 = vadd.f32 %v1703, %v1734
          %v1737 = vadd.f32 %v1704, %v1735
          %s1738 = sld [smem:[#allocation10 + $0x48]]
          %1739 = vrot.lane.b32.xlu0 %v541, 1
          %v1740 = vpop.permute.xlu0 %1739
          %1741 = vrot.lane.b32.xlu0 %v542, 1
          %v1742 = vpop.permute.xlu0 %1741
          %v1743 = vsel %vm1710, %v1740, %v1742
          %v1744 = vsel %vm1710, %v1742, %v1740
          %v1745 = vsel %vm1729, %v1744, 0.0
          %v1746 = vsel %vm1730, %v1743, 0.0
          %v1747 = vstv %s1738
          %v1748 = vmul.f32 %v1747, %v1745
          %v1749 = vmul.f32 %v1747, %v1746
          %v1750 = vadd.f32 %v1736, %v1748
          %v1751 = vadd.f32 %v1737, %v1749
          %s1752 = sld [smem:[#allocation10 + $0x18]]
          %v1753 = vstv %s1752
          %v1754 = vmul.f32 %v1753, %v539
          %v1755 = vmul.f32 %v1753, %v540
          %v1756 = vadd.f32 %v1750, %v1754
          %v1757 = vadd.f32 %v1751, %v1755
          %s1758 = sld [smem:[#allocation10 + $0x49]]
          %v1759 = vstv %s1758
          %v1760 = vmul.f32 %v1759, %v541
          %v1761 = vmul.f32 %v1759, %v542
          %v1762 = vadd.f32 %v1756, %v1760
          %v1763 = vadd.f32 %v1757, %v1761
          %s1764 = sld [smem:[#allocation10 + $0x19]]
          %1765 = vrot.lane.b32.xlu0 %v539, 127
          %v1766 = vpop.permute.xlu0 %1765
          %1767 = vrot.lane.b32.xlu0 %v540, 127
          %v1768 = vpop.permute.xlu0 %1767
          %vm1769 = vcmp.lt.s32.totalorder %v573, 127
          %v1770 = vsel %vm1769, %v1766, %v1768
          %v1771 = vsel %vm1769, %v1768, %v1766
          %v1772 = vlaneseq
          %v1773 = vshrl.u32 %v1772, 7
          %v1774 = vsub.s32 1, %v1773
          %v1775 = vrot.slane %v770, %v1774
          %v1776 = vlaneseq
          %v1777 = vshrl.u32 %v1776, 7
          %v1778 = vsub.s32 3, %v1777
          %v1779 = vrot.slane %v770, %v1778
          %v1780 = vlaneseq
          %v1781 = vshrl.u32 %v1780, 7
          %v1782 = vsub.s32 1, %v1781
          %v1783 = vrot.slane %v1775, %v1782
          %v1784 = vlaneseq
          %v1785 = vshrl.u32 %v1784, 7
          %v1786 = vsub.s32 1, %v1785
          %v1787 = vrot.slane %v1779, %v1786
          %vm1788 = vcmp.eq.s32.totalorder %v1783, 1
          %vm1789 = vcmp.eq.s32.totalorder %v1787, 1
          %v1790 = vsel %vm1788, %v1770, 0.0
          %v1791 = vsel %vm1789, %v1771, 0.0
          %v1792 = vstv %s1764
          %v1793 = vmul.f32 %v1792, %v1790
          %v1794 = vmul.f32 %v1792, %v1791
          %v1795 = vadd.f32 %v1762, %v1793
          %v1796 = vadd.f32 %v1763, %v1794
          %s1797 = sld [smem:[#allocation10 + $0x4a]]
          %1798 = vrot.lane.b32.xlu0 %v541, 127
          %v1799 = vpop.permute.xlu0 %1798
          %1800 = vrot.lane.b32.xlu0 %v542, 127
          %v1801 = vpop.permute.xlu0 %1800
          %v1802 = vsel %vm1769, %v1799, %v1801
          %v1803 = vsel %vm1769, %v1801, %v1799
          %v1804 = vsel %vm1788, %v1802, 0.0
          %v1805 = vsel %vm1789, %v1803, 0.0
          %v1806 = vstv %s1797
          %v1807 = vmul.f32 %v1806, %v1804
          %v1808 = vmul.f32 %v1806, %v1805
          %v1809 = vadd.f32 %v1795, %v1807
          %v1810 = vadd.f32 %v1796, %v1808
          %s1811 = sld [smem:[#allocation10 + $0x1a]]
          %1812 = vrot.lane.b32.xlu0 %v539, 126
          %v1813 = vpop.permute.xlu0 %1812
          %1814 = vrot.lane.b32.xlu0 %v540, 126
          %v1815 = vpop.permute.xlu0 %1814
          %vm1816 = vcmp.lt.s32.totalorder %v573, 126
          %v1817 = vsel %vm1816, %v1813, %v1815
          %v1818 = vsel %vm1816, %v1815, %v1813
          %v1819 = vlaneseq
          %v1820 = vshrl.u32 %v1819, 7
          %v1821 = vsub.s32 1, %v1820
          %v1822 = vrot.slane %v823, %v1821
          %v1823 = vlaneseq
          %v1824 = vshrl.u32 %v1823, 7
          %v1825 = vsub.s32 3, %v1824
          %v1826 = vrot.slane %v823, %v1825
          %v1827 = vlaneseq
          %v1828 = vshrl.u32 %v1827, 7
          %v1829 = vsub.s32 1, %v1828
          %v1830 = vrot.slane %v1822, %v1829
          %v1831 = vlaneseq
          %v1832 = vshrl.u32 %v1831, 7
          %v1833 = vsub.s32 1, %v1832
          %v1834 = vrot.slane %v1826, %v1833
          %vm1835 = vcmp.eq.s32.totalorder %v1830, 1
          %vm1836 = vcmp.eq.s32.totalorder %v1834, 1
          %v1837 = vsel %vm1835, %v1817, 0.0
          %v1838 = vsel %vm1836, %v1818, 0.0
          %v1839 = vstv %s1811
          %v1840 = vmul.f32 %v1839, %v1837
          %v1841 = vmul.f32 %v1839, %v1838
          %v1842 = vadd.f32 %v1809, %v1840
          %v1843 = vadd.f32 %v1810, %v1841
          %s1844 = sld [smem:[#allocation10 + $0x4b]]
          %1845 = vrot.lane.b32.xlu0 %v541, 126
          %v1846 = vpop.permute.xlu0 %1845
          %1847 = vrot.lane.b32.xlu0 %v542, 126
          %v1848 = vpop.permute.xlu0 %1847
          %v1849 = vsel %vm1816, %v1846, %v1848
          %v1850 = vsel %vm1816, %v1848, %v1846
          %v1851 = vsel %vm1835, %v1849, 0.0
          %v1852 = vsel %vm1836, %v1850, 0.0
          %v1853 = vstv %s1844
          %v1854 = vmul.f32 %v1853, %v1851
          %v1855 = vmul.f32 %v1853, %v1852
          %v1856 = vadd.f32 %v1842, %v1854
          %v1857 = vadd.f32 %v1843, %v1855
          %s1858 = sld [smem:[#allocation10 + $0x1b]]
          %1859 = vrot.lane.b32.xlu0 %v539, 125
          %v1860 = vpop.permute.xlu0 %1859
          %1861 = vrot.lane.b32.xlu0 %v540, 125
          %v1862 = vpop.permute.xlu0 %1861
          %vm1863 = vcmp.lt.s32.totalorder %v573, 125
          %v1864 = vsel %vm1863, %v1860, %v1862
          %v1865 = vsel %vm1863, %v1862, %v1860
          %v1866 = vlaneseq
          %v1867 = vshrl.u32 %v1866, 7
          %v1868 = vsub.s32 1, %v1867
          %v1869 = vrot.slane %v876, %v1868
          %v1870 = vlaneseq
          %v1871 = vshrl.u32 %v1870, 7
          %v1872 = vsub.s32 3, %v1871
          %v1873 = vrot.slane %v876, %v1872
          %v1874 = vlaneseq
          %v1875 = vshrl.u32 %v1874, 7
          %v1876 = vsub.s32 1, %v1875
          %v1877 = vrot.slane %v1869, %v1876
          %v1878 = vlaneseq
          %v1879 = vshrl.u32 %v1878, 7
          %v1880 = vsub.s32 1, %v1879
          %v1881 = vrot.slane %v1873, %v1880
          %vm1882 = vcmp.eq.s32.totalorder %v1877, 1
          %vm1883 = vcmp.eq.s32.totalorder %v1881, 1
          %v1884 = vsel %vm1882, %v1864, 0.0
          %v1885 = vsel %vm1883, %v1865, 0.0
          %v1886 = vstv %s1858
          %v1887 = vmul.f32 %v1886, %v1884
          %v1888 = vmul.f32 %v1886, %v1885
          %v1889 = vadd.f32 %v1856, %v1887
          %v1890 = vadd.f32 %v1857, %v1888
          %s1891 = sld [smem:[#allocation10 + $0x4c]]
          %1892 = vrot.lane.b32.xlu0 %v541, 125
          %v1893 = vpop.permute.xlu0 %1892
          %1894 = vrot.lane.b32.xlu0 %v542, 125
          %v1895 = vpop.permute.xlu0 %1894
          %v1896 = vsel %vm1863, %v1893, %v1895
          %v1897 = vsel %vm1863, %v1895, %v1893
          %v1898 = vsel %vm1882, %v1896, 0.0
          %v1899 = vsel %vm1883, %v1897, 0.0
          %v1900 = vstv %s1891
          %v1901 = vmul.f32 %v1900, %v1898
          %v1902 = vmul.f32 %v1900, %v1899
          %v1903 = vadd.f32 %v1889, %v1901
          %v1904 = vadd.f32 %v1890, %v1902
          %vm1905 = vmand %vm555, %vm565
          %s1906 = sld [smem:[#allocation10 + $0x1c]]
          %1907 = vrot.lane.b32.xlu0 %v539, 115
          %v1908 = vpop.permute.xlu0 %1907
          %1909 = vrot.lane.b32.xlu0 %v540, 115
          %v1910 = vpop.permute.xlu0 %1909
          %vm1911 = vcmp.lt.s32.totalorder %v573, 115
          %v1912 = vsel %vm1911, %v1908, %v1910
          %v1913 = vsel %vm1911, %v1910, %v1908
          %v1914 = vsel %vm1905, 1, 0
          %v1915 = vlaneseq
          %v1916 = vshrl.u32 %v1915, 7
          %v1917 = vsub.s32 0, %v1916
          %v1918 = vrot.slane %v1914, %v1917
          %v1919 = vlaneseq
          %v1920 = vshrl.u32 %v1919, 7
          %v1921 = vsub.s32 2, %v1920
          %v1922 = vrot.slane %v1914, %v1921
          %v1923 = vlaneseq
          %v1924 = vshrl.u32 %v1923, 7
          %v1925 = vsub.s32 0, %v1924
          %v1926 = vrot.slane %v1918, %v1925
          %v1927 = vlaneseq
          %v1928 = vshrl.u32 %v1927, 7
          %v1929 = vsub.s32 0, %v1928
          %v1930 = vrot.slane %v1922, %v1929
          %vm1931 = vcmp.eq.s32.totalorder %v1926, 1
          %vm1932 = vcmp.eq.s32.totalorder %v1930, 1
          %v1933 = vsel %vm1931, %v1912, 0.0
          %v1934 = vsel %vm1932, %v1913, 0.0
          %v1935 = vstv %s1906
          %v1936 = vmul.f32 %v1935, %v1933
          %v1937 = vmul.f32 %v1935, %v1934
          %v1938 = vadd.f32 %v1903, %v1936
          %v1939 = vadd.f32 %v1904, %v1937
          %s1940 = sld [smem:[#allocation10 + $0x4d]]
          %1941 = vrot.lane.b32.xlu0 %v541, 115
          %v1942 = vpop.permute.xlu0 %1941
          %1943 = vrot.lane.b32.xlu0 %v542, 115
          %v1944 = vpop.permute.xlu0 %1943
          %v1945 = vsel %vm1911, %v1942, %v1944
          %v1946 = vsel %vm1911, %v1944, %v1942
          %v1947 = vsel %vm1931, %v1945, 0.0
          %v1948 = vsel %vm1932, %v1946, 0.0
          %v1949 = vstv %s1940
          %v1950 = vmul.f32 %v1949, %v1947
          %v1951 = vmul.f32 %v1949, %v1948
          %v1952 = vadd.f32 %v1938, %v1950
          %v1953 = vadd.f32 %v1939, %v1951
          %vm1954 = vmand %vm555, %vm620
          %s1955 = sld [smem:[#allocation10 + $0x1d]]
          %1956 = vrot.lane.b32.xlu0 %v539, 114
          %v1957 = vpop.permute.xlu0 %1956
          %1958 = vrot.lane.b32.xlu0 %v540, 114
          %v1959 = vpop.permute.xlu0 %1958
          %vm1960 = vcmp.lt.s32.totalorder %v573, 114
          %v1961 = vsel %vm1960, %v1957, %v1959
          %v1962 = vsel %vm1960, %v1959, %v1957
          %v1963 = vsel %vm1954, 1, 0
          %v1964 = vlaneseq
          %v1965 = vshrl.u32 %v1964, 7
          %v1966 = vsub.s32 0, %v1965
          %v1967 = vrot.slane %v1963, %v1966
          %v1968 = vlaneseq
          %v1969 = vshrl.u32 %v1968, 7
          %v1970 = vsub.s32 2, %v1969
          %v1971 = vrot.slane %v1963, %v1970
          %v1972 = vlaneseq
          %v1973 = vshrl.u32 %v1972, 7
          %v1974 = vsub.s32 0, %v1973
          %v1975 = vrot.slane %v1967, %v1974
          %v1976 = vlaneseq
          %v1977 = vshrl.u32 %v1976, 7
          %v1978 = vsub.s32 0, %v1977
          %v1979 = vrot.slane %v1971, %v1978
          %vm1980 = vcmp.eq.s32.totalorder %v1975, 1
          %vm1981 = vcmp.eq.s32.totalorder %v1979, 1
          %v1982 = vsel %vm1980, %v1961, 0.0
          %v1983 = vsel %vm1981, %v1962, 0.0
          %v1984 = vstv %s1955
          %v1985 = vmul.f32 %v1984, %v1982
          %v1986 = vmul.f32 %v1984, %v1983
          %v1987 = vadd.f32 %v1952, %v1985
          %v1988 = vadd.f32 %v1953, %v1986
          %s1989 = sld [smem:[#allocation10 + $0x4e]]
          %1990 = vrot.lane.b32.xlu0 %v541, 114
          %v1991 = vpop.permute.xlu0 %1990
          %1992 = vrot.lane.b32.xlu0 %v542, 114
          %v1993 = vpop.permute.xlu0 %1992
          %v1994 = vsel %vm1960, %v1991, %v1993
          %v1995 = vsel %vm1960, %v1993, %v1991
          %v1996 = vsel %vm1980, %v1994, 0.0
          %v1997 = vsel %vm1981, %v1995, 0.0
          %v1998 = vstv %s1989
          %v1999 = vmul.f32 %v1998, %v1996
          %v2000 = vmul.f32 %v1998, %v1997
          %v2001 = vadd.f32 %v1987, %v1999
          %v2002 = vadd.f32 %v1988, %v2000
          %vm2003 = vmand %vm555, %vm673
          %s2004 = sld [smem:[#allocation10 + $0x1e]]
          %2005 = vrot.lane.b32.xlu0 %v539, 113
          %v2006 = vpop.permute.xlu0 %2005
          %2007 = vrot.lane.b32.xlu0 %v540, 113
          %v2008 = vpop.permute.xlu0 %2007
          %vm2009 = vcmp.lt.s32.totalorder %v573, 113
          %v2010 = vsel %vm2009, %v2006, %v2008
          %v2011 = vsel %vm2009, %v2008, %v2006
          %v2012 = vsel %vm2003, 1, 0
          %v2013 = vlaneseq
          %v2014 = vshrl.u32 %v2013, 7
          %v2015 = vsub.s32 0, %v2014
          %v2016 = vrot.slane %v2012, %v2015
          %v2017 = vlaneseq
          %v2018 = vshrl.u32 %v2017, 7
          %v2019 = vsub.s32 2, %v2018
          %v2020 = vrot.slane %v2012, %v2019
          %v2021 = vlaneseq
          %v2022 = vshrl.u32 %v2021, 7
          %v2023 = vsub.s32 0, %v2022
          %v2024 = vrot.slane %v2016, %v2023
          %v2025 = vlaneseq
          %v2026 = vshrl.u32 %v2025, 7
          %v2027 = vsub.s32 0, %v2026
          %v2028 = vrot.slane %v2020, %v2027
          %vm2029 = vcmp.eq.s32.totalorder %v2024, 1
          %vm2030 = vcmp.eq.s32.totalorder %v2028, 1
          %v2031 = vsel %vm2029, %v2010, 0.0
          %v2032 = vsel %vm2030, %v2011, 0.0
          %v2033 = vstv %s2004
          %v2034 = vmul.f32 %v2033, %v2031
          %v2035 = vmul.f32 %v2033, %v2032
          %v2036 = vadd.f32 %v2001, %v2034
          %v2037 = vadd.f32 %v2002, %v2035
          %s2038 = sld [smem:[#allocation10 + $0x4f]]
          %2039 = vrot.lane.b32.xlu0 %v541, 113
          %v2040 = vpop.permute.xlu0 %2039
          %2041 = vrot.lane.b32.xlu0 %v542, 113
          %v2042 = vpop.permute.xlu0 %2041
          %v2043 = vsel %vm2009, %v2040, %v2042
          %v2044 = vsel %vm2009, %v2042, %v2040
          %v2045 = vsel %vm2029, %v2043, 0.0
          %v2046 = vsel %vm2030, %v2044, 0.0
          %v2047 = vstv %s2038
          %v2048 = vmul.f32 %v2047, %v2045
          %v2049 = vmul.f32 %v2047, %v2046
          %v2050 = vadd.f32 %v2036, %v2048
          %v2051 = vadd.f32 %v2037, %v2049
          %s2052 = sld [smem:[#allocation10 + $0x1f]]
          %2053 = vrot.lane.b32.xlu0 %v539, 112
          %v2054 = vpop.permute.xlu0 %2053
          %2055 = vrot.lane.b32.xlu0 %v540, 112
          %v2056 = vpop.permute.xlu0 %2055
          %vm2057 = vcmp.lt.s32.totalorder %v573, 112
          %v2058 = vsel %vm2057, %v2054, %v2056
          %v2059 = vsel %vm2057, %v2056, %v2054
          %v2060 = vlaneseq
          %v2061 = vshrl.u32 %v2060, 7
          %v2062 = vsub.s32 0, %v2061
          %v2063 = vrot.slane %v770, %v2062
          %v2064 = vlaneseq
          %v2065 = vshrl.u32 %v2064, 7
          %v2066 = vsub.s32 2, %v2065
          %v2067 = vrot.slane %v770, %v2066
          %v2068 = vlaneseq
          %v2069 = vshrl.u32 %v2068, 7
          %v2070 = vsub.s32 0, %v2069
          %v2071 = vrot.slane %v2063, %v2070
          %v2072 = vlaneseq
          %v2073 = vshrl.u32 %v2072, 7
          %v2074 = vsub.s32 0, %v2073
          %v2075 = vrot.slane %v2067, %v2074
          %vm2076 = vcmp.eq.s32.totalorder %v2071, 1
          %vm2077 = vcmp.eq.s32.totalorder %v2075, 1
          %v2078 = vsel %vm2076, %v2058, 0.0
          %v2079 = vsel %vm2077, %v2059, 0.0
          %v2080 = vstv %s2052
          %v2081 = vmul.f32 %v2080, %v2078
          %v2082 = vmul.f32 %v2080, %v2079
          %v2083 = vadd.f32 %v2050, %v2081
          %v2084 = vadd.f32 %v2051, %v2082
          %s2085 = sld [smem:[#allocation10 + $0x50]]
          %2086 = vrot.lane.b32.xlu0 %v541, 112
          %v2087 = vpop.permute.xlu0 %2086
          %2088 = vrot.lane.b32.xlu0 %v542, 112
          %v2089 = vpop.permute.xlu0 %2088
          %v2090 = vsel %vm2057, %v2087, %v2089
          %v2091 = vsel %vm2057, %v2089, %v2087
          %v2092 = vsel %vm2076, %v2090, 0.0
          %v2093 = vsel %vm2077, %v2091, 0.0
          %v2094 = vstv %s2085
          %v2095 = vmul.f32 %v2094, %v2092
          %v2096 = vmul.f32 %v2094, %v2093
          %v2097 = vadd.f32 %v2083, %v2095
          %v2098 = vadd.f32 %v2084, %v2096
          %vm2099 = vmand %vm555, %vm773
          %s2100 = sld [smem:[#allocation10 + $0x20]]
          %2101 = vrot.lane.b32.xlu0 %v539, 111
          %v2102 = vpop.permute.xlu0 %2101
          %2103 = vrot.lane.b32.xlu0 %v540, 111
          %v2104 = vpop.permute.xlu0 %2103
          %vm2105 = vcmp.lt.s32.totalorder %v573, 111
          %v2106 = vsel %vm2105, %v2102, %v2104
          %v2107 = vsel %vm2105, %v2104, %v2102
          %v2108 = vsel %vm2099, 1, 0
          %v2109 = vlaneseq
          %v2110 = vshrl.u32 %v2109, 7
          %v2111 = vsub.s32 0, %v2110
          %v2112 = vrot.slane %v2108, %v2111
          %v2113 = vlaneseq
          %v2114 = vshrl.u32 %v2113, 7
          %v2115 = vsub.s32 2, %v2114
          %v2116 = vrot.slane %v2108, %v2115
          %v2117 = vlaneseq
          %v2118 = vshrl.u32 %v2117, 7
          %v2119 = vsub.s32 0, %v2118
          %v2120 = vrot.slane %v2112, %v2119
          %v2121 = vlaneseq
          %v2122 = vshrl.u32 %v2121, 7
          %v2123 = vsub.s32 0, %v2122
          %v2124 = vrot.slane %v2116, %v2123
          %vm2125 = vcmp.eq.s32.totalorder %v2120, 1
          %vm2126 = vcmp.eq.s32.totalorder %v2124, 1
          %v2127 = vsel %vm2125, %v2106, 0.0
          %v2128 = vsel %vm2126, %v2107, 0.0
          %v2129 = vstv %s2100
          %v2130 = vmul.f32 %v2129, %v2127
          %v2131 = vmul.f32 %v2129, %v2128
          %v2132 = vadd.f32 %v2097, %v2130
          %v2133 = vadd.f32 %v2098, %v2131
          %s2134 = sld [smem:[#allocation10 + $0x51]]
          %2135 = vrot.lane.b32.xlu0 %v541, 111
          %v2136 = vpop.permute.xlu0 %2135
          %2137 = vrot.lane.b32.xlu0 %v542, 111
          %v2138 = vpop.permute.xlu0 %2137
          %v2139 = vsel %vm2105, %v2136, %v2138
          %v2140 = vsel %vm2105, %v2138, %v2136
          %v2141 = vsel %vm2125, %v2139, 0.0
          %v2142 = vsel %vm2126, %v2140, 0.0
          %v2143 = vstv %s2134
          %v2144 = vmul.f32 %v2143, %v2141
          %v2145 = vmul.f32 %v2143, %v2142
          %v2146 = vadd.f32 %v2132, %v2144
          %v2147 = vadd.f32 %v2133, %v2145
          %vm2148 = vmand %vm555, %vm826
          %s2149 = sld [smem:[#allocation10 + $0x21]]
          %2150 = vrot.lane.b32.xlu0 %v539, 110
          %v2151 = vpop.permute.xlu0 %2150
          %2152 = vrot.lane.b32.xlu0 %v540, 110
          %v2153 = vpop.permute.xlu0 %2152
          %vm2154 = vcmp.lt.s32.totalorder %v573, 110
          %v2155 = vsel %vm2154, %v2151, %v2153
          %v2156 = vsel %vm2154, %v2153, %v2151
          %v2157 = vsel %vm2148, 1, 0
          %v2158 = vlaneseq
          %v2159 = vshrl.u32 %v2158, 7
          %v2160 = vsub.s32 0, %v2159
          %v2161 = vrot.slane %v2157, %v2160
          %v2162 = vlaneseq
          %v2163 = vshrl.u32 %v2162, 7
          %v2164 = vsub.s32 2, %v2163
          %v2165 = vrot.slane %v2157, %v2164
          %v2166 = vlaneseq
          %v2167 = vshrl.u32 %v2166, 7
          %v2168 = vsub.s32 0, %v2167
          %v2169 = vrot.slane %v2161, %v2168
          %v2170 = vlaneseq
          %v2171 = vshrl.u32 %v2170, 7
          %v2172 = vsub.s32 0, %v2171
          %v2173 = vrot.slane %v2165, %v2172
          %vm2174 = vcmp.eq.s32.totalorder %v2169, 1
          %vm2175 = vcmp.eq.s32.totalorder %v2173, 1
          %v2176 = vsel %vm2174, %v2155, 0.0
          %v2177 = vsel %vm2175, %v2156, 0.0
          %v2178 = vstv %s2149
          %v2179 = vmul.f32 %v2178, %v2176
          %v2180 = vmul.f32 %v2178, %v2177
          %v2181 = vadd.f32 %v2146, %v2179
          %v2182 = vadd.f32 %v2147, %v2180
          %s2183 = sld [smem:[#allocation10 + $0x52]]
          %2184 = vrot.lane.b32.xlu0 %v541, 110
          %v2185 = vpop.permute.xlu0 %2184
          %2186 = vrot.lane.b32.xlu0 %v542, 110
          %v2187 = vpop.permute.xlu0 %2186
          %v2188 = vsel %vm2154, %v2185, %v2187
          %v2189 = vsel %vm2154, %v2187, %v2185
          %v2190 = vsel %vm2174, %v2188, 0.0
          %v2191 = vsel %vm2175, %v2189, 0.0
          %v2192 = vstv %s2183
          %v2193 = vmul.f32 %v2192, %v2190
          %v2194 = vmul.f32 %v2192, %v2191
          %v2195 = vadd.f32 %v2181, %v2193
          %v2196 = vadd.f32 %v2182, %v2194
          %vm2197 = vmand %vm555, %vm879
          %s2198 = sld [smem:[#allocation10 + $0x22]]
          %2199 = vrot.lane.b32.xlu0 %v539, 109
          %v2200 = vpop.permute.xlu0 %2199
          %2201 = vrot.lane.b32.xlu0 %v540, 109
          %v2202 = vpop.permute.xlu0 %2201
          %vm2203 = vcmp.lt.s32.totalorder %v573, 109
          %v2204 = vsel %vm2203, %v2200, %v2202
          %v2205 = vsel %vm2203, %v2202, %v2200
          %v2206 = vsel %vm2197, 1, 0
          %v2207 = vlaneseq
          %v2208 = vshrl.u32 %v2207, 7
          %v2209 = vsub.s32 0, %v2208
          %v2210 = vrot.slane %v2206, %v2209
          %v2211 = vlaneseq
          %v2212 = vshrl.u32 %v2211, 7
          %v2213 = vsub.s32 2, %v2212
          %v2214 = vrot.slane %v2206, %v2213
          %v2215 = vlaneseq
          %v2216 = vshrl.u32 %v2215, 7
          %v2217 = vsub.s32 0, %v2216
          %v2218 = vrot.slane %v2210, %v2217
          %v2219 = vlaneseq
          %v2220 = vshrl.u32 %v2219, 7
          %v2221 = vsub.s32 0, %v2220
          %v2222 = vrot.slane %v2214, %v2221
          %vm2223 = vcmp.eq.s32.totalorder %v2218, 1
          %vm2224 = vcmp.eq.s32.totalorder %v2222, 1
          %v2225 = vsel %vm2223, %v2204, 0.0
          %v2226 = vsel %vm2224, %v2205, 0.0
          %v2227 = vstv %s2198
          %v2228 = vmul.f32 %v2227, %v2225
          %v2229 = vmul.f32 %v2227, %v2226
          %v2230 = vadd.f32 %v2195, %v2228
          %v2231 = vadd.f32 %v2196, %v2229
          %s2232 = sld [smem:[#allocation10 + $0x53]]
          %2233 = vrot.lane.b32.xlu0 %v541, 109
          %v2234 = vpop.permute.xlu0 %2233
          %2235 = vrot.lane.b32.xlu0 %v542, 109
          %v2236 = vpop.permute.xlu0 %2235
          %v2237 = vsel %vm2203, %v2234, %v2236
          %v2238 = vsel %vm2203, %v2236, %v2234
          %v2239 = vsel %vm2223, %v2237, 0.0
          %v2240 = vsel %vm2224, %v2238, 0.0
          %v2241 = vstv %s2232
          %v2242 = vmul.f32 %v2241, %v2239
          %v2243 = vmul.f32 %v2241, %v2240
          %v2244 = vadd.f32 %v2230, %v2242
          %v2245 = vadd.f32 %v2231, %v2243
          %vm2246 = vmand %vm558, %vm565
          %s2247 = sld [smem:[#allocation10 + $0x23]]
          %2248 = vrot.lane.b32.xlu0 %v539, 99
          %v2249 = vpop.permute.xlu0 %2248
          %2250 = vrot.lane.b32.xlu0 %v540, 99
          %v2251 = vpop.permute.xlu0 %2250
          %vm2252 = vcmp.lt.s32.totalorder %v573, 99
          %v2253 = vsel %vm2252, %v2249, %v2251
          %v2254 = vsel %vm2252, %v2251, %v2249
          %v2255 = vsel %vm2246, 1, 0
          %v2256 = vlaneseq
          %v2257 = vshrl.u32 %v2256, 7
          %v2258 = vsub.s32 0, %v2257
          %v2259 = vrot.slane %v2255, %v2258
          %v2260 = vlaneseq
          %v2261 = vshrl.u32 %v2260, 7
          %v2262 = vsub.s32 2, %v2261
          %v2263 = vrot.slane %v2255, %v2262
          %v2264 = vlaneseq
          %v2265 = vshrl.u32 %v2264, 7
          %v2266 = vsub.s32 0, %v2265
          %v2267 = vrot.slane %v2259, %v2266
          %v2268 = vlaneseq
          %v2269 = vshrl.u32 %v2268, 7
          %v2270 = vsub.s32 0, %v2269
          %v2271 = vrot.slane %v2263, %v2270
          %vm2272 = vcmp.eq.s32.totalorder %v2267, 1
          %vm2273 = vcmp.eq.s32.totalorder %v2271, 1
          %v2274 = vsel %vm2272, %v2253, 0.0
          %v2275 = vsel %vm2273, %v2254, 0.0
          %v2276 = vstv %s2247
          %v2277 = vmul.f32 %v2276, %v2274
          %v2278 = vmul.f32 %v2276, %v2275
          %v2279 = vadd.f32 %v2244, %v2277
          %v2280 = vadd.f32 %v2245, %v2278
          %s2281 = sld [smem:[#allocation10 + $0x54]]
          %2282 = vrot.lane.b32.xlu0 %v541, 99
          %v2283 = vpop.permute.xlu0 %2282
          %2284 = vrot.lane.b32.xlu0 %v542, 99
          %v2285 = vpop.permute.xlu0 %2284
          %v2286 = vsel %vm2252, %v2283, %v2285
          %v2287 = vsel %vm2252, %v2285, %v2283
          %v2288 = vsel %vm2272, %v2286, 0.0
          %v2289 = vsel %vm2273, %v2287, 0.0
          %v2290 = vstv %s2281
          %v2291 = vmul.f32 %v2290, %v2288
          %v2292 = vmul.f32 %v2290, %v2289
          %v2293 = vadd.f32 %v2279, %v2291
          %v2294 = vadd.f32 %v2280, %v2292
          %vm2295 = vmand %vm558, %vm620
          %s2296 = sld [smem:[#allocation10 + $0x24]]
          %2297 = vrot.lane.b32.xlu0 %v539, 98
          %v2298 = vpop.permute.xlu0 %2297
          %2299 = vrot.lane.b32.xlu0 %v540, 98
          %v2300 = vpop.permute.xlu0 %2299
          %vm2301 = vcmp.lt.s32.totalorder %v573, 98
          %v2302 = vsel %vm2301, %v2298, %v2300
          %v2303 = vsel %vm2301, %v2300, %v2298
          %v2304 = vsel %vm2295, 1, 0
          %v2305 = vlaneseq
          %v2306 = vshrl.u32 %v2305, 7
          %v2307 = vsub.s32 0, %v2306
          %v2308 = vrot.slane %v2304, %v2307
          %v2309 = vlaneseq
          %v2310 = vshrl.u32 %v2309, 7
          %v2311 = vsub.s32 2, %v2310
          %v2312 = vrot.slane %v2304, %v2311
          %v2313 = vlaneseq
          %v2314 = vshrl.u32 %v2313, 7
          %v2315 = vsub.s32 0, %v2314
          %v2316 = vrot.slane %v2308, %v2315
          %v2317 = vlaneseq
          %v2318 = vshrl.u32 %v2317, 7
          %v2319 = vsub.s32 0, %v2318
          %v2320 = vrot.slane %v2312, %v2319
          %vm2321 = vcmp.eq.s32.totalorder %v2316, 1
          %vm2322 = vcmp.eq.s32.totalorder %v2320, 1
          %v2323 = vsel %vm2321, %v2302, 0.0
          %v2324 = vsel %vm2322, %v2303, 0.0
          %v2325 = vstv %s2296
          %v2326 = vmul.f32 %v2325, %v2323
          %v2327 = vmul.f32 %v2325, %v2324
          %v2328 = vadd.f32 %v2293, %v2326
          %v2329 = vadd.f32 %v2294, %v2327
          %s2330 = sld [smem:[#allocation10 + $0x55]]
          %2331 = vrot.lane.b32.xlu0 %v541, 98
          %v2332 = vpop.permute.xlu0 %2331
          %2333 = vrot.lane.b32.xlu0 %v542, 98
          %v2334 = vpop.permute.xlu0 %2333
          %v2335 = vsel %vm2301, %v2332, %v2334
          %v2336 = vsel %vm2301, %v2334, %v2332
          %v2337 = vsel %vm2321, %v2335, 0.0
          %v2338 = vsel %vm2322, %v2336, 0.0
          %v2339 = vstv %s2330
          %v2340 = vmul.f32 %v2339, %v2337
          %v2341 = vmul.f32 %v2339, %v2338
          %v2342 = vadd.f32 %v2328, %v2340
          %v2343 = vadd.f32 %v2329, %v2341
          %vm2344 = vmand %vm558, %vm673
          %s2345 = sld [smem:[#allocation10 + $0x25]]
          %2346 = vrot.lane.b32.xlu0 %v539, 97
          %v2347 = vpop.permute.xlu0 %2346
          %2348 = vrot.lane.b32.xlu0 %v540, 97
          %v2349 = vpop.permute.xlu0 %2348
          %vm2350 = vcmp.lt.s32.totalorder %v573, 97
          %v2351 = vsel %vm2350, %v2347, %v2349
          %v2352 = vsel %vm2350, %v2349, %v2347
          %v2353 = vsel %vm2344, 1, 0
          %v2354 = vlaneseq
          %v2355 = vshrl.u32 %v2354, 7
          %v2356 = vsub.s32 0, %v2355
          %v2357 = vrot.slane %v2353, %v2356
          %v2358 = vlaneseq
          %v2359 = vshrl.u32 %v2358, 7
          %v2360 = vsub.s32 2, %v2359
          %v2361 = vrot.slane %v2353, %v2360
          %v2362 = vlaneseq
          %v2363 = vshrl.u32 %v2362, 7
          %v2364 = vsub.s32 0, %v2363
          %v2365 = vrot.slane %v2357, %v2364
          %v2366 = vlaneseq
          %v2367 = vshrl.u32 %v2366, 7
          %v2368 = vsub.s32 0, %v2367
          %v2369 = vrot.slane %v2361, %v2368
          %vm2370 = vcmp.eq.s32.totalorder %v2365, 1
          %vm2371 = vcmp.eq.s32.totalorder %v2369, 1
          %v2372 = vsel %vm2370, %v2351, 0.0
          %v2373 = vsel %vm2371, %v2352, 0.0
          %v2374 = vstv %s2345
          %v2375 = vmul.f32 %v2374, %v2372
          %v2376 = vmul.f32 %v2374, %v2373
          %v2377 = vadd.f32 %v2342, %v2375
          %v2378 = vadd.f32 %v2343, %v2376
          %s2379 = sld [smem:[#allocation10 + $0x56]]
          %2380 = vrot.lane.b32.xlu0 %v541, 97
          %v2381 = vpop.permute.xlu0 %2380
          %2382 = vrot.lane.b32.xlu0 %v542, 97
          %v2383 = vpop.permute.xlu0 %2382
          %v2384 = vsel %vm2350, %v2381, %v2383
          %v2385 = vsel %vm2350, %v2383, %v2381
          %v2386 = vsel %vm2370, %v2384, 0.0
          %v2387 = vsel %vm2371, %v2385, 0.0
          %v2388 = vstv %s2379
          %v2389 = vmul.f32 %v2388, %v2386
          %v2390 = vmul.f32 %v2388, %v2387
          %v2391 = vadd.f32 %v2377, %v2389
          %v2392 = vadd.f32 %v2378, %v2390
          %s2393 = sld [smem:[#allocation10 + $0x26]]
          %2394 = vrot.lane.b32.xlu0 %v539, 96
          %v2395 = vpop.permute.xlu0 %2394
          %2396 = vrot.lane.b32.xlu0 %v540, 96
          %v2397 = vpop.permute.xlu0 %2396
          %vm2398 = vcmp.lt.s32.totalorder %v573, 96
          %v2399 = vsel %vm2398, %v2395, %v2397
          %v2400 = vsel %vm2398, %v2397, %v2395
          %v2401 = vlaneseq
          %v2402 = vshrl.u32 %v2401, 7
          %v2403 = vsub.s32 0, %v2402
          %v2404 = vrot.slane %v823, %v2403
          %v2405 = vlaneseq
          %v2406 = vshrl.u32 %v2405, 7
          %v2407 = vsub.s32 2, %v2406
          %v2408 = vrot.slane %v823, %v2407
          %v2409 = vlaneseq
          %v2410 = vshrl.u32 %v2409, 7
          %v2411 = vsub.s32 0, %v2410
          %v2412 = vrot.slane %v2404, %v2411
          %v2413 = vlaneseq
          %v2414 = vshrl.u32 %v2413, 7
          %v2415 = vsub.s32 0, %v2414
          %v2416 = vrot.slane %v2408, %v2415
          %vm2417 = vcmp.eq.s32.totalorder %v2412, 1
          %vm2418 = vcmp.eq.s32.totalorder %v2416, 1
          %v2419 = vsel %vm2417, %v2399, 0.0
          %v2420 = vsel %vm2418, %v2400, 0.0
          %v2421 = vstv %s2393
          %v2422 = vmul.f32 %v2421, %v2419
          %v2423 = vmul.f32 %v2421, %v2420
          %v2424 = vadd.f32 %v2391, %v2422
          %v2425 = vadd.f32 %v2392, %v2423
          %s2426 = sld [smem:[#allocation10 + $0x57]]
          %2427 = vrot.lane.b32.xlu0 %v541, 96
          %v2428 = vpop.permute.xlu0 %2427
          %2429 = vrot.lane.b32.xlu0 %v542, 96
          %v2430 = vpop.permute.xlu0 %2429
          %v2431 = vsel %vm2398, %v2428, %v2430
          %v2432 = vsel %vm2398, %v2430, %v2428
          %v2433 = vsel %vm2417, %v2431, 0.0
          %v2434 = vsel %vm2418, %v2432, 0.0
          %v2435 = vstv %s2426
          %v2436 = vmul.f32 %v2435, %v2433
          %v2437 = vmul.f32 %v2435, %v2434
          %v2438 = vadd.f32 %v2424, %v2436
          %v2439 = vadd.f32 %v2425, %v2437
          %vm2440 = vmand %vm558, %vm773
          %s2441 = sld [smem:[#allocation10 + $0x27]]
          %2442 = vrot.lane.b32.xlu0 %v539, 95
          %v2443 = vpop.permute.xlu0 %2442
          %2444 = vrot.lane.b32.xlu0 %v540, 95
          %v2445 = vpop.permute.xlu0 %2444
          %vm2446 = vcmp.lt.s32.totalorder %v573, 95
          %v2447 = vsel %vm2446, %v2443, %v2445
          %v2448 = vsel %vm2446, %v2445, %v2443
          %v2449 = vsel %vm2440, 1, 0
          %v2450 = vlaneseq
          %v2451 = vshrl.u32 %v2450, 7
          %v2452 = vsub.s32 0, %v2451
          %v2453 = vrot.slane %v2449, %v2452
          %v2454 = vlaneseq
          %v2455 = vshrl.u32 %v2454, 7
          %v2456 = vsub.s32 2, %v2455
          %v2457 = vrot.slane %v2449, %v2456
          %v2458 = vlaneseq
          %v2459 = vshrl.u32 %v2458, 7
          %v2460 = vsub.s32 0, %v2459
          %v2461 = vrot.slane %v2453, %v2460
          %v2462 = vlaneseq
          %v2463 = vshrl.u32 %v2462, 7
          %v2464 = vsub.s32 0, %v2463
          %v2465 = vrot.slane %v2457, %v2464
          %vm2466 = vcmp.eq.s32.totalorder %v2461, 1
          %vm2467 = vcmp.eq.s32.totalorder %v2465, 1
          %v2468 = vsel %vm2466, %v2447, 0.0
          %v2469 = vsel %vm2467, %v2448, 0.0
          %v2470 = vstv %s2441
          %v2471 = vmul.f32 %v2470, %v2468
          %v2472 = vmul.f32 %v2470, %v2469
          %v2473 = vadd.f32 %v2438, %v2471
          %v2474 = vadd.f32 %v2439, %v2472
          %s2475 = sld [smem:[#allocation10 + $0x58]]
          %2476 = vrot.lane.b32.xlu0 %v541, 95
          %v2477 = vpop.permute.xlu0 %2476
          %2478 = vrot.lane.b32.xlu0 %v542, 95
          %v2479 = vpop.permute.xlu0 %2478
          %v2480 = vsel %vm2446, %v2477, %v2479
          %v2481 = vsel %vm2446, %v2479, %v2477
          %v2482 = vsel %vm2466, %v2480, 0.0
          %v2483 = vsel %vm2467, %v2481, 0.0
          %v2484 = vstv %s2475
          %v2485 = vmul.f32 %v2484, %v2482
          %v2486 = vmul.f32 %v2484, %v2483
          %v2487 = vadd.f32 %v2473, %v2485
          %v2488 = vadd.f32 %v2474, %v2486
          %vm2489 = vmand %vm558, %vm826
          %s2490 = sld [smem:[#allocation10 + $0x28]]
          %2491 = vrot.lane.b32.xlu0 %v539, 94
          %v2492 = vpop.permute.xlu0 %2491
          %2493 = vrot.lane.b32.xlu0 %v540, 94
          %v2494 = vpop.permute.xlu0 %2493
          %vm2495 = vcmp.lt.s32.totalorder %v573, 94
          %v2496 = vsel %vm2495, %v2492, %v2494
          %v2497 = vsel %vm2495, %v2494, %v2492
          %v2498 = vsel %vm2489, 1, 0
          %v2499 = vlaneseq
          %v2500 = vshrl.u32 %v2499, 7
          %v2501 = vsub.s32 0, %v2500
          %v2502 = vrot.slane %v2498, %v2501
          %v2503 = vlaneseq
          %v2504 = vshrl.u32 %v2503, 7
          %v2505 = vsub.s32 2, %v2504
          %v2506 = vrot.slane %v2498, %v2505
          %v2507 = vlaneseq
          %v2508 = vshrl.u32 %v2507, 7
          %v2509 = vsub.s32 0, %v2508
          %v2510 = vrot.slane %v2502, %v2509
          %v2511 = vlaneseq
          %v2512 = vshrl.u32 %v2511, 7
          %v2513 = vsub.s32 0, %v2512
          %v2514 = vrot.slane %v2506, %v2513
          %vm2515 = vcmp.eq.s32.totalorder %v2510, 1
          %vm2516 = vcmp.eq.s32.totalorder %v2514, 1
          %v2517 = vsel %vm2515, %v2496, 0.0
          %v2518 = vsel %vm2516, %v2497, 0.0
          %v2519 = vstv %s2490
          %v2520 = vmul.f32 %v2519, %v2517
          %v2521 = vmul.f32 %v2519, %v2518
          %v2522 = vadd.f32 %v2487, %v2520
          %v2523 = vadd.f32 %v2488, %v2521
          %s2524 = sld [smem:[#allocation10 + $0x59]]
          %2525 = vrot.lane.b32.xlu0 %v541, 94
          %v2526 = vpop.permute.xlu0 %2525
          %2527 = vrot.lane.b32.xlu0 %v542, 94
          %v2528 = vpop.permute.xlu0 %2527
          %v2529 = vsel %vm2495, %v2526, %v2528
          %v2530 = vsel %vm2495, %v2528, %v2526
          %v2531 = vsel %vm2515, %v2529, 0.0
          %v2532 = vsel %vm2516, %v2530, 0.0
          %v2533 = vstv %s2524
          %v2534 = vmul.f32 %v2533, %v2531
          %v2535 = vmul.f32 %v2533, %v2532
          %v2536 = vadd.f32 %v2522, %v2534
          %v2537 = vadd.f32 %v2523, %v2535
          %vm2538 = vmand %vm558, %vm879
          %s2539 = sld [smem:[#allocation10 + $0x29]]
          %2540 = vrot.lane.b32.xlu0 %v539, 93
          %v2541 = vpop.permute.xlu0 %2540
          %2542 = vrot.lane.b32.xlu0 %v540, 93
          %v2543 = vpop.permute.xlu0 %2542
          %vm2544 = vcmp.lt.s32.totalorder %v573, 93
          %v2545 = vsel %vm2544, %v2541, %v2543
          %v2546 = vsel %vm2544, %v2543, %v2541
          %v2547 = vsel %vm2538, 1, 0
          %v2548 = vlaneseq
          %v2549 = vshrl.u32 %v2548, 7
          %v2550 = vsub.s32 0, %v2549
          %v2551 = vrot.slane %v2547, %v2550
          %v2552 = vlaneseq
          %v2553 = vshrl.u32 %v2552, 7
          %v2554 = vsub.s32 2, %v2553
          %v2555 = vrot.slane %v2547, %v2554
          %v2556 = vlaneseq
          %v2557 = vshrl.u32 %v2556, 7
          %v2558 = vsub.s32 0, %v2557
          %v2559 = vrot.slane %v2551, %v2558
          %v2560 = vlaneseq
          %v2561 = vshrl.u32 %v2560, 7
          %v2562 = vsub.s32 0, %v2561
          %v2563 = vrot.slane %v2555, %v2562
          %vm2564 = vcmp.eq.s32.totalorder %v2559, 1
          %vm2565 = vcmp.eq.s32.totalorder %v2563, 1
          %v2566 = vsel %vm2564, %v2545, 0.0
          %v2567 = vsel %vm2565, %v2546, 0.0
          %v2568 = vstv %s2539
          %v2569 = vmul.f32 %v2568, %v2566
          %v2570 = vmul.f32 %v2568, %v2567
          %v2571 = vadd.f32 %v2536, %v2569
          %v2572 = vadd.f32 %v2537, %v2570
          %s2573 = sld [smem:[#allocation10 + $0x5a]]
          %2574 = vrot.lane.b32.xlu0 %v541, 93
          %v2575 = vpop.permute.xlu0 %2574
          %2576 = vrot.lane.b32.xlu0 %v542, 93
          %v2577 = vpop.permute.xlu0 %2576
          %v2578 = vsel %vm2544, %v2575, %v2577
          %v2579 = vsel %vm2544, %v2577, %v2575
          %v2580 = vsel %vm2564, %v2578, 0.0
          %v2581 = vsel %vm2565, %v2579, 0.0
          %v2582 = vstv %s2573
          %v2583 = vmul.f32 %v2582, %v2580
          %v2584 = vmul.f32 %v2582, %v2581
          %v2585 = vadd.f32 %v2571, %v2583
          %v2586 = vadd.f32 %v2572, %v2584
          %vm2587 = vmand %vm561, %vm565
          %s2588 = sld [smem:[#allocation10 + $0x2a]]
          %2589 = vrot.lane.b32.xlu0 %v539, 83
          %v2590 = vpop.permute.xlu0 %2589
          %2591 = vrot.lane.b32.xlu0 %v540, 83
          %v2592 = vpop.permute.xlu0 %2591
          %vm2593 = vcmp.lt.s32.totalorder %v573, 83
          %v2594 = vsel %vm2593, %v2590, %v2592
          %v2595 = vsel %vm2593, %v2592, %v2590
          %v2596 = vsel %vm2587, 1, 0
          %v2597 = vlaneseq
          %v2598 = vshrl.u32 %v2597, 7
          %v2599 = vsub.s32 0, %v2598
          %v2600 = vrot.slane %v2596, %v2599
          %v2601 = vlaneseq
          %v2602 = vshrl.u32 %v2601, 7
          %v2603 = vsub.s32 2, %v2602
          %v2604 = vrot.slane %v2596, %v2603
          %v2605 = vlaneseq
          %v2606 = vshrl.u32 %v2605, 7
          %v2607 = vsub.s32 0, %v2606
          %v2608 = vrot.slane %v2600, %v2607
          %v2609 = vlaneseq
          %v2610 = vshrl.u32 %v2609, 7
          %v2611 = vsub.s32 0, %v2610
          %v2612 = vrot.slane %v2604, %v2611
          %vm2613 = vcmp.eq.s32.totalorder %v2608, 1
          %vm2614 = vcmp.eq.s32.totalorder %v2612, 1
          %v2615 = vsel %vm2613, %v2594, 0.0
          %v2616 = vsel %vm2614, %v2595, 0.0
          %v2617 = vstv %s2588
          %v2618 = vmul.f32 %v2617, %v2615
          %v2619 = vmul.f32 %v2617, %v2616
          %v2620 = vadd.f32 %v2585, %v2618
          %v2621 = vadd.f32 %v2586, %v2619
          %s2622 = sld [smem:[#allocation10 + $0x5b]]
          %2623 = vrot.lane.b32.xlu0 %v541, 83
          %v2624 = vpop.permute.xlu0 %2623
          %2625 = vrot.lane.b32.xlu0 %v542, 83
          %v2626 = vpop.permute.xlu0 %2625
          %v2627 = vsel %vm2593, %v2624, %v2626
          %v2628 = vsel %vm2593, %v2626, %v2624
          %v2629 = vsel %vm2613, %v2627, 0.0
          %v2630 = vsel %vm2614, %v2628, 0.0
          %v2631 = vstv %s2622
          %v2632 = vmul.f32 %v2631, %v2629
          %v2633 = vmul.f32 %v2631, %v2630
          %v2634 = vadd.f32 %v2620, %v2632
          %v2635 = vadd.f32 %v2621, %v2633
          %vm2636 = vmand %vm561, %vm620
          %s2637 = sld [smem:[#allocation10 + $0x2b]]
          %2638 = vrot.lane.b32.xlu0 %v539, 82
          %v2639 = vpop.permute.xlu0 %2638
          %2640 = vrot.lane.b32.xlu0 %v540, 82
          %v2641 = vpop.permute.xlu0 %2640
          %vm2642 = vcmp.lt.s32.totalorder %v573, 82
          %v2643 = vsel %vm2642, %v2639, %v2641
          %v2644 = vsel %vm2642, %v2641, %v2639
          %v2645 = vsel %vm2636, 1, 0
          %v2646 = vlaneseq
          %v2647 = vshrl.u32 %v2646, 7
          %v2648 = vsub.s32 0, %v2647
          %v2649 = vrot.slane %v2645, %v2648
          %v2650 = vlaneseq
          %v2651 = vshrl.u32 %v2650, 7
          %v2652 = vsub.s32 2, %v2651
          %v2653 = vrot.slane %v2645, %v2652
          %v2654 = vlaneseq
          %v2655 = vshrl.u32 %v2654, 7
          %v2656 = vsub.s32 0, %v2655
          %v2657 = vrot.slane %v2649, %v2656
          %v2658 = vlaneseq
          %v2659 = vshrl.u32 %v2658, 7
          %v2660 = vsub.s32 0, %v2659
          %v2661 = vrot.slane %v2653, %v2660
          %vm2662 = vcmp.eq.s32.totalorder %v2657, 1
          %vm2663 = vcmp.eq.s32.totalorder %v2661, 1
          %v2664 = vsel %vm2662, %v2643, 0.0
          %v2665 = vsel %vm2663, %v2644, 0.0
          %v2666 = vstv %s2637
          %v2667 = vmul.f32 %v2666, %v2664
          %v2668 = vmul.f32 %v2666, %v2665
          %v2669 = vadd.f32 %v2634, %v2667
          %v2670 = vadd.f32 %v2635, %v2668
          %s2671 = sld [smem:[#allocation10 + $0x5c]]
          %2672 = vrot.lane.b32.xlu0 %v541, 82
          %v2673 = vpop.permute.xlu0 %2672
          %2674 = vrot.lane.b32.xlu0 %v542, 82
          %v2675 = vpop.permute.xlu0 %2674
          %v2676 = vsel %vm2642, %v2673, %v2675
          %v2677 = vsel %vm2642, %v2675, %v2673
          %v2678 = vsel %vm2662, %v2676, 0.0
          %v2679 = vsel %vm2663, %v2677, 0.0
          %v2680 = vstv %s2671
          %v2681 = vmul.f32 %v2680, %v2678
          %v2682 = vmul.f32 %v2680, %v2679
          %v2683 = vadd.f32 %v2669, %v2681
          %v2684 = vadd.f32 %v2670, %v2682
          %vm2685 = vmand %vm561, %vm673
          %s2686 = sld [smem:[#allocation10 + $0x2c]]
          %2687 = vrot.lane.b32.xlu0 %v539, 81
          %v2688 = vpop.permute.xlu0 %2687
          %2689 = vrot.lane.b32.xlu0 %v540, 81
          %v2690 = vpop.permute.xlu0 %2689
          %vm2691 = vcmp.lt.s32.totalorder %v573, 81
          %v2692 = vsel %vm2691, %v2688, %v2690
          %v2693 = vsel %vm2691, %v2690, %v2688
          %v2694 = vsel %vm2685, 1, 0
          %v2695 = vlaneseq
          %v2696 = vshrl.u32 %v2695, 7
          %v2697 = vsub.s32 0, %v2696
          %v2698 = vrot.slane %v2694, %v2697
          %v2699 = vlaneseq
          %v2700 = vshrl.u32 %v2699, 7
          %v2701 = vsub.s32 2, %v2700
          %v2702 = vrot.slane %v2694, %v2701
          %v2703 = vlaneseq
          %v2704 = vshrl.u32 %v2703, 7
          %v2705 = vsub.s32 0, %v2704
          %v2706 = vrot.slane %v2698, %v2705
          %v2707 = vlaneseq
          %v2708 = vshrl.u32 %v2707, 7
          %v2709 = vsub.s32 0, %v2708
          %v2710 = vrot.slane %v2702, %v2709
          %vm2711 = vcmp.eq.s32.totalorder %v2706, 1
          %vm2712 = vcmp.eq.s32.totalorder %v2710, 1
          %v2713 = vsel %vm2711, %v2692, 0.0
          %v2714 = vsel %vm2712, %v2693, 0.0
          %v2715 = vstv %s2686
          %v2716 = vmul.f32 %v2715, %v2713
          %v2717 = vmul.f32 %v2715, %v2714
          %v2718 = vadd.f32 %v2683, %v2716
          %v2719 = vadd.f32 %v2684, %v2717
          %s2720 = sld [smem:[#allocation10 + $0x5d]]
          %2721 = vrot.lane.b32.xlu0 %v541, 81
          %v2722 = vpop.permute.xlu0 %2721
          %2723 = vrot.lane.b32.xlu0 %v542, 81
          %v2724 = vpop.permute.xlu0 %2723
          %v2725 = vsel %vm2691, %v2722, %v2724
          %v2726 = vsel %vm2691, %v2724, %v2722
          %v2727 = vsel %vm2711, %v2725, 0.0
          %v2728 = vsel %vm2712, %v2726, 0.0
          %v2729 = vstv %s2720
          %v2730 = vmul.f32 %v2729, %v2727
          %v2731 = vmul.f32 %v2729, %v2728
          %v2732 = vadd.f32 %v2718, %v2730
          %v2733 = vadd.f32 %v2719, %v2731
          %s2734 = sld [smem:[#allocation10 + $0x2d]]
          %2735 = vrot.lane.b32.xlu0 %v539, 80
          %v2736 = vpop.permute.xlu0 %2735
          %2737 = vrot.lane.b32.xlu0 %v540, 80
          %v2738 = vpop.permute.xlu0 %2737
          %vm2739 = vcmp.lt.s32.totalorder %v573, 80
          %v2740 = vsel %vm2739, %v2736, %v2738
          %v2741 = vsel %vm2739, %v2738, %v2736
          %v2742 = vlaneseq
          %v2743 = vshrl.u32 %v2742, 7
          %v2744 = vsub.s32 0, %v2743
          %v2745 = vrot.slane %v876, %v2744
          %v2746 = vlaneseq
          %v2747 = vshrl.u32 %v2746, 7
          %v2748 = vsub.s32 2, %v2747
          %v2749 = vrot.slane %v876, %v2748
          %v2750 = vlaneseq
          %v2751 = vshrl.u32 %v2750, 7
          %v2752 = vsub.s32 0, %v2751
          %v2753 = vrot.slane %v2745, %v2752
          %v2754 = vlaneseq
          %v2755 = vshrl.u32 %v2754, 7
          %v2756 = vsub.s32 0, %v2755
          %v2757 = vrot.slane %v2749, %v2756
          %vm2758 = vcmp.eq.s32.totalorder %v2753, 1
          %vm2759 = vcmp.eq.s32.totalorder %v2757, 1
          %v2760 = vsel %vm2758, %v2740, 0.0
          %v2761 = vsel %vm2759, %v2741, 0.0
          %v2762 = vstv %s2734
          %v2763 = vmul.f32 %v2762, %v2760
          %v2764 = vmul.f32 %v2762, %v2761
          %v2765 = vadd.f32 %v2732, %v2763
          %v2766 = vadd.f32 %v2733, %v2764
          %s2767 = sld [smem:[#allocation10 + $0x5e]]
          %2768 = vrot.lane.b32.xlu0 %v541, 80
          %v2769 = vpop.permute.xlu0 %2768
          %2770 = vrot.lane.b32.xlu0 %v542, 80
          %v2771 = vpop.permute.xlu0 %2770
          %v2772 = vsel %vm2739, %v2769, %v2771
          %v2773 = vsel %vm2739, %v2771, %v2769
          %v2774 = vsel %vm2758, %v2772, 0.0
          %v2775 = vsel %vm2759, %v2773, 0.0
          %v2776 = vstv %s2767
          %v2777 = vmul.f32 %v2776, %v2774
          %v2778 = vmul.f32 %v2776, %v2775
          %v2779 = vadd.f32 %v2765, %v2777
          %v2780 = vadd.f32 %v2766, %v2778
          %vm2781 = vmand %vm561, %vm773
          %s2782 = sld [smem:[#allocation10 + $0x2e]]
          %2783 = vrot.lane.b32.xlu0 %v539, 79
          %v2784 = vpop.permute.xlu0 %2783
          %2785 = vrot.lane.b32.xlu0 %v540, 79
          %v2786 = vpop.permute.xlu0 %2785
          %vm2787 = vcmp.lt.s32.totalorder %v573, 79
          %v2788 = vsel %vm2787, %v2784, %v2786
          %v2789 = vsel %vm2787, %v2786, %v2784
          %v2790 = vsel %vm2781, 1, 0
          %v2791 = vlaneseq
          %v2792 = vshrl.u32 %v2791, 7
          %v2793 = vsub.s32 0, %v2792
          %v2794 = vrot.slane %v2790, %v2793
          %v2795 = vlaneseq
          %v2796 = vshrl.u32 %v2795, 7
          %v2797 = vsub.s32 2, %v2796
          %v2798 = vrot.slane %v2790, %v2797
          %v2799 = vlaneseq
          %v2800 = vshrl.u32 %v2799, 7
          %v2801 = vsub.s32 0, %v2800
          %v2802 = vrot.slane %v2794, %v2801
          %v2803 = vlaneseq
          %v2804 = vshrl.u32 %v2803, 7
          %v2805 = vsub.s32 0, %v2804
          %v2806 = vrot.slane %v2798, %v2805
          %vm2807 = vcmp.eq.s32.totalorder %v2802, 1
          %vm2808 = vcmp.eq.s32.totalorder %v2806, 1
          %v2809 = vsel %vm2807, %v2788, 0.0
          %v2810 = vsel %vm2808, %v2789, 0.0
          %v2811 = vstv %s2782
          %v2812 = vmul.f32 %v2811, %v2809
          %v2813 = vmul.f32 %v2811, %v2810
          %v2814 = vadd.f32 %v2779, %v2812
          %v2815 = vadd.f32 %v2780, %v2813
          %s2816 = sld [smem:[#allocation10 + $0x5f]]
          %2817 = vrot.lane.b32.xlu0 %v541, 79
          %v2818 = vpop.permute.xlu0 %2817
          %2819 = vrot.lane.b32.xlu0 %v542, 79
          %v2820 = vpop.permute.xlu0 %2819
          %v2821 = vsel %vm2787, %v2818, %v2820
          %v2822 = vsel %vm2787, %v2820, %v2818
          %v2823 = vsel %vm2807, %v2821, 0.0
          %v2824 = vsel %vm2808, %v2822, 0.0
          %v2825 = vstv %s2816
          %v2826 = vmul.f32 %v2825, %v2823
          %v2827 = vmul.f32 %v2825, %v2824
          %v2828 = vadd.f32 %v2814, %v2826
          %v2829 = vadd.f32 %v2815, %v2827
          %vm2830 = vmand %vm561, %vm826
          %s2831 = sld [smem:[#allocation10 + $0x2f]]
          %2832 = vrot.lane.b32.xlu0 %v539, 78
          %v2833 = vpop.permute.xlu0 %2832
          %2834 = vrot.lane.b32.xlu0 %v540, 78
          %v2835 = vpop.permute.xlu0 %2834
          %vm2836 = vcmp.lt.s32.totalorder %v573, 78
          %v2837 = vsel %vm2836, %v2833, %v2835
          %v2838 = vsel %vm2836, %v2835, %v2833
          %v2839 = vsel %vm2830, 1, 0
          %v2840 = vlaneseq
          %v2841 = vshrl.u32 %v2840, 7
          %v2842 = vsub.s32 0, %v2841
          %v2843 = vrot.slane %v2839, %v2842
          %v2844 = vlaneseq
          %v2845 = vshrl.u32 %v2844, 7
          %v2846 = vsub.s32 2, %v2845
          %v2847 = vrot.slane %v2839, %v2846
          %v2848 = vlaneseq
          %v2849 = vshrl.u32 %v2848, 7
          %v2850 = vsub.s32 0, %v2849
          %v2851 = vrot.slane %v2843, %v2850
          %v2852 = vlaneseq
          %v2853 = vshrl.u32 %v2852, 7
          %v2854 = vsub.s32 0, %v2853
          %v2855 = vrot.slane %v2847, %v2854
          %vm2856 = vcmp.eq.s32.totalorder %v2851, 1
          %vm2857 = vcmp.eq.s32.totalorder %v2855, 1
          %v2858 = vsel %vm2856, %v2837, 0.0
          %v2859 = vsel %vm2857, %v2838, 0.0
          %v2860 = vstv %s2831
          %v2861 = vmul.f32 %v2860, %v2858
          %v2862 = vmul.f32 %v2860, %v2859
          %v2863 = vadd.f32 %v2828, %v2861
          %v2864 = vadd.f32 %v2829, %v2862
          %s2865 = sld [smem:[#allocation10 + $0x60]]
          %2866 = vrot.lane.b32.xlu0 %v541, 78
          %v2867 = vpop.permute.xlu0 %2866
          %2868 = vrot.lane.b32.xlu0 %v542, 78
          %v2869 = vpop.permute.xlu0 %2868
          %v2870 = vsel %vm2836, %v2867, %v2869
          %v2871 = vsel %vm2836, %v2869, %v2867
          %v2872 = vsel %vm2856, %v2870, 0.0
          %v2873 = vsel %vm2857, %v2871, 0.0
          %v2874 = vstv %s2865
          %v2875 = vmul.f32 %v2874, %v2872
          %v2876 = vmul.f32 %v2874, %v2873
          %v2877 = vadd.f32 %v2863, %v2875
          %v2878 = vadd.f32 %v2864, %v2876
          %vm2879 = vmand %vm561, %vm879
          %s2880 = sld [smem:[#allocation10 + $0x30]]
          %2881 = vrot.lane.b32.xlu0 %v539, 77
          %v2882 = vpop.permute.xlu0 %2881
          %2883 = vrot.lane.b32.xlu0 %v540, 77
          %v2884 = vpop.permute.xlu0 %2883
          %vm2885 = vcmp.lt.s32.totalorder %v573, 77
          %v2886 = vsel %vm2885, %v2882, %v2884
          %v2887 = vsel %vm2885, %v2884, %v2882
          %v2888 = vsel %vm2879, 1, 0
          %v2889 = vlaneseq
          %v2890 = vshrl.u32 %v2889, 7
          %v2891 = vsub.s32 0, %v2890
          %v2892 = vrot.slane %v2888, %v2891
          %v2893 = vlaneseq
          %v2894 = vshrl.u32 %v2893, 7
          %v2895 = vsub.s32 2, %v2894
          %v2896 = vrot.slane %v2888, %v2895
          %v2897 = vlaneseq
          %v2898 = vshrl.u32 %v2897, 7
          %v2899 = vsub.s32 0, %v2898
          %v2900 = vrot.slane %v2892, %v2899
          %v2901 = vlaneseq
          %v2902 = vshrl.u32 %v2901, 7
          %v2903 = vsub.s32 0, %v2902
          %v2904 = vrot.slane %v2896, %v2903
          %vm2905 = vcmp.eq.s32.totalorder %v2900, 1
          %vm2906 = vcmp.eq.s32.totalorder %v2904, 1
          %v2907 = vsel %vm2905, %v2886, 0.0
          %v2908 = vsel %vm2906, %v2887, 0.0
          %v2909 = vstv %s2880
          %v2910 = vmul.f32 %v2909, %v2907
          %v2911 = vmul.f32 %v2909, %v2908
          %v2912 = vadd.f32 %v2877, %v2910
          %v2913 = vadd.f32 %v2878, %v2911
          %s2914 = sld [smem:[#allocation10 + $0x61]]
          %2915 = vrot.lane.b32.xlu0 %v541, 77
          %v2916 = vpop.permute.xlu0 %2915
          %2917 = vrot.lane.b32.xlu0 %v542, 77
          %v2918 = vpop.permute.xlu0 %2917
          %v2919 = vsel %vm2885, %v2916, %v2918
          %v2920 = vsel %vm2885, %v2918, %v2916
          %v2921 = vsel %vm2905, %v2919, 0.0
          %v2922 = vsel %vm2906, %v2920, 0.0
          %v2923 = vstv %s2914
          %v2924 = vmul.f32 %v2923, %v2921
          %v2925 = vmul.f32 %v2923, %v2922
          %v2926 = vadd.f32 %v2912, %v2924
          %v2927 = vadd.f32 %v2913, %v2925
          %v2928 = vxor.u32 %v2926, 2147483648
          %v2929 = vxor.u32 %v2927, 2147483648
          %v2930 = vmul.f32 %v2928, 1.442695
          %v2931 = vpow.pop %v2930
          %v2932 = vmul.f32 %v2929, 1.442695
          %v2933 = vpow.pop %v2932
          %v2934 = vadd.f32 %v2931, 1.0
          %v2935 = vadd.f32 %v2933, 1.0
          %v2936 = vrcp.pop %v2934
          %v2937 = vmul.f32 1.0, %v2936
          %v2938 = vrcp.pop %v2935
          %v2939 = vmul.f32 1.0, %v2938
          %2940 = vst [vmem:[%s232] sm:$0xff] %v2937
          %2941 = vst [vmem:[%s232 + $0x8] sm:$0xff] %v2939
        $region52: #{tpu_custom_call.1} parent=31 // pred_fallthru
          _
        %s2942 = sand.u32 %s112, 1
        %s2943 = scalar_lea.sflag [#allocation6], %s2942
        %s2944 = sand.u32 %s112, 1
        %s2945 = smul.addr %s2944, 16
        %s2946 = scalar_lea.vmem [#allocation11], %s2945
        // Predicated region
        $region53: #{tpu_custom_call.1} parent=31 // pred_check
          %p2947 = pneg %p122
        $region54: #{tpu_custom_call.1} parent=31 // pred_check_branch
          %2949 = sbr.rel (%p2947) target = $region56
        $region55: #{tpu_custom_call.1} parent=31 // pred_region
          %s2951 = ssub.s32 256, 256
          %2952 = vsyncadd %s2943, %s2951
          %s2953 = smul.addr %s26, 2
          %s2954 = smul.addr %s2953, 128
          %s2955 = scalar_lea.hbm %s3, %s2954
          %s2957 = sshll.u32 %s2946, 4
          %s2958 = int_to_ptr.vmem [resolvable:$true] %s2957
          %2960 = dma.vmem_to_hbm [thread:$0]  %s2958, 256, %s2955, %s2943
        $region56: #{tpu_custom_call.1} parent=31 // pred_fallthru
          _
      $region32: #{tpu_custom_call.1} parent=5 // pred_fallthru
        _
      %p2961 = scmp.le.s32.totalorder 2, %s17
      // Predicated region
      $region57: #{tpu_custom_call.1} parent=5 // pred_check
        %p2962 = pneg %p2961
      $region58: #{tpu_custom_call.1} parent=5 // pred_check_branch
        %2964 = sbr.rel (%p2962) target = $region60
      $region59: #{tpu_custom_call.1} parent=5 // pred_region
        %s2965 = ssub.s32 %s17, 2
        // Predicated region
        $region61: #{tpu_custom_call.1} parent=59 // pred_check
          %p2966 = pneg %p128
        $region62: #{tpu_custom_call.1} parent=59 // pred_check_branch
          %2968 = sbr.rel (%p2966) target = $region64
        $region63: #{tpu_custom_call.1} parent=59 // pred_region
          %s2969 = sand.u32 %s113, 1
          %s2970 = scalar_lea.sflag [#allocation6], %s2969
          %s2971 = sand.u32 %s113, 1
          %s2972 = smul.addr %s2971, 16
          %s2973 = scalar_lea.vmem [#allocation11], %s2972
          %2974 = dma.done %s2970, 256
        $region64: #{tpu_custom_call.1} parent=59 // pred_fallthru
          _
      $region60: #{tpu_custom_call.1} parent=5 // pred_fallthru
        _
    $region6: #{tpu_custom_call.1} parent=1 // loop_footer
      %s21 = sadd.s32 1, %s17
    $region7: #{tpu_custom_call.1} parent=1 // loop_footer_branch
      %16 = sbr.rel target = $region3
    $region8: #{tpu_custom_call.1} parent=1 // loop_exit
      _
    %2975 = vsyncpa [#allocation5], 1
    %s2976 = scalar_lea.sflag [#allocation5], 1
    %2977 = vsyncpa %s2976, 1
    %2978 = vsyncpa [#allocation9], 1
    %2979 = vsyncpa [#allocation6], 1
    %s2980 = scalar_lea.sflag [#allocation6], 1
    %2981 = vsyncpa %s2980, 1
    %2982 = vsyncpa [#allocation7], 1
    %s2983 = scalar_lea.sflag [#allocation7], 1
    %2984 = vsyncpa %s2983, 1

</llo_original>
